<compile_context>
chip_gen: v7x
topology: tpu7x:2x2x1
jax: 0.10.0
libtpu: 0.0.40
codegen_flags: <defaults>
</compile_context>

<pallas_src>
import functools

import jax
import jax.numpy as jnp
import numpy as np
from jax import lax
from jax.experimental import pallas as pl
from jax.experimental.pallas import tpu as pltpu


def _round_up(x, m):
    return (x + m - 1) // m * m


def _pick_tile_cols(S, max_tile_cols):
    """Largest 128-aligned tile <= max_tile_cols that evenly divides S and leaves
    >= 2 tiles (lets ('parallel','parallel') use both v7x TensorCores); falls
    back to the full extent for tiny levels, or max_tile_cols (masked boundary
    tile) for awkward sizes."""
    best = 0
    t = 128
    while t <= max_tile_cols and t * 2 <= S:
        if S % t == 0:
            best = t
        t += 128
    if best:
        return best
    if S <= max_tile_cols:
        return S
    return max_tile_cols


# -----------------------------------------------------------------------------
# Fused kernel: folded 1x1 conv head  +  inference decode.
#   xo_ref : raw head rows, (1, na, T, no), f32      (the module's x output)
#   z_ref  : decoded rows,  (1, na, T, nc+5), f32    (the module's z output)
# -----------------------------------------------------------------------------
def _ibin_fused_kernel(x_ref, w_ref, b_ref, xo_ref, z_ref, *, na, no, L,
                       no_pad, nx, stride, anchors_wh, bin_count, tile_cols,
                       reg_scale=2.0, bin_min=0.0, bin_max=4.0):
    scale = bin_max - bin_min
    step = scale / bin_count
    start = bin_min + (scale / 2.0) / bin_count          # SigmoidBin.bins[0]
    T = tile_cols

    # --- folded 1x1 conv head on the MXU -------------------------------------
    # x block is the native NCHW slab (cin, T).  Transpose once in-kernel (f32,
    # always-supported XLU path; a TN dot_general could remove it), cast to
    # bf16, matmul with the per-anchor 128-padded folded weight, f32 accumulate.
    xt = jnp.transpose(x_ref[0]).astype(jnp.bfloat16)    # (T, cin)
    acc = jnp.dot(xt, w_ref[...], preferred_element_type=jnp.float32)
    acc = acc + b_ref[...]                               # (T, na*no_pad)

    # --- per-row grid-cell coordinates ---------------------------------------
    # spatial index p = tile_start + i ;  gy = p // nx, gx = p % nx.
    # p stays < ny*nx (tiny vs f32 integer range) so the floor division is exact.
    p = (pl.program_id(1) * T
         + lax.broadcasted_iota(jnp.int32, (T, 1), 0)).astype(jnp.float32)
    gy = jnp.floor((p + 0.5) / float(nx))
    gx = p - gy * float(nx)
    grid_xy = jnp.concatenate([gx, gy], axis=-1)         # (T, 2)

    # Lane index & bin masks, shared by all anchors: the bin argmax is done as a
    # masked full-width reduce, so no misaligned lane extraction is required.
    lane = lax.broadcasted_iota(jnp.int32, (T, no_pad), 1)
    wmask = (lane >= 3) & (lane < 3 + bin_count)          # w bin logits
    hmask = (lane >= 3 + L) & (lane < 3 + L + bin_count)  # h bin logits
    neg = jnp.float32(-1e30)

    def bin_center(vals_full, mask, lane_off):
        # argmax over masked lanes on raw logits (monotonic => same index as
        # torch.max over sigmoid outputs); first occurrence on ties.
        v = jnp.where(mask, vals_full, neg)
        m = jnp.max(v, axis=-1, keepdims=True)
        idx = jnp.min(jnp.where(v == m, lane - lane_off, bin_count),
                      axis=-1, keepdims=True)
        return start + idx.astype(jnp.float32) * step

    for a in range(na):                                  # na is small & static
        g0 = a * no_pad
        acc_g = acc[:, g0:g0 + no_pad]                   # lane-aligned group
        aw, ah = anchors_wh[a]

        # Raw head rows (module's returned x list) — lane-aligned store.
        # TODO(synk): could optionally be emitted in bf16 (or skipped) when the
        # raw head is not consumed downstream; kept f32 for faithfulness.
        xo_ref[0, a, :, :] = acc_g[:, :no]

        y = jax.nn.sigmoid(acc_g)                        # one aligned EUP pass

        w_center = bin_center(acc_g, wmask, 3)           # (T, 1)
        h_center = bin_center(acc_g, hmask, 3 + L)       # (T, 1)
        pw = jnp.clip((y[:, 2:3] * reg_scale - reg_scale / 2.0) * step
                      + w_center, bin_min, bin_max) * aw
        ph = jnp.clip((y[:, 2 + L:3 + L] * reg_scale - reg_scale / 2.0) * step
                      + h_center, bin_min, bin_max) * ah
        xy = (y[:, 0:2] * 2.0 - 0.5 + grid_xy) * stride
        rest = y[:, 2 + 2 * L:no]                        # obj + classes
        z_ref[0, a, :, :] = jnp.concatenate([xy, pw, ph, rest], axis=-1)


def _ibin_level(x3, w_pack, b_pack, *, na, no, nc, L, no_pad, nx, stride,
                anchors_wh, bin_count, tile_cols, vmem_limit_bytes):
    bs, cin, S = x3.shape
    cpad = na * no_pad
    nc5 = nc + 5
    n_t = -(-S // tile_cols)

    kernel = functools.partial(
        _ibin_fused_kernel, na=na, no=no, L=L, no_pad=no_pad, nx=nx,
        stride=stride, anchors_wh=anchors_wh, bin_count=bin_count,
        tile_cols=tile_cols)

    return pl.pallas_call(
        kernel,
        out_shape=(jax.ShapeDtypeStruct((bs, na, S, no), jnp.float32),
                   jax.ShapeDtypeStruct((bs, na, S, nc5), jnp.float32)),
        grid_spec=pltpu.PrefetchScalarGridSpec(
            num_scalar_prefetch=0,
            grid=(bs, n_t),
            in_specs=[
                pl.BlockSpec((1, cin, tile_cols), lambda b, t: (b, 0, t)),   # NCHW slab
                pl.BlockSpec((cin, cpad), lambda b, t: (0, 0)),              # folded W
                pl.BlockSpec((1, cpad), lambda b, t: (0, 0)),                # folded b
            ],
            out_specs=[
                pl.BlockSpec((1, na, tile_cols, no), lambda b, t: (b, 0, t, 0)),
                pl.BlockSpec((1, na, tile_cols, nc5), lambda b, t: (b, 0, t, 0)),
            ],
        ),
        compiler_params=pltpu.CompilerParams(
            dimension_semantics=("parallel", "parallel"),
            vmem_limit_bytes=vmem_limit_bytes),
    )(x3, w_pack, b_pack)


# -----------------------------------------------------------------------------
# IBin forward (inference path), glue in plain JAX (free reshapes only).
# -----------------------------------------------------------------------------
def ibin_forward(xs, params, anchors, strides, *, nc, bin_count,
                 max_tile_cols=2048, vmem_limit_bytes=48 * 1024 * 1024):
    nl = len(xs)
    anchors_np = np.asarray(anchors, dtype=np.float32)    # (nl, na, 2) fixed buffers
    na = anchors_np.shape[1]
    L = bin_count + 1
    no = nc + 3 + 2 * L
    no_pad = _round_up(no, 128)
    z, x_out = [], []
    for i in range(nl):
        x = xs[i]
        bs, cin, ny, nx = x.shape
        S = ny * nx
        x3 = x.reshape(bs, cin, S)                        # free reshape, stays NCHW

        # Fold ImplicitA / ImplicitM into the conv; repack output channels into
        # per-anchor 128-lane-aligned groups (pad columns are zero).
        w_t = jnp.transpose(params["w"][i])               # (cin, na*no)
        im = params["im"][i]
        w_fold = (w_t * im[None, :]).reshape(cin, na, no)
        w_pack = jnp.pad(w_fold, ((0, 0), (0, 0), (0, no_pad - no)))
        w_pack = w_pack.reshape(cin, na * no_pad).astype(jnp.bfloat16)
        b_fold = ((params["b"][i]
                   + jnp.dot(params["ia"][i], w_t, precision="highest"))
                  * im).reshape(na, no)
        b_pack = jnp.pad(b_fold, ((0, 0), (0, no_pad - no)))
        b_pack = b_pack.reshape(1, na * no_pad).astype(jnp.float32)

        tile_cols = _pick_tile_cols(S, max_tile_cols)
        xo4, z4 = _ibin_level(
            x3, w_pack, b_pack, na=na, no=no, nc=nc, L=L, no_pad=no_pad, nx=nx,
            stride=float(strides[i]),
            anchors_wh=tuple(map(tuple, anchors_np[i].tolist())),
            bin_count=bin_count, tile_cols=tile_cols,
            vmem_limit_bytes=vmem_limit_bytes)

        # Kernel outputs are already in the module's final memory order; only
        # free (contiguous) reshapes remain — no HBM transpose passes.
        x_out.append(xo4.reshape(bs, na, ny, nx, no))
        z.append(z4.reshape(bs, na * S, nc + 5))
    # TODO(synk): training/export branch just returns x_out (the raw permuted
    # head outputs, produced above); only the inference branch is assembled here.
    return jnp.concatenate(z, axis=1), x_out


# -----------------------------------------------------------------------------
# Pure-JAX references for checking the kernel.
# -----------------------------------------------------------------------------
def ref_conv_outputs(xs, params, *, na, no):
    """PyTorch-faithful f32 head: ((x + ia) @ W^T + b) * im, per level."""
    outs = []
    for i, x in enumerate(xs):
        bs, cin, ny, nx = x.shape
        xf = jnp.transpose(x, (0, 2, 3, 1)).reshape(-1, cin) + params["ia"][i][None, :]
        o = jnp.dot(xf, jnp.transpose(params["w"][i]), precision="highest")
        o = (o + params["b"][i][None, :]) * params["im"][i][None, :]
        outs.append(o.reshape(bs, ny, nx, na, no).transpose(0, 3, 1, 2, 4))
    return outs


def ref_decode(x_perm_list, anchors, strides, *, nc, bin_count):
    """Pure-JAX decode of (bs, na, ny, nx, no) head outputs (IBin eval branch)."""
    L = bin_count + 1
    bmin, bmax, reg_scale = 0.0, 4.0, 2.0
    scale = bmax - bmin
    step = scale / bin_count
    start = bmin + (scale / 2.0) / bin_count
    z = []
    for i, xp in enumerate(x_perm_list):
        bs, na, ny, nx, no = xp.shape
        y = jax.nn.sigmoid(xp)
        yv, xv = jnp.meshgrid(jnp.arange(ny, dtype=jnp.float32),
                              jnp.arange(nx, dtype=jnp.float32), indexing="ij")
        grid = jnp.stack([xv, yv], -1)[None, None]
        xy = (y[..., 0:2] * 2.0 - 0.5 + grid) * strides[i]

        def dec(p_sig, p_raw):
            pr = (p_sig[..., 0] * reg_scale - reg_scale / 2.0) * step
            # argmax(sigmoid(x)) == argmax(x): sigmoid is monotonic.
            bb = start + jnp.argmax(p_raw[..., 1:], axis=-1).astype(jnp.float32) * step
            return jnp.clip(pr + bb, bmin, bmax)

        pw = dec(y[..., 2:2 + L], xp[..., 2:2 + L]) * anchors[i, :, 0][None, :, None, None]
        ph = dec(y[..., 2 + L:2 + 2 * L], xp[..., 2 + L:2 + 2 * L]) * anchors[i, :, 1][None, :, None, None]
        out_y = jnp.concatenate([xy, pw[..., None], ph[..., None], y[..., 2 + 2 * L:]], -1)
        z.append(out_y.reshape(bs, -1, nc + 5))
    return jnp.concatenate(z, axis=1)


if __name__ == "__main__":
    key = jax.random.PRNGKey(0)
    nc, bin_count, na, nl, bs = 8, 21, 3, 2, 2
    L = bin_count + 1
    no = nc + 3 + 2 * L                                   # 55
    ch = (16, 32)
    spatial = ((16, 16), (6, 6))     # level0: 2 spatial tiles of 128; level1: full-extent tile
    strides = (8.0, 16.0)
    anchors = jnp.array([[10., 13., 16., 30., 33., 23.],
                         [30., 61., 62., 45., 59., 119.]],
                        dtype=jnp.float32).reshape(nl, na, 2)

    keys = jax.random.split(key, 4 * nl + nl)
    params = {"w": [], "b": [], "ia": [], "im": []}
    k = 0
    for i in range(nl):
        cout = no * na
        params["w"].append(0.02 * jax.random.normal(keys[k], (cout, ch[i]), jnp.float32)); k += 1
        params["b"].append(0.02 * jax.random.normal(keys[k], (cout,), jnp.float32)); k += 1
        params["ia"].append(0.02 * jax.random.normal(keys[k], (ch[i],), jnp.float32)); k += 1
        params["im"].append(1.0 + 0.02 * jax.random.normal(keys[k], (cout,), jnp.float32)); k += 1

    xs = []
    for i in range(nl):
        ny, nx = spatial[i]
        xs.append(jax.random.normal(keys[k + i], (bs, ch[i], ny, nx), jnp.float32))

    z_cat, x_out = ibin_forward(xs, params, anchors, strides,
                                nc=nc, bin_count=bin_count, max_tile_cols=512)
    z_cat = jax.block_until_ready(z_cat)
    for xo in x_out:
        jax.block_until_ready(xo)

    # Check 1: head conv (+ folded ImplicitA/ImplicitM, bf16 matmul) vs f32 reference.
    x_ref_list = ref_conv_outputs(xs, params, na=na, no=no)
    for i in range(nl):
        np.testing.assert_allclose(np.asarray(x_out[i]), np.asarray(x_ref_list[i]),
                                   rtol=2e-2, atol=2e-2)

    # Check 2: decode math, evaluated on the kernel's own conv outputs so the bin
    # argmax sees bit-identical logits (no false failures from matmul rounding).
    z_ref = ref_decode(x_out, anchors, strides, nc=nc, bin_count=bin_count)
    np.testing.assert_allclose(np.asarray(z_cat), np.asarray(z_ref),
                               rtol=1e-2, atol=1e-2)

    expected_rows = sum(na * h * w for (h, w) in spatial)
    assert z_cat.shape == (bs, expected_rows, nc + 5)
    assert x_out[0].shape == (bs, na, spatial[0][0], spatial[0][1], no)

    print("KERNEL_OK")
</pallas_src>

<mosaic_0001>
module attributes {stable_mosaic.version = 11 : i64} {
  func.func @_ibin_fused_kernel(%arg0: i32, %arg1: i32, %arg2: memref<1x16x128xf32, #tpu.memory_space<vmem>>, %arg3: memref<16x384xbf16, #tpu.memory_space<vmem>>, %arg4: memref<1x384xf32, #tpu.memory_space<vmem>>, %arg5: memref<1x3x128x55xf32, #tpu.memory_space<vmem>>, %arg6: memref<1x3x128x13xf32, #tpu.memory_space<vmem>>) attributes {dimension_semantics = [#tpu.dimension_semantics<parallel>, #tpu.dimension_semantics<parallel>], iteration_bounds = array<i64: 2, 2>, scalar_prefetch = 0 : i64, scratch_operands = 0 : i64, tpu.core_type = #tpu.core_type<tc>, window_params = [{transform_indices = @transform_0, window_bounds = array<i64: 1, 16, 128>}, {pipeline_mode = #tpu.pipeline_mode<synchronous>, transform_indices = @transform_1, window_bounds = array<i64: 16, 384>}, {pipeline_mode = #tpu.pipeline_mode<synchronous>, transform_indices = @transform_2, window_bounds = array<i64: 1, 384>}, {transform_indices = @transform_3, window_bounds = array<i64: 1, 3, 128, 55>}, {transform_indices = @transform_4, window_bounds = array<i64: 1, 3, 128, 13>}]} {
    %c0 = arith.constant 0 : index
    %c0_0 = arith.constant 0 : index
    %c0_1 = arith.constant 0 : index
    %0 = vector.load %arg2[%c0, %c0_0, %c0_1] : memref<1x16x128xf32, #tpu.memory_space<vmem>>, vector<1x16x128xf32>
    %1 = vector.shape_cast %0 : vector<1x16x128xf32> to vector<16x128xf32>
    %2 = tpu.transpose %1, [1, 0] : vector<16x128xf32> -> vector<128x16xf32>
    %3 = arith.truncf %2 : vector<128x16xf32> to vector<128x16xbf16>
    %c0_2 = arith.constant 0 : index
    %c0_3 = arith.constant 0 : index
    %4 = vector.load %arg3[%c0_2, %c0_3] : memref<16x384xbf16, #tpu.memory_space<vmem>>, vector<16x384xbf16>
    %cst = arith.constant dense<0.000000e+00> : vector<128x384xf32>
    %5 = tpu.matmul %3, %4, %cst {dimension_numbers = #tpu.dot_dimension_numbers<[1], [0], [0], [1], [0, 0, 1, 1], [], []>} : vector<128x16xbf16>, vector<16x384xbf16>, vector<128x384xf32> -> vector<128x384xf32>
    %c0_4 = arith.constant 0 : index
    %c0_5 = arith.constant 0 : index
    %6 = vector.load %arg4[%c0_4, %c0_5] : memref<1x384xf32, #tpu.memory_space<vmem>>, vector<1x384xf32>
    %7 = vector.broadcast %6 : vector<1x384xf32> to vector<128x384xf32>
    %8 = arith.addf %5, %7 : vector<128x384xf32>
    %c128_i32 = arith.constant 128 : i32
    %9 = arith.muli %arg1, %c128_i32 : i32
    %10 = tpu.iota {dimensions = array<i32: 0>} : vector<128x1xi32>
    %11 = vector.broadcast %9 : i32 to vector<128x1xi32>
    %12 = arith.addi %11, %10 : vector<128x1xi32>
    %13 = arith.sitofp %12 : vector<128x1xi32> to vector<128x1xf32>
    %cst_6 = arith.constant 5.000000e-01 : f32
    %14 = vector.broadcast %cst_6 : f32 to vector<128x1xf32>
    %15 = arith.addf %13, %14 : vector<128x1xf32>
    %cst_7 = arith.constant 1.600000e+01 : f32
    %16 = vector.broadcast %cst_7 : f32 to vector<128x1xf32>
    %17 = arith.divf %15, %16 : vector<128x1xf32>
    %18 = math.floor %17 : vector<128x1xf32>
    %cst_8 = arith.constant 1.600000e+01 : f32
    %19 = vector.broadcast %cst_8 : f32 to vector<128x1xf32>
    %20 = arith.mulf %18, %19 : vector<128x1xf32>
    %21 = arith.subf %13, %20 : vector<128x1xf32>
    %22 = tpu.concatenate %21, %18 in 1 : vector<128x1xf32>, vector<128x1xf32> -> vector<128x2xf32>
    %23 = tpu.iota {dimensions = array<i32: 1>} : vector<128x128xi32>
    %c3_i32 = arith.constant 3 : i32
    %24 = vector.broadcast %c3_i32 : i32 to vector<128x128xi32>
    %25 = arith.cmpi sge, %23, %24 : vector<128x128xi32>
    %c24_i32 = arith.constant 24 : i32
    %26 = vector.broadcast %c24_i32 : i32 to vector<128x128xi32>
    %27 = arith.cmpi slt, %23, %26 : vector<128x128xi32>
    %28 = arith.andi %25, %27 : vector<128x128xi1>
    %c25_i32 = arith.constant 25 : i32
    %29 = vector.broadcast %c25_i32 : i32 to vector<128x128xi32>
    %30 = arith.cmpi sge, %23, %29 : vector<128x128xi32>
    %c46_i32 = arith.constant 46 : i32
    %31 = vector.broadcast %c46_i32 : i32 to vector<128x128xi32>
    %32 = arith.cmpi slt, %23, %31 : vector<128x128xi32>
    %33 = arith.andi %30, %32 : vector<128x128xi1>
    %34 = vector.extract_strided_slice %8 {offsets = [0, 0], sizes = [128, 128], strides = [1, 1]} : vector<128x384xf32> to vector<128x128xf32>
    %35 = vector.extract_strided_slice %34 {offsets = [0, 0], sizes = [128, 55], strides = [1, 1]} : vector<128x128xf32> to vector<128x55xf32>
    %c0_9 = arith.constant 0 : index
    %c0_10 = arith.constant 0 : index
    %c0_11 = arith.constant 0 : index
    %c0_12 = arith.constant 0 : index
    %36 = vector.load %arg5[%c0_9, %c0_10, %c0_11, %c0_12] : memref<1x3x128x55xf32, #tpu.memory_space<vmem>>, vector<1x1x128x55xf32>
    %37 = vector.shape_cast %36 : vector<1x1x128x55xf32> to vector<128x55xf32>
    %38 = vector.shape_cast %35 : vector<128x55xf32> to vector<1x1x128x55xf32>
    tpu.vector_store %arg5[%c0_9, %c0_10, %c0_11, %c0_12], %38 {strides = array<i32>} : memref<1x3x128x55xf32, #tpu.memory_space<vmem>>, vector<1x1x128x55xf32>,
    %39 = arith.negf %34 : vector<128x128xf32>
    %40 = math.exp %39 : vector<128x128xf32>
    %cst_13 = arith.constant 1.000000e+00 : f32
    %41 = vector.broadcast %cst_13 : f32 to vector<128x128xf32>
    %42 = arith.addf %41, %40 : vector<128x128xf32>
    %43 = arith.divf %41, %42 : vector<128x128xf32>
    %cst_14 = arith.constant -1.000000e+30 : f32
    %44 = vector.broadcast %cst_14 : f32 to vector<128x128xf32>
    %45 = arith.select %28, %34, %44 : vector<128x128xi1>, vector<128x128xf32>
    %cst_15 = arith.constant dense<0xFF800000> : vector<128xf32>
    %46 = vector.multi_reduction <maximumf>, %45, %cst_15 [1] : vector<128x128xf32> to vector<128xf32>
    %47 = vector.shape_cast %46 : vector<128xf32> to vector<128x1xf32>
    %48 = vector.broadcast %47 : vector<128x1xf32> to vector<128x128xf32>
    %49 = arith.cmpf oeq, %45, %48 : vector<128x128xf32>
    %c3_i32_16 = arith.constant 3 : i32
    %50 = vector.broadcast %c3_i32_16 : i32 to vector<128x128xi32>
    %51 = arith.subi %23, %50 : vector<128x128xi32>
    %c21_i32 = arith.constant 21 : i32
    %52 = vector.broadcast %c21_i32 : i32 to vector<128x128xi32>
    %53 = arith.select %49, %51, %52 : vector<128x128xi1>, vector<128x128xi32>
    %cst_17 = arith.constant dense<2147483647> : vector<128xi32>
    %54 = vector.multi_reduction <minsi>, %53, %cst_17 [1] : vector<128x128xi32> to vector<128xi32>
    %55 = vector.shape_cast %54 : vector<128xi32> to vector<128x1xi32>
    %56 = arith.sitofp %55 : vector<128x1xi32> to vector<128x1xf32>
    %cst_18 = arith.constant 0.190476194 : f32
    %57 = vector.broadcast %cst_18 : f32 to vector<128x1xf32>
    %58 = arith.mulf %56, %57 : vector<128x1xf32>
    %cst_19 = arith.constant 0.095238097 : f32
    %59 = vector.broadcast %cst_19 : f32 to vector<128x1xf32>
    %60 = arith.addf %59, %58 : vector<128x1xf32>
    %cst_20 = arith.constant -1.000000e+30 : f32
    %61 = vector.broadcast %cst_20 : f32 to vector<128x128xf32>
    %62 = arith.select %33, %34, %61 : vector<128x128xi1>, vector<128x128xf32>
    %cst_21 = arith.constant dense<0xFF800000> : vector<128xf32>
    %63 = vector.multi_reduction <maximumf>, %62, %cst_21 [1] : vector<128x128xf32> to vector<128xf32>
    %64 = vector.shape_cast %63 : vector<128xf32> to vector<128x1xf32>
    %65 = vector.broadcast %64 : vector<128x1xf32> to vector<128x128xf32>
    %66 = arith.cmpf oeq, %62, %65 : vector<128x128xf32>
    %c25_i32_22 = arith.constant 25 : i32
    %67 = vector.broadcast %c25_i32_22 : i32 to vector<128x128xi32>
    %68 = arith.subi %23, %67 : vector<128x128xi32>
    %c21_i32_23 = arith.constant 21 : i32
    %69 = vector.broadcast %c21_i32_23 : i32 to vector<128x128xi32>
    %70 = arith.select %66, %68, %69 : vector<128x128xi1>, vector<128x128xi32>
    %cst_24 = arith.constant dense<2147483647> : vector<128xi32>
    %71 = vector.multi_reduction <minsi>, %70, %cst_24 [1] : vector<128x128xi32> to vector<128xi32>
    %72 = vector.shape_cast %71 : vector<128xi32> to vector<128x1xi32>
    %73 = arith.sitofp %72 : vector<128x1xi32> to vector<128x1xf32>
    %cst_25 = arith.constant 0.190476194 : f32
    %74 = vector.broadcast %cst_25 : f32 to vector<128x1xf32>
    %75 = arith.mulf %73, %74 : vector<128x1xf32>
    %cst_26 = arith.constant 0.095238097 : f32
    %76 = vector.broadcast %cst_26 : f32 to vector<128x1xf32>
    %77 = arith.addf %76, %75 : vector<128x1xf32>
    %78 = vector.extract_strided_slice %43 {offsets = [0, 2], sizes = [128, 1], strides = [1, 1]} : vector<128x128xf32> to vector<128x1xf32>
    %cst_27 = arith.constant 2.000000e+00 : f32
    %79 = vector.broadcast %cst_27 : f32 to vector<128x1xf32>
    %80 = arith.mulf %78, %79 : vector<128x1xf32>
    %cst_28 = arith.constant 1.000000e+00 : f32
    %81 = vector.broadcast %cst_28 : f32 to vector<128x1xf32>
    %82 = arith.subf %80, %81 : vector<128x1xf32>
    %cst_29 = arith.constant 0.190476194 : f32
    %83 = vector.broadcast %cst_29 : f32 to vector<128x1xf32>
    %84 = arith.mulf %82, %83 : vector<128x1xf32>
    %85 = arith.addf %84, %60 : vector<128x1xf32>
    %cst_30 = arith.constant 0.000000e+00 : f32
    %cst_31 = arith.constant 4.000000e+00 : f32
    %86 = vector.broadcast %cst_30 : f32 to vector<128x1xf32>
    %87 = arith.maximumf %86, %85 : vector<128x1xf32>
    %88 = vector.broadcast %cst_31 : f32 to vector<128x1xf32>
    %89 = arith.minimumf %88, %87 : vector<128x1xf32>
    %cst_32 = arith.constant 1.000000e+01 : f32
    %90 = vector.broadcast %cst_32 : f32 to vector<128x1xf32>
    %91 = arith.mulf %89, %90 : vector<128x1xf32>
    %92 = vector.extract_strided_slice %43 {offsets = [0, 24], sizes = [128, 1], strides = [1, 1]} : vector<128x128xf32> to vector<128x1xf32>
    %cst_33 = arith.constant 2.000000e+00 : f32
    %93 = vector.broadcast %cst_33 : f32 to vector<128x1xf32>
    %94 = arith.mulf %92, %93 : vector<128x1xf32>
    %cst_34 = arith.constant 1.000000e+00 : f32
    %95 = vector.broadcast %cst_34 : f32 to vector<128x1xf32>
    %96 = arith.subf %94, %95 : vector<128x1xf32>
    %cst_35 = arith.constant 0.190476194 : f32
    %97 = vector.broadcast %cst_35 : f32 to vector<128x1xf32>
    %98 = arith.mulf %96, %97 : vector<128x1xf32>
    %99 = arith.addf %98, %77 : vector<128x1xf32>
    %cst_36 = arith.constant 0.000000e+00 : f32
    %cst_37 = arith.constant 4.000000e+00 : f32
    %100 = vector.broadcast %cst_36 : f32 to vector<128x1xf32>
    %101 = arith.maximumf %100, %99 : vector<128x1xf32>
    %102 = vector.broadcast %cst_37 : f32 to vector<128x1xf32>
    %103 = arith.minimumf %102, %101 : vector<128x1xf32>
    %cst_38 = arith.constant 1.300000e+01 : f32
    %104 = vector.broadcast %cst_38 : f32 to vector<128x1xf32>
    %105 = arith.mulf %103, %104 : vector<128x1xf32>
    %106 = vector.extract_strided_slice %43 {offsets = [0, 0], sizes = [128, 2], strides = [1, 1]} : vector<128x128xf32> to vector<128x2xf32>
    %cst_39 = arith.constant 2.000000e+00 : f32
    %107 = vector.broadcast %cst_39 : f32 to vector<128x2xf32>
    %108 = arith.mulf %106, %107 : vector<128x2xf32>
    %cst_40 = arith.constant 5.000000e-01 : f32
    %109 = vector.broadcast %cst_40 : f32 to vector<128x2xf32>
    %110 = arith.subf %108, %109 : vector<128x2xf32>
    %111 = arith.addf %110, %22 : vector<128x2xf32>
    %cst_41 = arith.constant 8.000000e+00 : f32
    %112 = vector.broadcast %cst_41 : f32 to vector<128x2xf32>
    %113 = arith.mulf %111, %112 : vector<128x2xf32>
    %114 = vector.extract_strided_slice %43 {offsets = [0, 46], sizes = [128, 9], strides = [1, 1]} : vector<128x128xf32> to vector<128x9xf32>
    %115 = tpu.concatenate %113, %91, %105, %114 in 1 : vector<128x2xf32>, vector<128x1xf32>, vector<128x1xf32>, vector<128x9xf32> -> vector<128x13xf32>
    %c0_42 = arith.constant 0 : index
    %c0_43 = arith.constant 0 : index
    %c0_44 = arith.constant 0 : index
    %c0_45 = arith.constant 0 : index
    %116 = vector.load %arg6[%c0_42, %c0_43, %c0_44, %c0_45] : memref<1x3x128x13xf32, #tpu.memory_space<vmem>>, vector<1x1x128x13xf32>
    %117 = vector.shape_cast %116 : vector<1x1x128x13xf32> to vector<128x13xf32>
    %118 = vector.shape_cast %115 : vector<128x13xf32> to vector<1x1x128x13xf32>
    tpu.vector_store %arg6[%c0_42, %c0_43, %c0_44, %c0_45], %118 {strides = array<i32>} : memref<1x3x128x13xf32, #tpu.memory_space<vmem>>, vector<1x1x128x13xf32>,
    %119 = vector.extract_strided_slice %8 {offsets = [0, 128], sizes = [128, 128], strides = [1, 1]} : vector<128x384xf32> to vector<128x128xf32>
    %120 = vector.extract_strided_slice %119 {offsets = [0, 0], sizes = [128, 55], strides = [1, 1]} : vector<128x128xf32> to vector<128x55xf32>
    %c0_46 = arith.constant 0 : index
    %c1 = arith.constant 1 : index
    %c0_47 = arith.constant 0 : index
    %c0_48 = arith.constant 0 : index
    %121 = vector.load %arg5[%c0_46, %c1, %c0_47, %c0_48] : memref<1x3x128x55xf32, #tpu.memory_space<vmem>>, vector<1x1x128x55xf32>
    %122 = vector.shape_cast %121 : vector<1x1x128x55xf32> to vector<128x55xf32>
    %123 = vector.shape_cast %120 : vector<128x55xf32> to vector<1x1x128x55xf32>
    tpu.vector_store %arg5[%c0_46, %c1, %c0_47, %c0_48], %123 {strides = array<i32>} : memref<1x3x128x55xf32, #tpu.memory_space<vmem>>, vector<1x1x128x55xf32>,
    %124 = arith.negf %119 : vector<128x128xf32>
    %125 = math.exp %124 : vector<128x128xf32>
    %cst_49 = arith.constant 1.000000e+00 : f32
    %126 = vector.broadcast %cst_49 : f32 to vector<128x128xf32>
    %127 = arith.addf %126, %125 : vector<128x128xf32>
    %128 = arith.divf %126, %127 : vector<128x128xf32>
    %cst_50 = arith.constant -1.000000e+30 : f32
    %129 = vector.broadcast %cst_50 : f32 to vector<128x128xf32>
    %130 = arith.select %28, %119, %129 : vector<128x128xi1>, vector<128x128xf32>
    %cst_51 = arith.constant dense<0xFF800000> : vector<128xf32>
    %131 = vector.multi_reduction <maximumf>, %130, %cst_51 [1] : vector<128x128xf32> to vector<128xf32>
    %132 = vector.shape_cast %131 : vector<128xf32> to vector<128x1xf32>
    %133 = vector.broadcast %132 : vector<128x1xf32> to vector<128x128xf32>
    %134 = arith.cmpf oeq, %130, %133 : vector<128x128xf32>
    %c3_i32_52 = arith.constant 3 : i32
    %135 = vector.broadcast %c3_i32_52 : i32 to vector<128x128xi32>
    %136 = arith.subi %23, %135 : vector<128x128xi32>
    %c21_i32_53 = arith.constant 21 : i32
    %137 = vector.broadcast %c21_i32_53 : i32 to vector<128x128xi32>
    %138 = arith.select %134, %136, %137 : vector<128x128xi1>, vector<128x128xi32>
    %cst_54 = arith.constant dense<2147483647> : vector<128xi32>
    %139 = vector.multi_reduction <minsi>, %138, %cst_54 [1] : vector<128x128xi32> to vector<128xi32>
    %140 = vector.shape_cast %139 : vector<128xi32> to vector<128x1xi32>
    %141 = arith.sitofp %140 : vector<128x1xi32> to vector<128x1xf32>
    %cst_55 = arith.constant 0.190476194 : f32
    %142 = vector.broadcast %cst_55 : f32 to vector<128x1xf32>
    %143 = arith.mulf %141, %142 : vector<128x1xf32>
    %cst_56 = arith.constant 0.095238097 : f32
    %144 = vector.broadcast %cst_56 : f32 to vector<128x1xf32>
    %145 = arith.addf %144, %143 : vector<128x1xf32>
    %cst_57 = arith.constant -1.000000e+30 : f32
    %146 = vector.broadcast %cst_57 : f32 to vector<128x128xf32>
    %147 = arith.select %33, %119, %146 : vector<128x128xi1>, vector<128x128xf32>
    %cst_58 = arith.constant dense<0xFF800000> : vector<128xf32>
    %148 = vector.multi_reduction <maximumf>, %147, %cst_58 [1] : vector<128x128xf32> to vector<128xf32>
    %149 = vector.shape_cast %148 : vector<128xf32> to vector<128x1xf32>
    %150 = vector.broadcast %149 : vector<128x1xf32> to vector<128x128xf32>
    %151 = arith.cmpf oeq, %147, %150 : vector<128x128xf32>
    %c25_i32_59 = arith.constant 25 : i32
    %152 = vector.broadcast %c25_i32_59 : i32 to vector<128x128xi32>
    %153 = arith.subi %23, %152 : vector<128x128xi32>
    %c21_i32_60 = arith.constant 21 : i32
    %154 = vector.broadcast %c21_i32_60 : i32 to vector<128x128xi32>
    %155 = arith.select %151, %153, %154 : vector<128x128xi1>, vector<128x128xi32>
    %cst_61 = arith.constant dense<2147483647> : vector<128xi32>
    %156 = vector.multi_reduction <minsi>, %155, %cst_61 [1] : vector<128x128xi32> to vector<128xi32>
    %157 = vector.shape_cast %156 : vector<128xi32> to vector<128x1xi32>
    %158 = arith.sitofp %157 : vector<128x1xi32> to vector<128x1xf32>
    %cst_62 = arith.constant 0.190476194 : f32
    %159 = vector.broadcast %cst_62 : f32 to vector<128x1xf32>
    %160 = arith.mulf %158, %159 : vector<128x1xf32>
    %cst_63 = arith.constant 0.095238097 : f32
    %161 = vector.broadcast %cst_63 : f32 to vector<128x1xf32>
    %162 = arith.addf %161, %160 : vector<128x1xf32>
    %163 = vector.extract_strided_slice %128 {offsets = [0, 2], sizes = [128, 1], strides = [1, 1]} : vector<128x128xf32> to vector<128x1xf32>
    %cst_64 = arith.constant 2.000000e+00 : f32
    %164 = vector.broadcast %cst_64 : f32 to vector<128x1xf32>
    %165 = arith.mulf %163, %164 : vector<128x1xf32>
    %cst_65 = arith.constant 1.000000e+00 : f32
    %166 = vector.broadcast %cst_65 : f32 to vector<128x1xf32>
    %167 = arith.subf %165, %166 : vector<128x1xf32>
    %cst_66 = arith.constant 0.190476194 : f32
    %168 = vector.broadcast %cst_66 : f32 to vector<128x1xf32>
    %169 = arith.mulf %167, %168 : vector<128x1xf32>
    %170 = arith.addf %169, %145 : vector<128x1xf32>
    %cst_67 = arith.constant 0.000000e+00 : f32
    %cst_68 = arith.constant 4.000000e+00 : f32
    %171 = vector.broadcast %cst_67 : f32 to vector<128x1xf32>
    %172 = arith.maximumf %171, %170 : vector<128x1xf32>
    %173 = vector.broadcast %cst_68 : f32 to vector<128x1xf32>
    %174 = arith.minimumf %173, %172 : vector<128x1xf32>
    %cst_69 = arith.constant 1.600000e+01 : f32
    %175 = vector.broadcast %cst_69 : f32 to vector<128x1xf32>
    %176 = arith.mulf %174, %175 : vector<128x1xf32>
    %177 = vector.extract_strided_slice %128 {offsets = [0, 24], sizes = [128, 1], strides = [1, 1]} : vector<128x128xf32> to vector<128x1xf32>
    %cst_70 = arith.constant 2.000000e+00 : f32
    %178 = vector.broadcast %cst_70 : f32 to vector<128x1xf32>
    %179 = arith.mulf %177, %178 : vector<128x1xf32>
    %cst_71 = arith.constant 1.000000e+00 : f32
    %180 = vector.broadcast %cst_71 : f32 to vector<128x1xf32>
    %181 = arith.subf %179, %180 : vector<128x1xf32>
    %cst_72 = arith.constant 0.190476194 : f32
    %182 = vector.broadcast %cst_72 : f32 to vector<128x1xf32>
    %183 = arith.mulf %181, %182 : vector<128x1xf32>
    %184 = arith.addf %183, %162 : vector<128x1xf32>
    %cst_73 = arith.constant 0.000000e+00 : f32
    %cst_74 = arith.constant 4.000000e+00 : f32
    %185 = vector.broadcast %cst_73 : f32 to vector<128x1xf32>
    %186 = arith.maximumf %185, %184 : vector<128x1xf32>
    %187 = vector.broadcast %cst_74 : f32 to vector<128x1xf32>
    %188 = arith.minimumf %187, %186 : vector<128x1xf32>
    %cst_75 = arith.constant 3.000000e+01 : f32
    %189 = vector.broadcast %cst_75 : f32 to vector<128x1xf32>
    %190 = arith.mulf %188, %189 : vector<128x1xf32>
    %191 = vector.extract_strided_slice %128 {offsets = [0, 0], sizes = [128, 2], strides = [1, 1]} : vector<128x128xf32> to vector<128x2xf32>
    %cst_76 = arith.constant 2.000000e+00 : f32
    %192 = vector.broadcast %cst_76 : f32 to vector<128x2xf32>
    %193 = arith.mulf %191, %192 : vector<128x2xf32>
    %cst_77 = arith.constant 5.000000e-01 : f32
    %194 = vector.broadcast %cst_77 : f32 to vector<128x2xf32>
    %195 = arith.subf %193, %194 : vector<128x2xf32>
    %196 = arith.addf %195, %22 : vector<128x2xf32>
    %cst_78 = arith.constant 8.000000e+00 : f32
    %197 = vector.broadcast %cst_78 : f32 to vector<128x2xf32>
    %198 = arith.mulf %196, %197 : vector<128x2xf32>
    %199 = vector.extract_strided_slice %128 {offsets = [0, 46], sizes = [128, 9], strides = [1, 1]} : vector<128x128xf32> to vector<128x9xf32>
    %200 = tpu.concatenate %198, %176, %190, %199 in 1 : vector<128x2xf32>, vector<128x1xf32>, vector<128x1xf32>, vector<128x9xf32> -> vector<128x13xf32>
    %c0_79 = arith.constant 0 : index
    %c1_80 = arith.constant 1 : index
    %c0_81 = arith.constant 0 : index
    %c0_82 = arith.constant 0 : index
    %201 = vector.load %arg6[%c0_79, %c1_80, %c0_81, %c0_82] : memref<1x3x128x13xf32, #tpu.memory_space<vmem>>, vector<1x1x128x13xf32>
    %202 = vector.shape_cast %201 : vector<1x1x128x13xf32> to vector<128x13xf32>
    %203 = vector.shape_cast %200 : vector<128x13xf32> to vector<1x1x128x13xf32>
    tpu.vector_store %arg6[%c0_79, %c1_80, %c0_81, %c0_82], %203 {strides = array<i32>} : memref<1x3x128x13xf32, #tpu.memory_space<vmem>>, vector<1x1x128x13xf32>,
    %204 = vector.extract_strided_slice %8 {offsets = [0, 256], sizes = [128, 128], strides = [1, 1]} : vector<128x384xf32> to vector<128x128xf32>
    %205 = vector.extract_strided_slice %204 {offsets = [0, 0], sizes = [128, 55], strides = [1, 1]} : vector<128x128xf32> to vector<128x55xf32>
    %c0_83 = arith.constant 0 : index
    %c2 = arith.constant 2 : index
    %c0_84 = arith.constant 0 : index
    %c0_85 = arith.constant 0 : index
    %206 = vector.load %arg5[%c0_83, %c2, %c0_84, %c0_85] : memref<1x3x128x55xf32, #tpu.memory_space<vmem>>, vector<1x1x128x55xf32>
    %207 = vector.shape_cast %206 : vector<1x1x128x55xf32> to vector<128x55xf32>
    %208 = vector.shape_cast %205 : vector<128x55xf32> to vector<1x1x128x55xf32>
    tpu.vector_store %arg5[%c0_83, %c2, %c0_84, %c0_85], %208 {strides = array<i32>} : memref<1x3x128x55xf32, #tpu.memory_space<vmem>>, vector<1x1x128x55xf32>,
    %209 = arith.negf %204 : vector<128x128xf32>
    %210 = math.exp %209 : vector<128x128xf32>
    %cst_86 = arith.constant 1.000000e+00 : f32
    %211 = vector.broadcast %cst_86 : f32 to vector<128x128xf32>
    %212 = arith.addf %211, %210 : vector<128x128xf32>
    %213 = arith.divf %211, %212 : vector<128x128xf32>
    %cst_87 = arith.constant -1.000000e+30 : f32
    %214 = vector.broadcast %cst_87 : f32 to vector<128x128xf32>
    %215 = arith.select %28, %204, %214 : vector<128x128xi1>, vector<128x128xf32>
    %cst_88 = arith.constant dense<0xFF800000> : vector<128xf32>
    %216 = vector.multi_reduction <maximumf>, %215, %cst_88 [1] : vector<128x128xf32> to vector<128xf32>
    %217 = vector.shape_cast %216 : vector<128xf32> to vector<128x1xf32>
    %218 = vector.broadcast %217 : vector<128x1xf32> to vector<128x128xf32>
    %219 = arith.cmpf oeq, %215, %218 : vector<128x128xf32>
    %c3_i32_89 = arith.constant 3 : i32
    %220 = vector.broadcast %c3_i32_89 : i32 to vector<128x128xi32>
    %221 = arith.subi %23, %220 : vector<128x128xi32>
    %c21_i32_90 = arith.constant 21 : i32
    %222 = vector.broadcast %c21_i32_90 : i32 to vector<128x128xi32>
    %223 = arith.select %219, %221, %222 : vector<128x128xi1>, vector<128x128xi32>
    %cst_91 = arith.constant dense<2147483647> : vector<128xi32>
    %224 = vector.multi_reduction <minsi>, %223, %cst_91 [1] : vector<128x128xi32> to vector<128xi32>
    %225 = vector.shape_cast %224 : vector<128xi32> to vector<128x1xi32>
    %226 = arith.sitofp %225 : vector<128x1xi32> to vector<128x1xf32>
    %cst_92 = arith.constant 0.190476194 : f32
    %227 = vector.broadcast %cst_92 : f32 to vector<128x1xf32>
    %228 = arith.mulf %226, %227 : vector<128x1xf32>
    %cst_93 = arith.constant 0.095238097 : f32
    %229 = vector.broadcast %cst_93 : f32 to vector<128x1xf32>
    %230 = arith.addf %229, %228 : vector<128x1xf32>
    %cst_94 = arith.constant -1.000000e+30 : f32
    %231 = vector.broadcast %cst_94 : f32 to vector<128x128xf32>
    %232 = arith.select %33, %204, %231 : vector<128x128xi1>, vector<128x128xf32>
    %cst_95 = arith.constant dense<0xFF800000> : vector<128xf32>
    %233 = vector.multi_reduction <maximumf>, %232, %cst_95 [1] : vector<128x128xf32> to vector<128xf32>
    %234 = vector.shape_cast %233 : vector<128xf32> to vector<128x1xf32>
    %235 = vector.broadcast %234 : vector<128x1xf32> to vector<128x128xf32>
    %236 = arith.cmpf oeq, %232, %235 : vector<128x128xf32>
    %c25_i32_96 = arith.constant 25 : i32
    %237 = vector.broadcast %c25_i32_96 : i32 to vector<128x128xi32>
    %238 = arith.subi %23, %237 : vector<128x128xi32>
    %c21_i32_97 = arith.constant 21 : i32
    %239 = vector.broadcast %c21_i32_97 : i32 to vector<128x128xi32>
    %240 = arith.select %236, %238, %239 : vector<128x128xi1>, vector<128x128xi32>
    %cst_98 = arith.constant dense<2147483647> : vector<128xi32>
    %241 = vector.multi_reduction <minsi>, %240, %cst_98 [1] : vector<128x128xi32> to vector<128xi32>
    %242 = vector.shape_cast %241 : vector<128xi32> to vector<128x1xi32>
    %243 = arith.sitofp %242 : vector<128x1xi32> to vector<128x1xf32>
    %cst_99 = arith.constant 0.190476194 : f32
    %244 = vector.broadcast %cst_99 : f32 to vector<128x1xf32>
    %245 = arith.mulf %243, %244 : vector<128x1xf32>
    %cst_100 = arith.constant 0.095238097 : f32
    %246 = vector.broadcast %cst_100 : f32 to vector<128x1xf32>
    %247 = arith.addf %246, %245 : vector<128x1xf32>
    %248 = vector.extract_strided_slice %213 {offsets = [0, 2], sizes = [128, 1], strides = [1, 1]} : vector<128x128xf32> to vector<128x1xf32>
    %cst_101 = arith.constant 2.000000e+00 : f32
    %249 = vector.broadcast %cst_101 : f32 to vector<128x1xf32>
    %250 = arith.mulf %248, %249 : vector<128x1xf32>
    %cst_102 = arith.constant 1.000000e+00 : f32
    %251 = vector.broadcast %cst_102 : f32 to vector<128x1xf32>
    %252 = arith.subf %250, %251 : vector<128x1xf32>
    %cst_103 = arith.constant 0.190476194 : f32
    %253 = vector.broadcast %cst_103 : f32 to vector<128x1xf32>
    %254 = arith.mulf %252, %253 : vector<128x1xf32>
    %255 = arith.addf %254, %230 : vector<128x1xf32>
    %cst_104 = arith.constant 0.000000e+00 : f32
    %cst_105 = arith.constant 4.000000e+00 : f32
    %256 = vector.broadcast %cst_104 : f32 to vector<128x1xf32>
    %257 = arith.maximumf %256, %255 : vector<128x1xf32>
    %258 = vector.broadcast %cst_105 : f32 to vector<128x1xf32>
    %259 = arith.minimumf %258, %257 : vector<128x1xf32>
    %cst_106 = arith.constant 3.300000e+01 : f32
    %260 = vector.broadcast %cst_106 : f32 to vector<128x1xf32>
    %261 = arith.mulf %259, %260 : vector<128x1xf32>
    %262 = vector.extract_strided_slice %213 {offsets = [0, 24], sizes = [128, 1], strides = [1, 1]} : vector<128x128xf32> to vector<128x1xf32>
    %cst_107 = arith.constant 2.000000e+00 : f32
    %263 = vector.broadcast %cst_107 : f32 to vector<128x1xf32>
    %264 = arith.mulf %262, %263 : vector<128x1xf32>
    %cst_108 = arith.constant 1.000000e+00 : f32
    %265 = vector.broadcast %cst_108 : f32 to vector<128x1xf32>
    %266 = arith.subf %264, %265 : vector<128x1xf32>
    %cst_109 = arith.constant 0.190476194 : f32
    %267 = vector.broadcast %cst_109 : f32 to vector<128x1xf32>
    %268 = arith.mulf %266, %267 : vector<128x1xf32>
    %269 = arith.addf %268, %247 : vector<128x1xf32>
    %cst_110 = arith.constant 0.000000e+00 : f32
    %cst_111 = arith.constant 4.000000e+00 : f32
    %270 = vector.broadcast %cst_110 : f32 to vector<128x1xf32>
    %271 = arith.maximumf %270, %269 : vector<128x1xf32>
    %272 = vector.broadcast %cst_111 : f32 to vector<128x1xf32>
    %273 = arith.minimumf %272, %271 : vector<128x1xf32>
    %cst_112 = arith.constant 2.300000e+01 : f32
    %274 = vector.broadcast %cst_112 : f32 to vector<128x1xf32>
    %275 = arith.mulf %273, %274 : vector<128x1xf32>
    %276 = vector.extract_strided_slice %213 {offsets = [0, 0], sizes = [128, 2], strides = [1, 1]} : vector<128x128xf32> to vector<128x2xf32>
    %cst_113 = arith.constant 2.000000e+00 : f32
    %277 = vector.broadcast %cst_113 : f32 to vector<128x2xf32>
    %278 = arith.mulf %276, %277 : vector<128x2xf32>
    %cst_114 = arith.constant 5.000000e-01 : f32
    %279 = vector.broadcast %cst_114 : f32 to vector<128x2xf32>
    %280 = arith.subf %278, %279 : vector<128x2xf32>
    %281 = arith.addf %280, %22 : vector<128x2xf32>
    %cst_115 = arith.constant 8.000000e+00 : f32
    %282 = vector.broadcast %cst_115 : f32 to vector<128x2xf32>
    %283 = arith.mulf %281, %282 : vector<128x2xf32>
    %284 = vector.extract_strided_slice %213 {offsets = [0, 46], sizes = [128, 9], strides = [1, 1]} : vector<128x128xf32> to vector<128x9xf32>
    %285 = tpu.concatenate %283, %261, %275, %284 in 1 : vector<128x2xf32>, vector<128x1xf32>, vector<128x1xf32>, vector<128x9xf32> -> vector<128x13xf32>
    %c0_116 = arith.constant 0 : index
    %c2_117 = arith.constant 2 : index
    %c0_118 = arith.constant 0 : index
    %c0_119 = arith.constant 0 : index
    %286 = vector.load %arg6[%c0_116, %c2_117, %c0_118, %c0_119] : memref<1x3x128x13xf32, #tpu.memory_space<vmem>>, vector<1x1x128x13xf32>
    %287 = vector.shape_cast %286 : vector<1x1x128x13xf32> to vector<128x13xf32>
    %288 = vector.shape_cast %285 : vector<128x13xf32> to vector<1x1x128x13xf32>
    tpu.vector_store %arg6[%c0_116, %c2_117, %c0_118, %c0_119], %288 {strides = array<i32>} : memref<1x3x128x13xf32, #tpu.memory_space<vmem>>, vector<1x1x128x13xf32>,
    return
  }
  func.func @transform_0(%arg0: i32, %arg1: i32) -> (i32, i32, i32) {
    %c0_i32 = arith.constant 0 : i32
    %c0_i32_0 = arith.constant 0 : i32
    return %arg0, %c0_i32, %arg1 : i32, i32, i32
  }
  func.func @transform_1(%arg0: i32, %arg1: i32) -> (i32, i32) {
    %c0_i32 = arith.constant 0 : i32
    %c0_i32_0 = arith.constant 0 : i32
    %c0_i32_1 = arith.constant 0 : i32
    return %c0_i32, %c0_i32_0 : i32, i32
  }
  func.func @transform_2(%arg0: i32, %arg1: i32) -> (i32, i32) {
    %c0_i32 = arith.constant 0 : i32
    %c0_i32_0 = arith.constant 0 : i32
    %c0_i32_1 = arith.constant 0 : i32
    return %c0_i32, %c0_i32_0 : i32, i32
  }
  func.func @transform_3(%arg0: i32, %arg1: i32) -> (i32, i32, i32, i32) {
    %c0_i32 = arith.constant 0 : i32
    %c0_i32_0 = arith.constant 0 : i32
    %c0_i32_1 = arith.constant 0 : i32
    return %arg0, %c0_i32, %arg1, %c0_i32_0 : i32, i32, i32, i32
  }
  func.func @transform_4(%arg0: i32, %arg1: i32) -> (i32, i32, i32, i32) {
    %c0_i32 = arith.constant 0 : i32
    %c0_i32_0 = arith.constant 0 : i32
    %c0_i32_1 = arith.constant 0 : i32
    return %arg0, %c0_i32, %arg1, %c0_i32_0 : i32, i32, i32, i32
  }
}

</mosaic_0001>

<llo_original>
// kernel: tpu_custom_call.1
$region0: #{tpu_custom_call.1}
  #allocation0 [shape = 'u32[]', space=smem, size = 0x4, offset = 0x4, fixed_abs, tag = 'smem constant byte address 0x4 - core index']
  #allocation1 [shape = 'u32[144,128]{1,0:T(1,128)}', space=vmem, size = 0x12000, scoped, tag = 'internal scratch']
  %s0 = inlined_call_operand.hbm [shape: f32[2,16,256], index: 0, kind: input, shape index: {}]
  %s1 = inlined_call_operand.hbm [shape: bf16[16,384], index: 1, kind: input, shape index: {}]
  %s2 = inlined_call_operand.vmem [shape: f32[1,384], index: 2, kind: input, shape index: {}]
  %s3 = inlined_call_operand.vmem [shape: f32[2,3,256,55], index: 3, kind: output, shape index: {0}]
  %s4 = inlined_call_operand.vmem [shape: f32[2,3,256,13], index: 4, kind: output, shape index: {1}]
  %5 = xla_tuple %s3, %s4
  %s6 = sld [smem:[#allocation0]]
  $region129: #{tpu_custom_call.1} parent=0
    _
  %s8 = ssub.s32 1, %s6
  %s9 = scalar_select 0, %s8, %s6
  $region1: #{tpu_custom_call.1} parent=0
    #allocation2 [shape = 'u8[16384]{0}', space=vmem, size = 0x4000, scoped, tag = 'input window, operand 0']
    #allocation3 [shape = 's32[2]{0}', space=sflag, size = 0x8, scoped, tag = 'scoped memory for tpu_custom_call.1']
    #allocation4 [shape = 'u8[12288]{0}', space=vmem, size = 0x3000, scoped, tag = 'input window, operand 1, single buffered']
    #allocation5 [shape = 's32[1]{0}', space=sflag, size = 0x4, scoped, tag = 'scoped memory for tpu_custom_call.1']
    #allocation6 [shape = 'u8[393216]{0}', space=vmem, size = 0x60000, scoped, tag = 'output window, operand 0']
    #allocation7 [shape = 'u8[393216]{0}', space=vmem, size = 0x60000, scoped, tag = 'output window, operand 1']
    %10 = vsyncpa [#allocation3], 0
    %s11 = scalar_lea.sflag [#allocation3], 1
    %12 = vsyncpa %s11, 0
    %13 = vsyncpa [#allocation5], 0
    loop: start=0, step=1, limit=6
    $region2: #{tpu_custom_call.1} parent=1 // loop_pre_header
      _
    $region3: #{tpu_custom_call.1} parent=1 // loop_header
      %s15 = sphi 0, %s19
      %p16 = scmp.ge.s32.totalorder %s15, 6
      %s22 = sphi 0, %s34
      %s23 = sphi 0, %s30
      %s24 = sphi 0, %s22
      %s25 = sphi 0, %s23
      %s26 = sphi 0, %s24
      %s27 = sphi 0, %s25
      %s39 = sphi 0, %s41
      %s42 = sphi 0, %s39
      %s43 = sphi 0, %s42
      %s59 = sphi 0, %s43
      %s63 = sphi 0, %s63
      %s65 = sphi 0, %s63
      %s66 = sphi 0, %s65
      %s80 = sphi 0, %s66
      %s84 = sphi 0, %s84
      %s86 = sphi 0, %s84
      %s87 = sphi 0, %s86
      %s101 = sphi 0, %s87
      %s109 = sphi 0, %s111
      %s112 = sphi 0, %s109
      %s113 = sphi 0, %s112
      %s129 = sphi 0, %s113
      %s137 = sphi 0, %s139
      %s140 = sphi 0, %s137
      %s141 = sphi 0, %s140
      %s157 = sphi 0, %s141
    $region4: #{tpu_custom_call.1} parent=1 // loop_header_branch
      %18 = sbr.rel (%p16) target = $region8
    $region5: #{tpu_custom_call.1} parent=1 // loop_body
      %s20 = ssub.s32 %s15, 1
      %s21 = ssub.s32 %s15, 2
      %s28 = sadd.s32 1, %s23
      %p29 = scmp.ge.s32.totalorder %s28, 2
      %s30 = scalar_select %p29, 0, %s28
      %s31 = sadd.s32 1, %s22
      %s32 = scalar_select %p29, %s31, %s22
      %p33 = scmp.ge.s32.totalorder %s32, 2
      %s34 = scalar_select %p33, 0, %s32
      %s35 = ssub.s32 %s22, %s34
      %s36 = ssub.s32 %s23, %s30
      %s37 = sor.u32 %s35, %s36
      %p38 = scmp.eq.s32.totalorder %s37, 0
      %s40 = sadd.s32 %s39, 1
      %s41 = scalar_select %p38, %s39, %s40
      %p44 = pneg %p38
      %p45 = scmp.eq.s32.totalorder %s15, 3
      %p46 = por %p44, %p45
      %p47 = scmp.ne.s32.totalorder %s39, %s42
      %p48 = scmp.eq.s32.totalorder %s15, 0
      %p49 = por %p47, %p48
      %p50 = scmp.ne.s32.totalorder %s39, %s42
      %p51 = scmp.eq.s32.totalorder %s20, 3
      %p52 = por %p50, %p51
      %p53 = scmp.ne.s32.totalorder %s42, %s43
      %p54 = scmp.eq.s32.totalorder %s20, 0
      %p55 = por %p53, %p54
      %p56 = scmp.ne.s32.totalorder %s42, %s43
      %p57 = scmp.eq.s32.totalorder %s21, 3
      %p58 = por %p56, %p57
      %p60 = scmp.ne.s32.totalorder %s43, %s59
      %p61 = scmp.eq.s32.totalorder %s21, 0
      %p62 = por %p60, %p61
      %s64 = sadd.s32 %s63, 1
      %p67 = scmp.eq.s32.totalorder %s15, 3
      %p68 = scmp.ne.s32.totalorder %s63, %s65
      %p69 = scmp.eq.s32.totalorder %s15, 0
      %p70 = por %p68, %p69
      %p71 = scmp.ne.s32.totalorder %s63, %s65
      %p72 = scmp.eq.s32.totalorder %s20, 3
      %p73 = por %p71, %p72
      %p74 = scmp.ne.s32.totalorder %s65, %s66
      %p75 = scmp.eq.s32.totalorder %s20, 0
      %p76 = por %p74, %p75
      %p77 = scmp.ne.s32.totalorder %s65, %s66
      %p78 = scmp.eq.s32.totalorder %s21, 3
      %p79 = por %p77, %p78
      %p81 = scmp.ne.s32.totalorder %s66, %s80
      %p82 = scmp.eq.s32.totalorder %s21, 0
      %p83 = por %p81, %p82
      %s85 = sadd.s32 %s84, 1
      %p88 = scmp.eq.s32.totalorder %s15, 3
      %p89 = scmp.ne.s32.totalorder %s84, %s86
      %p90 = scmp.eq.s32.totalorder %s15, 0
      %p91 = por %p89, %p90
      %p92 = scmp.ne.s32.totalorder %s84, %s86
      %p93 = scmp.eq.s32.totalorder %s20, 3
      %p94 = por %p92, %p93
      %p95 = scmp.ne.s32.totalorder %s86, %s87
      %p96 = scmp.eq.s32.totalorder %s20, 0
      %p97 = por %p95, %p96
      %p98 = scmp.ne.s32.totalorder %s86, %s87
      %p99 = scmp.eq.s32.totalorder %s21, 3
      %p100 = por %p98, %p99
      %p102 = scmp.ne.s32.totalorder %s87, %s101
      %p103 = scmp.eq.s32.totalorder %s21, 0
      %p104 = por %p102, %p103
      %s105 = ssub.s32 %s22, %s34
      %s106 = ssub.s32 %s23, %s30
      %s107 = sor.u32 %s105, %s106
      %p108 = scmp.eq.s32.totalorder %s107, 0
      %s110 = sadd.s32 %s109, 1
      %s111 = scalar_select %p108, %s109, %s110
      %p114 = pneg %p108
      %p115 = scmp.eq.s32.totalorder %s15, 3
      %p116 = por %p114, %p115
      %p117 = scmp.ne.s32.totalorder %s109, %s112
      %p118 = scmp.eq.s32.totalorder %s15, 0
      %p119 = por %p117, %p118
      %p120 = scmp.ne.s32.totalorder %s109, %s112
      %p121 = scmp.eq.s32.totalorder %s20, 3
      %p122 = por %p120, %p121
      %p123 = scmp.ne.s32.totalorder %s112, %s113
      %p124 = scmp.eq.s32.totalorder %s20, 0
      %p125 = por %p123, %p124
      %p126 = scmp.ne.s32.totalorder %s112, %s113
      %p127 = scmp.eq.s32.totalorder %s21, 3
      %p128 = por %p126, %p127
      %p130 = scmp.ne.s32.totalorder %s113, %s129
      %p131 = scmp.eq.s32.totalorder %s21, 0
      %p132 = por %p130, %p131
      %s133 = ssub.s32 %s22, %s34
      %s134 = ssub.s32 %s23, %s30
      %s135 = sor.u32 %s133, %s134
      %p136 = scmp.eq.s32.totalorder %s135, 0
      %s138 = sadd.s32 %s137, 1
      %s139 = scalar_select %p136, %s137, %s138
      %p142 = pneg %p136
      %p143 = scmp.eq.s32.totalorder %s15, 3
      %p144 = por %p142, %p143
      %p145 = scmp.ne.s32.totalorder %s137, %s140
      %p146 = scmp.eq.s32.totalorder %s15, 0
      %p147 = por %p145, %p146
      %p148 = scmp.ne.s32.totalorder %s137, %s140
      %p149 = scmp.eq.s32.totalorder %s20, 3
      %p150 = por %p148, %p149
      %p151 = scmp.ne.s32.totalorder %s140, %s141
      %p152 = scmp.eq.s32.totalorder %s20, 0
      %p153 = por %p151, %p152
      %p154 = scmp.ne.s32.totalorder %s140, %s141
      %p155 = scmp.eq.s32.totalorder %s21, 3
      %p156 = por %p154, %p155
      %p158 = scmp.ne.s32.totalorder %s141, %s157
      %p159 = scmp.eq.s32.totalorder %s21, 0
      %p160 = por %p158, %p159
      %p161 = scmp.le.s32.totalorder 1, %s15
      %p162 = scmp.lt.s32.totalorder %s15, 5
      %p163 = pnand %p161, %p162
      %p164 = pneg %p163
      // Predicated region
      $region9: #{tpu_custom_call.1} parent=5 // pred_check
        _
      $region10: #{tpu_custom_call.1} parent=5 // pred_check_branch
        %166 = sbr.rel (%p163) target = $region12
      $region11: #{tpu_custom_call.1} parent=5 // pred_region
        %s167 = ssub.s32 %s15, 1
        // Predicated region
        $region13: #{tpu_custom_call.1} parent=11 // pred_check
          %p168 = pneg %p76
        $region14: #{tpu_custom_call.1} parent=11 // pred_check_branch
          %170 = sbr.rel (%p168) target = $region16
        $region15: #{tpu_custom_call.1} parent=11 // pred_region
          %s172 = ssub.s32 384, 384
          %173 = vsyncadd [#allocation5], %s172
          %s174 = sshll.u32 [#allocation4], 4
          %s175 = int_to_ptr.vmem [resolvable:$true] %s174
          %180 = dma.hbm_to_vmem [thread:$0]  %s1, 384, %s175, [#allocation5], 192, 192, 12
        $region16: #{tpu_custom_call.1} parent=11 // pred_fallthru
          _
        // Predicated region
        $region17: #{tpu_custom_call.1} parent=11 // pred_check
          %p181 = pneg %p97
        $region18: #{tpu_custom_call.1} parent=11 // pred_check_branch
          %183 = sbr.rel (%p181) target = $region20
        $region19: #{tpu_custom_call.1} parent=11 // pred_region
          _
        $region20: #{tpu_custom_call.1} parent=11 // pred_fallthru
          _
      $region12: #{tpu_custom_call.1} parent=5 // pred_fallthru
        _
      %p184 = scmp.lt.s32.totalorder %s15, 4
      // Predicated region
      $region21: #{tpu_custom_call.1} parent=5 // pred_check
        %p185 = pneg %p184
      $region22: #{tpu_custom_call.1} parent=5 // pred_check_branch
        %187 = sbr.rel (%p185) target = $region24
      $region23: #{tpu_custom_call.1} parent=5 // pred_region
        // Predicated region
        $region25: #{tpu_custom_call.1} parent=23 // pred_check
          %p188 = pneg %p49
        $region26: #{tpu_custom_call.1} parent=23 // pred_check_branch
          %190 = sbr.rel (%p188) target = $region28
        $region27: #{tpu_custom_call.1} parent=23 // pred_region
          %s191 = sand.u32 %s39, 1
          %s192 = scalar_lea.sflag [#allocation3], %s191
          %s193 = sand.u32 %s39, 1
          %s194 = smul.addr %s193, 16
          %s195 = scalar_lea.vmem [#allocation2], %s194
          %s197 = ssub.s32 256, 256
          %198 = vsyncadd %s192, %s197
          %s199 = smul.addr %s22, 4
          %s200 = sadd.s32 %s23, %s199
          %s201 = smul.addr %s200, 128
          %s202 = scalar_lea.hbm %s0, %s201
          %s203 = sshll.u32 %s195, 4
          %s204 = int_to_ptr.vmem [resolvable:$true] %s203
          %209 = dma.hbm_to_vmem [thread:$0]  %s202, 256, %s204, %s192, 256, 128, 8
        $region28: #{tpu_custom_call.1} parent=23 // pred_fallthru
          _
      $region24: #{tpu_custom_call.1} parent=5 // pred_fallthru
        _
      %p210 = scmp.le.s32.totalorder 1, %s15
      %p211 = scmp.lt.s32.totalorder %s15, 5
      %p212 = pnand %p210, %p211
      %p213 = pneg %p212
      // Predicated region
      $region29: #{tpu_custom_call.1} parent=5 // pred_check
        _
      $region30: #{tpu_custom_call.1} parent=5 // pred_check_branch
        %215 = sbr.rel (%p212) target = $region32
      $region31: #{tpu_custom_call.1} parent=5 // pred_region
        %s216 = ssub.s32 %s15, 1
        %s217 = sand.u32 %s42, 1
        %s218 = scalar_lea.sflag [#allocation3], %s217
        %s219 = sand.u32 %s42, 1
        %s220 = smul.addr %s219, 16
        %s221 = scalar_lea.vmem [#allocation2], %s220
        // Predicated region
        $region33: #{tpu_custom_call.1} parent=31 // pred_check
          %p222 = pneg %p55
        $region34: #{tpu_custom_call.1} parent=31 // pred_check_branch
          %224 = sbr.rel (%p222) target = $region36
        $region35: #{tpu_custom_call.1} parent=31 // pred_region
          %225 = dma.done %s218, 256
        $region36: #{tpu_custom_call.1} parent=31 // pred_fallthru
          _
        // Predicated region
        $region37: #{tpu_custom_call.1} parent=31 // pred_check
          %p226 = pneg %p76
        $region38: #{tpu_custom_call.1} parent=31 // pred_check_branch
          %228 = sbr.rel (%p226) target = $region40
        $region39: #{tpu_custom_call.1} parent=31 // pred_region
          %229 = dma.done [#allocation5], 384
        $region40: #{tpu_custom_call.1} parent=31 // pred_fallthru
          _
        %s230 = sand.u32 %s42, 1
        %s231 = scalar_lea.sflag [#allocation3], %s230
        %s232 = sand.u32 %s42, 1
        %s233 = smul.addr %s232, 16
        %s234 = scalar_lea.vmem [#allocation2], %s233
        %p235 = pneg %p55
        %p236 = pneg %p52
        %p237 = pneg %p76
        %p238 = pneg %p73
        %p239 = pneg %p97
        %p240 = pneg %p94
        %p241 = pneg %p125
        %p242 = pneg %p122
        %s243 = sand.u32 %s112, 1
        %s244 = sand.u32 %s112, 1
        %s245 = smul.addr %s244, 384
        %s246 = scalar_lea.vmem [#allocation6], %s245
        %p247 = pneg %p153
        %p248 = pneg %p150
        %s249 = sand.u32 %s140, 1
        %s250 = sand.u32 %s140, 1
        %s251 = smul.addr %s250, 384
        %s252 = scalar_lea.vmem [#allocation7], %s251
        %s253 = smul.u32 16, %s25
        %s254 = smul.u32 16, %s25
        %v256 = vld [vmem:[%s221] sm:$0xff]
        %v257 = vld [vmem:[%s221 + $0x8] sm:$0xff]
        %258 = vxpose.xlu0.b32.start [1/16] %v256, 128
        %259 = vxpose.xlu0.b32.cont [2/16] %v257, 128
        %260 = vxpose.xlu0.b32.cont [3/16] 0.0, 128
        %261 = vxpose.xlu0.b32.cont [4/16] 0.0, 128
        %262 = vxpose.xlu0.b32.cont [5/16] 0.0, 128
        %263 = vxpose.xlu0.b32.cont [6/16] 0.0, 128
        %264 = vxpose.xlu0.b32.cont [7/16] 0.0, 128
        %265 = vxpose.xlu0.b32.cont [8/16] 0.0, 128
        %266 = vxpose.xlu0.b32.cont [9/16] 0.0, 128
        %267 = vxpose.xlu0.b32.cont [10/16] 0.0, 128
        %268 = vxpose.xlu0.b32.cont [11/16] 0.0, 128
        %269 = vxpose.xlu0.b32.cont [12/16] 0.0, 128
        %270 = vxpose.xlu0.b32.cont [13/16] 0.0, 128
        %271 = vxpose.xlu0.b32.cont [14/16] 0.0, 128
        %272 = vxpose.xlu0.b32.cont [15/16] 0.0, 128
        %273 = vxpose.xlu0.b32.end [16/16] 0.0, 128
        %v274 = vpop.trf.xlu0
        %v275 = vpop.trf.xlu0
        %v276 = vpop.trf.xlu0
        %v277 = vpop.trf.xlu0
        %v278 = vpop.trf.xlu0
        %v279 = vpop.trf.xlu0
        %v280 = vpop.trf.xlu0
        %v281 = vpop.trf.xlu0
        %v282 = vpop.trf.xlu0
        %v283 = vpop.trf.xlu0
        %v284 = vpop.trf.xlu0
        %v285 = vpop.trf.xlu0
        %v286 = vpop.trf.xlu0
        %v287 = vpop.trf.xlu0
        %v288 = vpop.trf.xlu0
        %v289 = vpop.trf.xlu0
        %v290 = vpack.c.bf16 %v275, %v274
        %v291 = vpack.c.bf16 %v277, %v276
        %v292 = vpack.c.bf16 %v279, %v278
        %v293 = vpack.c.bf16 %v281, %v280
        %v294 = vpack.c.bf16 %v283, %v282
        %v295 = vpack.c.bf16 %v285, %v284
        %v296 = vpack.c.bf16 %v287, %v286
        %v297 = vpack.c.bf16 %v289, %v288
        %v298 = vld [vmem:[#allocation4] sm:$0xff]
        %v299 = vld [vmem:[#allocation4 + $0x8] sm:$0xf]
        %v300 = vld [vmem:[#allocation4 + $0xc] sm:$0xff]
        %v301 = vld [vmem:[#allocation4 + $0x14] sm:$0xf]
        %v302 = vld [vmem:[%s2] sm:$0x7]
        %v304 = vlaneseq
        %v305 = vshrl.u32 %v304, 7
        %v306 = vsub.s32 0, %v305
        %v307 = vrot.slane %v302, %v306
        %v308 = vlaneseq
        %v309 = vshrl.u32 %v308, 7
        %v310 = vsub.s32 1, %v309
        %v311 = vrot.slane %v302, %v310
        %v312 = vlaneseq
        %v313 = vshrl.u32 %v312, 7
        %v314 = vsub.s32 2, %v313
        %v315 = vrot.slane %v302, %v314
        %v323 = vunpack.c.l.b16 %v298
        %v324 = vunpack.c.h.b16 %v298
        %v325 = vunpack.c.l.b16 %v299
        %v326 = vunpack.c.l.b16 %v300
        %v327 = vunpack.c.h.b16 %v300
        %v328 = vunpack.c.l.b16 %v301
        %v329 = vpack.c.b16 %v326, %v323
        %v330 = vpack.c.b16 %v327, %v324
        %v331 = vpack.c.b16 %v328, %v325
        %vm335 = vcmask 130048
        %v337 = vsel %vm335, %v290, 0
        %v340 = vsel %vm335, %v291, 0
        %v343 = vsel %vm335, %v292, 0
        %v346 = vsel %vm335, %v293, 0
        %v349 = vsel %vm335, %v294, 0
        %v352 = vsel %vm335, %v295, 0
        %v355 = vsel %vm335, %v296, 0
        %v358 = vsel %vm335, %v297, 0
        %360 = vmatprep.subr.bf16.mxu0 %v330
        %361 = vmatpush1.bf16.msra.mxu0 %v329
        %362 = vmatprep.subr.bf16.mxu0 0
        %363 = vmatpush1.bf16.msra.mxu0 0
        %364 = vmatprep.subr.bf16.mxu0 0
        %365 = vmatpush1.bf16.msra.mxu0 0
        %366 = vmatprep.subr.bf16.mxu0 0
        %367 = vmatpush1.bf16.msra.mxu0 0
        %368 = vmatprep.subr.bf16.mxu0 0
        %369 = vmatpush1.bf16.msra.mxu0 0
        %370 = vmatprep.subr.bf16.mxu0 0
        %371 = vmatpush1.bf16.msra.mxu0 0
        %372 = vmatprep.subr.bf16.mxu0 0
        %373 = vmatpush1.bf16.msra.mxu0 0
        %374 = vmatprep.subr.bf16.mxu0 0
        %375 = vmatpush1.bf16.msra.mxu0 0
        %376 = vmatprep.subr.bf16.mxu0 0
        %377 = vmatpush1.bf16.msra.mxu0 0
        %378 = vmatprep.subr.bf16.mxu0 0
        %379 = vmatpush1.bf16.msra.mxu0 0
        %380 = vmatprep.subr.bf16.mxu0 0
        %381 = vmatpush1.bf16.msra.mxu0 0
        %382 = vmatprep.subr.bf16.mxu0 0
        %383 = vmatpush1.bf16.msra.mxu0 0
        %384 = vmatprep.subr.bf16.mxu0 0
        %385 = vmatpush1.bf16.msra.mxu0 0
        %386 = vmatprep.subr.bf16.mxu0 0
        %387 = vmatpush1.bf16.msra.mxu0 0
        %388 = vmatprep.subr.bf16.mxu0 0
        %389 = vmatpush1.bf16.msra.mxu0 0
        %390 = vmatprep.subr.bf16.mxu0 0
        %391 = vmatpush1.bf16.msra.mxu0 0
        %392 = vmatprep.mubr.bf16.mxu0 0
        %393 = vmatmul.mubr.bf16.gmra.mrb[0].mxu0 %v337
        %v394 = vpop.f32.mrb[0].mxu0
        %v395 = vadd.f32 %v307, %v394
        %v396 = vpop.f32.mrb[0].mxu0
        %v397 = vadd.f32 %v311, %v396
        %v398 = vpop.f32.mrb[0].mxu0
        %v399 = vadd.f32 %v307, %v398
        %v400 = vpop.f32.mrb[0].mxu0
        %v401 = vadd.f32 %v311, %v400
        %402 = vmatprep.mubr.bf16.mxu0 0
        %403 = vmatmul.mubr.bf16.gmra.mrb[0].mxu0 %v340
        %v404 = vpop.f32.mrb[0].mxu0
        %v405 = vadd.f32 %v307, %v404
        %v406 = vpop.f32.mrb[0].mxu0
        %v407 = vadd.f32 %v311, %v406
        %v408 = vpop.f32.mrb[0].mxu0
        %v409 = vadd.f32 %v307, %v408
        %v410 = vpop.f32.mrb[0].mxu0
        %v411 = vadd.f32 %v311, %v410
        %412 = vmatprep.mubr.bf16.mxu0 0
        %413 = vmatmul.mubr.bf16.gmra.mrb[0].mxu0 %v343
        %v414 = vpop.f32.mrb[0].mxu0
        %v415 = vadd.f32 %v307, %v414
        %v416 = vpop.f32.mrb[0].mxu0
        %v417 = vadd.f32 %v311, %v416
        %v418 = vpop.f32.mrb[0].mxu0
        %v419 = vadd.f32 %v307, %v418
        %v420 = vpop.f32.mrb[0].mxu0
        %v421 = vadd.f32 %v311, %v420
        %422 = vmatprep.mubr.bf16.mxu0 0
        %423 = vmatmul.mubr.bf16.gmra.mrb[0].mxu0 %v346
        %v424 = vpop.f32.mrb[0].mxu0
        %v425 = vadd.f32 %v307, %v424
        %v426 = vpop.f32.mrb[0].mxu0
        %v427 = vadd.f32 %v311, %v426
        %v428 = vpop.f32.mrb[0].mxu0
        %v429 = vadd.f32 %v307, %v428
        %v430 = vpop.f32.mrb[0].mxu0
        %v431 = vadd.f32 %v311, %v430
        %432 = vmatprep.mubr.bf16.mxu0 0
        %433 = vmatmul.mubr.bf16.gmra.mrb[0].mxu0 %v349
        %v434 = vpop.f32.mrb[0].mxu0
        %v435 = vadd.f32 %v307, %v434
        %v436 = vpop.f32.mrb[0].mxu0
        %v437 = vadd.f32 %v311, %v436
        %v438 = vpop.f32.mrb[0].mxu0
        %v439 = vadd.f32 %v307, %v438
        %v440 = vpop.f32.mrb[0].mxu0
        %v441 = vadd.f32 %v311, %v440
        %442 = vmatprep.mubr.bf16.mxu0 0
        %443 = vmatmul.mubr.bf16.gmra.mrb[0].mxu0 %v352
        %v444 = vpop.f32.mrb[0].mxu0
        %v445 = vadd.f32 %v307, %v444
        %v446 = vpop.f32.mrb[0].mxu0
        %v447 = vadd.f32 %v311, %v446
        %v448 = vpop.f32.mrb[0].mxu0
        %v449 = vadd.f32 %v307, %v448
        %v450 = vpop.f32.mrb[0].mxu0
        %v451 = vadd.f32 %v311, %v450
        %452 = vmatprep.mubr.bf16.mxu0 0
        %453 = vmatmul.mubr.bf16.gmra.mrb[0].mxu0 %v355
        %v454 = vpop.f32.mrb[0].mxu0
        %v455 = vadd.f32 %v307, %v454
        %v456 = vpop.f32.mrb[0].mxu0
        %v457 = vadd.f32 %v311, %v456
        %v458 = vpop.f32.mrb[0].mxu0
        %v459 = vadd.f32 %v307, %v458
        %v460 = vpop.f32.mrb[0].mxu0
        %v461 = vadd.f32 %v311, %v460
        %462 = vmatprep.mubr.bf16.mxu0 0
        %463 = vmatmul.mubr.bf16.gmra.mrb[0].mxu0 %v358
        %v464 = vpop.f32.mrb[0].mxu0
        %v465 = vadd.f32 %v307, %v464
        %v466 = vpop.f32.mrb[0].mxu0
        %v467 = vadd.f32 %v311, %v466
        %v468 = vpop.f32.mrb[0].mxu0
        %v469 = vadd.f32 %v307, %v468
        %v470 = vpop.f32.mrb[0].mxu0
        %v471 = vadd.f32 %v311, %v470
        %472 = vdwg.mxu0
        %473 = vmatprep.subr.bf16.mxu0 0
        %474 = vmatpush1.bf16.msra.mxu0 %v331
        %475 = vmatprep.subr.bf16.mxu0 0
        %476 = vmatpush1.bf16.msra.mxu0 0
        %477 = vmatprep.subr.bf16.mxu0 0
        %478 = vmatpush1.bf16.msra.mxu0 0
        %479 = vmatprep.subr.bf16.mxu0 0
        %480 = vmatpush1.bf16.msra.mxu0 0
        %481 = vmatprep.subr.bf16.mxu0 0
        %482 = vmatpush1.bf16.msra.mxu0 0
        %483 = vmatprep.subr.bf16.mxu0 0
        %484 = vmatpush1.bf16.msra.mxu0 0
        %485 = vmatprep.subr.bf16.mxu0 0
        %486 = vmatpush1.bf16.msra.mxu0 0
        %487 = vmatprep.subr.bf16.mxu0 0
        %488 = vmatpush1.bf16.msra.mxu0 0
        %489 = vmatprep.subr.bf16.mxu0 0
        %490 = vmatpush1.bf16.msra.mxu0 0
        %491 = vmatprep.subr.bf16.mxu0 0
        %492 = vmatpush1.bf16.msra.mxu0 0
        %493 = vmatprep.subr.bf16.mxu0 0
        %494 = vmatpush1.bf16.msra.mxu0 0
        %495 = vmatprep.subr.bf16.mxu0 0
        %496 = vmatpush1.bf16.msra.mxu0 0
        %497 = vmatprep.subr.bf16.mxu0 0
        %498 = vmatpush1.bf16.msra.mxu0 0
        %499 = vmatprep.subr.bf16.mxu0 0
        %500 = vmatpush1.bf16.msra.mxu0 0
        %501 = vmatprep.subr.bf16.mxu0 0
        %502 = vmatpush1.bf16.msra.mxu0 0
        %503 = vmatprep.subr.bf16.mxu0 0
        %504 = vmatpush1.bf16.msra.mxu0 0
        %505 = vmatprep.mubr.bf16.mxu0 0
        %506 = vmatmul.mubr.bf16.gmra.mrb[0].mxu0 %v337
        %v507 = vpop.f32.mrb[0].mxu0
        %v508 = vadd.f32 %v315, %v507
        %v509 = vpop.f32.mrb[0].mxu0
        %v510 = vpop.f32.mrb[0].mxu0
        %v511 = vadd.f32 %v315, %v510
        %v512 = vpop.f32.mrb[0].mxu0
        %513 = vmatprep.mubr.bf16.mxu0 0
        %514 = vmatmul.mubr.bf16.gmra.mrb[0].mxu0 %v340
        %v515 = vpop.f32.mrb[0].mxu0
        %v516 = vadd.f32 %v315, %v515
        %v517 = vpop.f32.mrb[0].mxu0
        %v518 = vpop.f32.mrb[0].mxu0
        %v519 = vadd.f32 %v315, %v518
        %v520 = vpop.f32.mrb[0].mxu0
        %521 = vmatprep.mubr.bf16.mxu0 0
        %522 = vmatmul.mubr.bf16.gmra.mrb[0].mxu0 %v343
        %v523 = vpop.f32.mrb[0].mxu0
        %v524 = vadd.f32 %v315, %v523
        %v525 = vpop.f32.mrb[0].mxu0
        %v526 = vpop.f32.mrb[0].mxu0
        %v527 = vadd.f32 %v315, %v526
        %v528 = vpop.f32.mrb[0].mxu0
        %529 = vmatprep.mubr.bf16.mxu0 0
        %530 = vmatmul.mubr.bf16.gmra.mrb[0].mxu0 %v346
        %v531 = vpop.f32.mrb[0].mxu0
        %v532 = vadd.f32 %v315, %v531
        %v533 = vpop.f32.mrb[0].mxu0
        %v534 = vpop.f32.mrb[0].mxu0
        %v535 = vadd.f32 %v315, %v534
        %v536 = vpop.f32.mrb[0].mxu0
        %537 = vmatprep.mubr.bf16.mxu0 0
        %538 = vmatmul.mubr.bf16.gmra.mrb[0].mxu0 %v349
        %v539 = vpop.f32.mrb[0].mxu0
        %v540 = vadd.f32 %v315, %v539
        %v541 = vpop.f32.mrb[0].mxu0
        %v542 = vpop.f32.mrb[0].mxu0
        %v543 = vadd.f32 %v315, %v542
        %v544 = vpop.f32.mrb[0].mxu0
        %545 = vmatprep.mubr.bf16.mxu0 0
        %546 = vmatmul.mubr.bf16.gmra.mrb[0].mxu0 %v352
        %v547 = vpop.f32.mrb[0].mxu0
        %v548 = vadd.f32 %v315, %v547
        %v549 = vpop.f32.mrb[0].mxu0
        %v550 = vpop.f32.mrb[0].mxu0
        %v551 = vadd.f32 %v315, %v550
        %v552 = vpop.f32.mrb[0].mxu0
        %553 = vmatprep.mubr.bf16.mxu0 0
        %554 = vmatmul.mubr.bf16.gmra.mrb[0].mxu0 %v355
        %v555 = vpop.f32.mrb[0].mxu0
        %v556 = vadd.f32 %v315, %v555
        %v557 = vpop.f32.mrb[0].mxu0
        %v558 = vpop.f32.mrb[0].mxu0
        %v559 = vadd.f32 %v315, %v558
        %v560 = vpop.f32.mrb[0].mxu0
        %561 = vmatprep.mubr.bf16.mxu0 0
        %562 = vmatmul.mubr.bf16.gmra.mrb[0].mxu0 %v358
        %v563 = vpop.f32.mrb[0].mxu0
        %v564 = vadd.f32 %v315, %v563
        %v565 = vpop.f32.mrb[0].mxu0
        %v566 = vpop.f32.mrb[0].mxu0
        %v567 = vadd.f32 %v315, %v566
        %v568 = vpop.f32.mrb[0].mxu0
        %569 = vdwg.mxu0
        %s570 = smul.u32 %s25, 128
        %v571 = vlaneseq
        %v572 = vshrl.u32 %v571, 7
        %v573 = vadd.s32 %v572, 8
        %v574 = vadd.s32 %v572, 16
        %v575 = vadd.s32 %v572, 24
        %v576 = vadd.s32 %v572, 32
        %v577 = vadd.s32 %v572, 40
        %v578 = vadd.s32 %v572, 48
        %v579 = vadd.s32 %v572, 56
        %v580 = vadd.s32 %v572, 64
        %v581 = vadd.s32 %v572, 72
        %v582 = vadd.s32 %v572, 80
        %v583 = vadd.s32 %v572, 88
        %v584 = vadd.s32 %v572, 96
        %v585 = vadd.s32 %v572, 104
        %v586 = vadd.s32 %v572, 112
        %v587 = vadd.s32 %v572, 120
        %v588 = vstv %s570
        %v589 = vadd.s32 %v588, %v572
        %v590 = vadd.s32 %v588, %v573
        %v591 = vadd.s32 %v588, %v574
        %v592 = vadd.s32 %v588, %v575
        %v593 = vadd.s32 %v588, %v576
        %v594 = vadd.s32 %v588, %v577
        %v595 = vadd.s32 %v588, %v578
        %v596 = vadd.s32 %v588, %v579
        %v597 = vadd.s32 %v588, %v580
        %v598 = vadd.s32 %v588, %v581
        %v599 = vadd.s32 %v588, %v582
        %v600 = vadd.s32 %v588, %v583
        %v601 = vadd.s32 %v588, %v584
        %v602 = vadd.s32 %v588, %v585
        %v603 = vadd.s32 %v588, %v586
        %v604 = vadd.s32 %v588, %v587
        %v605 = vcvt.s32.f32 %v589
        %v606 = vcvt.s32.f32 %v590
        %v607 = vcvt.s32.f32 %v591
        %v608 = vcvt.s32.f32 %v592
        %v609 = vcvt.s32.f32 %v593
        %v610 = vcvt.s32.f32 %v594
        %v611 = vcvt.s32.f32 %v595
        %v612 = vcvt.s32.f32 %v596
        %v613 = vcvt.s32.f32 %v597
        %v614 = vcvt.s32.f32 %v598
        %v615 = vcvt.s32.f32 %v599
        %v616 = vcvt.s32.f32 %v600
        %v617 = vcvt.s32.f32 %v601
        %v618 = vcvt.s32.f32 %v602
        %v619 = vcvt.s32.f32 %v603
        %v620 = vcvt.s32.f32 %v604
        %v621 = vadd.f32 %v605, 0.5
        %v622 = vadd.f32 %v606, 0.5
        %v623 = vadd.f32 %v607, 0.5
        %v624 = vadd.f32 %v608, 0.5
        %v625 = vadd.f32 %v609, 0.5
        %v626 = vadd.f32 %v610, 0.5
        %v627 = vadd.f32 %v611, 0.5
        %v628 = vadd.f32 %v612, 0.5
        %v629 = vadd.f32 %v613, 0.5
        %v630 = vadd.f32 %v614, 0.5
        %v631 = vadd.f32 %v615, 0.5
        %v632 = vadd.f32 %v616, 0.5
        %v633 = vadd.f32 %v617, 0.5
        %v634 = vadd.f32 %v618, 0.5
        %v635 = vadd.f32 %v619, 0.5
        %v636 = vadd.f32 %v620, 0.5
        %v637 = vrcp.pop 16.0
        %v638 = vmul.f32 %v621, %v637
        %v639 = vmul.f32 %v622, %v637
        %v640 = vmul.f32 %v623, %v637
        %v641 = vmul.f32 %v624, %v637
        %v642 = vmul.f32 %v625, %v637
        %v643 = vmul.f32 %v626, %v637
        %v644 = vmul.f32 %v627, %v637
        %v645 = vmul.f32 %v628, %v637
        %v646 = vmul.f32 %v629, %v637
        %v647 = vmul.f32 %v630, %v637
        %v648 = vmul.f32 %v631, %v637
        %v649 = vmul.f32 %v632, %v637
        %v650 = vmul.f32 %v633, %v637
        %v651 = vmul.f32 %v634, %v637
        %v652 = vmul.f32 %v635, %v637
        %v653 = vmul.f32 %v636, %v637
        %v654 = vfloor.f32 %v638
        %v655 = vfloor.f32 %v639
        %v656 = vfloor.f32 %v640
        %v657 = vfloor.f32 %v641
        %v658 = vfloor.f32 %v642
        %v659 = vfloor.f32 %v643
        %v660 = vfloor.f32 %v644
        %v661 = vfloor.f32 %v645
        %v662 = vfloor.f32 %v646
        %v663 = vfloor.f32 %v647
        %v664 = vfloor.f32 %v648
        %v665 = vfloor.f32 %v649
        %v666 = vfloor.f32 %v650
        %v667 = vfloor.f32 %v651
        %v668 = vfloor.f32 %v652
        %v669 = vfloor.f32 %v653
        %v670 = vmul.f32 %v654, 16.0
        %v671 = vmul.f32 %v655, 16.0
        %v672 = vmul.f32 %v656, 16.0
        %v673 = vmul.f32 %v657, 16.0
        %v674 = vmul.f32 %v658, 16.0
        %v675 = vmul.f32 %v659, 16.0
        %v676 = vmul.f32 %v660, 16.0
        %v677 = vmul.f32 %v661, 16.0
        %v678 = vmul.f32 %v662, 16.0
        %v679 = vmul.f32 %v663, 16.0
        %v680 = vmul.f32 %v664, 16.0
        %v681 = vmul.f32 %v665, 16.0
        %v682 = vmul.f32 %v666, 16.0
        %v683 = vmul.f32 %v667, 16.0
        %v684 = vmul.f32 %v668, 16.0
        %v685 = vmul.f32 %v669, 16.0
        %v686 = vsub.f32 %v605, %v670
        %v687 = vsub.f32 %v606, %v671
        %v688 = vsub.f32 %v607, %v672
        %v689 = vsub.f32 %v608, %v673
        %v690 = vsub.f32 %v609, %v674
        %v691 = vsub.f32 %v610, %v675
        %v692 = vsub.f32 %v611, %v676
        %v693 = vsub.f32 %v612, %v677
        %v694 = vsub.f32 %v613, %v678
        %v695 = vsub.f32 %v614, %v679
        %v696 = vsub.f32 %v615, %v680
        %v697 = vsub.f32 %v616, %v681
        %v698 = vsub.f32 %v617, %v682
        %v699 = vsub.f32 %v618, %v683
        %v700 = vsub.f32 %v619, %v684
        %v701 = vsub.f32 %v620, %v685
        %vm702 = vcmask 7168
        %v703 = vsel %vm702, %v686, %v654
        %v704 = vsel %vm702, %v687, %v655
        %v705 = vsel %vm702, %v688, %v656
        %v706 = vsel %vm702, %v689, %v657
        %v707 = vsel %vm702, %v690, %v658
        %v708 = vsel %vm702, %v691, %v659
        %v709 = vsel %vm702, %v692, %v660
        %v710 = vsel %vm702, %v693, %v661
        %v711 = vsel %vm702, %v694, %v662
        %v712 = vsel %vm702, %v695, %v663
        %v713 = vsel %vm702, %v696, %v664
        %v714 = vsel %vm702, %v697, %v665
        %v715 = vsel %vm702, %v698, %v666
        %v716 = vsel %vm702, %v699, %v667
        %v717 = vsel %vm702, %v700, %v668
        %v718 = vsel %vm702, %v701, %v669
        %v719 = vlaneseq
        %v720 = vand.u32 %v719, 127
        %vm721 = vcmp.ge.s32.totalorder %v720, 3
        %vm722 = vcmp.lt.s32.totalorder %v720, 24
        %vm723 = vmand %vm721, %vm722
        %vm724 = vcmp.ge.s32.totalorder %v720, 25
        %vm725 = vcmp.lt.s32.totalorder %v720, 46
        %vm726 = vmand %vm724, %vm725
        %vm727 = vcmask 449536
        %728 = vst.msk [vmem:[%s246] sm:$0xff] %vm727, %v395
        %729 = vst.msk [vmem:[%s246 + $0x8] sm:$0xff] %vm727, %v399
        %730 = vst.msk [vmem:[%s246 + $0x10] sm:$0xff] %vm727, %v405
        %731 = vst.msk [vmem:[%s246 + $0x18] sm:$0xff] %vm727, %v409
        %732 = vst.msk [vmem:[%s246 + $0x20] sm:$0xff] %vm727, %v415
        %733 = vst.msk [vmem:[%s246 + $0x28] sm:$0xff] %vm727, %v419
        %734 = vst.msk [vmem:[%s246 + $0x30] sm:$0xff] %vm727, %v425
        %735 = vst.msk [vmem:[%s246 + $0x38] sm:$0xff] %vm727, %v429
        %736 = vst.msk [vmem:[%s246 + $0x40] sm:$0xff] %vm727, %v435
        %737 = vst.msk [vmem:[%s246 + $0x48] sm:$0xff] %vm727, %v439
        %738 = vst.msk [vmem:[%s246 + $0x50] sm:$0xff] %vm727, %v445
        %739 = vst.msk [vmem:[%s246 + $0x58] sm:$0xff] %vm727, %v449
        %740 = vst.msk [vmem:[%s246 + $0x60] sm:$0xff] %vm727, %v455
        %741 = vst.msk [vmem:[%s246 + $0x68] sm:$0xff] %vm727, %v459
        %742 = vst.msk [vmem:[%s246 + $0x70] sm:$0xff] %vm727, %v465
        %743 = vst.msk [vmem:[%s246 + $0x78] sm:$0xff] %vm727, %v469
        %v744 = vxor.u32 %v395, 2147483648
        %v745 = vxor.u32 %v399, 2147483648
        %v746 = vxor.u32 %v405, 2147483648
        %v747 = vxor.u32 %v409, 2147483648
        %v748 = vxor.u32 %v415, 2147483648
        %v749 = vxor.u32 %v419, 2147483648
        %v750 = vxor.u32 %v425, 2147483648
        %v751 = vxor.u32 %v429, 2147483648
        %v752 = vxor.u32 %v435, 2147483648
        %v753 = vxor.u32 %v439, 2147483648
        %v754 = vxor.u32 %v445, 2147483648
        %v755 = vxor.u32 %v449, 2147483648
        %v756 = vxor.u32 %v455, 2147483648
        %v757 = vxor.u32 %v459, 2147483648
        %v758 = vxor.u32 %v465, 2147483648
        %v759 = vxor.u32 %v469, 2147483648
        %v760 = vmul.f32 %v744, 1.442695
        %v761 = vpow.pop %v760
        %v762 = vmul.f32 %v745, 1.442695
        %v763 = vpow.pop %v762
        %v764 = vmul.f32 %v746, 1.442695
        %v765 = vpow.pop %v764
        %v766 = vmul.f32 %v747, 1.442695
        %v767 = vpow.pop %v766
        %v768 = vmul.f32 %v748, 1.442695
        %v769 = vpow.pop %v768
        %v770 = vmul.f32 %v749, 1.442695
        %v771 = vpow.pop %v770
        %v772 = vmul.f32 %v750, 1.442695
        %v773 = vpow.pop %v772
        %v774 = vmul.f32 %v751, 1.442695
        %v775 = vpow.pop %v774
        %v776 = vmul.f32 %v752, 1.442695
        %v777 = vpow.pop %v776
        %v778 = vmul.f32 %v753, 1.442695
        %v779 = vpow.pop %v778
        %v780 = vmul.f32 %v754, 1.442695
        %v781 = vpow.pop %v780
        %v782 = vmul.f32 %v755, 1.442695
        %v783 = vpow.pop %v782
        %v784 = vmul.f32 %v756, 1.442695
        %v785 = vpow.pop %v784
        %v786 = vmul.f32 %v757, 1.442695
        %v787 = vpow.pop %v786
        %v788 = vmul.f32 %v758, 1.442695
        %v789 = vpow.pop %v788
        %v790 = vmul.f32 %v759, 1.442695
        %v791 = vpow.pop %v790
        %v792 = vadd.f32 %v761, 1.0
        %v793 = vadd.f32 %v763, 1.0
        %v794 = vadd.f32 %v765, 1.0
        %v795 = vadd.f32 %v767, 1.0
        %v796 = vadd.f32 %v769, 1.0
        %v797 = vadd.f32 %v771, 1.0
        %v798 = vadd.f32 %v773, 1.0
        %v799 = vadd.f32 %v775, 1.0
        %v800 = vadd.f32 %v777, 1.0
        %v801 = vadd.f32 %v779, 1.0
        %v802 = vadd.f32 %v781, 1.0
        %v803 = vadd.f32 %v783, 1.0
        %v804 = vadd.f32 %v785, 1.0
        %v805 = vadd.f32 %v787, 1.0
        %v806 = vadd.f32 %v789, 1.0
        %v807 = vadd.f32 %v791, 1.0
        %v808 = vrcp.pop %v792
        %v809 = vmul.f32 1.0, %v808
        %v810 = vrcp.pop %v793
        %v811 = vmul.f32 1.0, %v810
        %v812 = vrcp.pop %v794
        %v813 = vmul.f32 1.0, %v812
        %v814 = vrcp.pop %v795
        %v815 = vmul.f32 1.0, %v814
        %v816 = vrcp.pop %v796
        %v817 = vmul.f32 1.0, %v816
        %v818 = vrcp.pop %v797
        %v819 = vmul.f32 1.0, %v818
        %v820 = vrcp.pop %v798
        %v821 = vmul.f32 1.0, %v820
        %v822 = vrcp.pop %v799
        %v823 = vmul.f32 1.0, %v822
        %v824 = vrcp.pop %v800
        %v825 = vmul.f32 1.0, %v824
        %v826 = vrcp.pop %v801
        %v827 = vmul.f32 1.0, %v826
        %v828 = vrcp.pop %v802
        %v829 = vmul.f32 1.0, %v828
        %v830 = vrcp.pop %v803
        %v831 = vmul.f32 1.0, %v830
        %v832 = vrcp.pop %v804
        %v833 = vmul.f32 1.0, %v832
        %v834 = vrcp.pop %v805
        %v835 = vmul.f32 1.0, %v834
        %v836 = vrcp.pop %v806
        %v837 = vmul.f32 1.0, %v836
        %v838 = vrcp.pop %v807
        %v839 = vmul.f32 1.0, %v838
        %v840 = vsel %vm723, %v395, -1e+30
        %v841 = vsel %vm723, %v399, -1e+30
        %v842 = vsel %vm723, %v405, -1e+30
        %v843 = vsel %vm723, %v409, -1e+30
        %v844 = vsel %vm723, %v415, -1e+30
        %v845 = vsel %vm723, %v419, -1e+30
        %v846 = vsel %vm723, %v425, -1e+30
        %v847 = vsel %vm723, %v429, -1e+30
        %v848 = vsel %vm723, %v435, -1e+30
        %v849 = vsel %vm723, %v439, -1e+30
        %v850 = vsel %vm723, %v445, -1e+30
        %v851 = vsel %vm723, %v449, -1e+30
        %v852 = vsel %vm723, %v455, -1e+30
        %v853 = vsel %vm723, %v459, -1e+30
        %v854 = vsel %vm723, %v465, -1e+30
        %v855 = vsel %vm723, %v469, -1e+30
        %856 = vmax.xlane.f32.xlu0 %v840
        %v857 = vpop.xlane.xlu0 %856
        %858 = vmax.xlane.f32.xlu0 %v841
        %v859 = vpop.xlane.xlu0 %858
        %860 = vmax.xlane.f32.xlu0 %v842
        %v861 = vpop.xlane.xlu0 %860
        %862 = vmax.xlane.f32.xlu0 %v843
        %v863 = vpop.xlane.xlu0 %862
        %864 = vmax.xlane.f32.xlu0 %v844
        %v865 = vpop.xlane.xlu0 %864
        %866 = vmax.xlane.f32.xlu0 %v845
        %v867 = vpop.xlane.xlu0 %866
        %868 = vmax.xlane.f32.xlu0 %v846
        %v869 = vpop.xlane.xlu0 %868
        %870 = vmax.xlane.f32.xlu0 %v847
        %v871 = vpop.xlane.xlu0 %870
        %872 = vmax.xlane.f32.xlu0 %v848
        %v873 = vpop.xlane.xlu0 %872
        %874 = vmax.xlane.f32.xlu0 %v849
        %v875 = vpop.xlane.xlu0 %874
        %876 = vmax.xlane.f32.xlu0 %v850
        %v877 = vpop.xlane.xlu0 %876
        %878 = vmax.xlane.f32.xlu0 %v851
        %v879 = vpop.xlane.xlu0 %878
        %880 = vmax.xlane.f32.xlu0 %v852
        %v881 = vpop.xlane.xlu0 %880
        %882 = vmax.xlane.f32.xlu0 %v853
        %v883 = vpop.xlane.xlu0 %882
        %884 = vmax.xlane.f32.xlu0 %v854
        %v885 = vpop.xlane.xlu0 %884
        %886 = vmax.xlane.f32.xlu0 %v855
        %v887 = vpop.xlane.xlu0 %886
        %vm888 = vcmp.eq.f32.partialorder %v840, %v857
        %vm889 = vcmp.eq.f32.partialorder %v841, %v859
        %vm890 = vcmp.eq.f32.partialorder %v842, %v861
        %vm891 = vcmp.eq.f32.partialorder %v843, %v863
        %vm892 = vcmp.eq.f32.partialorder %v844, %v865
        %vm893 = vcmp.eq.f32.partialorder %v845, %v867
        %vm894 = vcmp.eq.f32.partialorder %v846, %v869
        %vm895 = vcmp.eq.f32.partialorder %v847, %v871
        %vm896 = vcmp.eq.f32.partialorder %v848, %v873
        %vm897 = vcmp.eq.f32.partialorder %v849, %v875
        %vm898 = vcmp.eq.f32.partialorder %v850, %v877
        %vm899 = vcmp.eq.f32.partialorder %v851, %v879
        %vm900 = vcmp.eq.f32.partialorder %v852, %v881
        %vm901 = vcmp.eq.f32.partialorder %v853, %v883
        %vm902 = vcmp.eq.f32.partialorder %v854, %v885
        %vm903 = vcmp.eq.f32.partialorder %v855, %v887
        %v904 = vsub.s32 %v720, 3
        %v905 = vsel %vm888, %v904, 21
        %v906 = vsel %vm889, %v904, 21
        %v907 = vsel %vm890, %v904, 21
        %v908 = vsel %vm891, %v904, 21
        %v909 = vsel %vm892, %v904, 21
        %v910 = vsel %vm893, %v904, 21
        %v911 = vsel %vm894, %v904, 21
        %v912 = vsel %vm895, %v904, 21
        %v913 = vsel %vm896, %v904, 21
        %v914 = vsel %vm897, %v904, 21
        %v915 = vsel %vm898, %v904, 21
        %v916 = vsel %vm899, %v904, 21
        %v917 = vsel %vm900, %v904, 21
        %v918 = vsel %vm901, %v904, 21
        %v919 = vsel %vm902, %v904, 21
        %v920 = vsel %vm903, %v904, 21
        %v921 = vand.u32 %v905, 65535
        %v922 = vshra.s32 %v905, 16
        %v923 = vcvt.s32.f32 %v921
        %v924 = vcvt.s32.f32 %v922
        %925 = vmin.xlane.f32.xlu0 %v924
        %v926 = vpop.xlane.xlu0 %925
        %vm927 = vcmp.eq.f32.partialorder %v924, %v926
        %v928 = vsel %vm927, %v923, inf
        %929 = vmin.xlane.f32.xlu0 %v928
        %v930 = vpop.xlane.xlu0 %929
        %v931 = vcvt.f32.s32 %v930
        %v932 = vcvt.f32.s32 %v926
        %v933 = vshll.u32 %v932, 16
        %v934 = vadd.s32 %v933, %v931
        %v935 = vand.u32 %v906, 65535
        %v936 = vshra.s32 %v906, 16
        %v937 = vcvt.s32.f32 %v935
        %v938 = vcvt.s32.f32 %v936
        %939 = vmin.xlane.f32.xlu0 %v938
        %v940 = vpop.xlane.xlu0 %939
        %vm941 = vcmp.eq.f32.partialorder %v938, %v940
        %v942 = vsel %vm941, %v937, inf
        %943 = vmin.xlane.f32.xlu0 %v942
        %v944 = vpop.xlane.xlu0 %943
        %v945 = vcvt.f32.s32 %v944
        %v946 = vcvt.f32.s32 %v940
        %v947 = vshll.u32 %v946, 16
        %v948 = vadd.s32 %v947, %v945
        %v949 = vand.u32 %v907, 65535
        %v950 = vshra.s32 %v907, 16
        %v951 = vcvt.s32.f32 %v949
        %v952 = vcvt.s32.f32 %v950
        %953 = vmin.xlane.f32.xlu0 %v952
        %v954 = vpop.xlane.xlu0 %953
        %vm955 = vcmp.eq.f32.partialorder %v952, %v954
        %v956 = vsel %vm955, %v951, inf
        %957 = vmin.xlane.f32.xlu0 %v956
        %v958 = vpop.xlane.xlu0 %957
        %v959 = vcvt.f32.s32 %v958
        %v960 = vcvt.f32.s32 %v954
        %v961 = vshll.u32 %v960, 16
        %v962 = vadd.s32 %v961, %v959
        %v963 = vand.u32 %v908, 65535
        %v964 = vshra.s32 %v908, 16
        %v965 = vcvt.s32.f32 %v963
        %v966 = vcvt.s32.f32 %v964
        %967 = vmin.xlane.f32.xlu0 %v966
        %v968 = vpop.xlane.xlu0 %967
        %vm969 = vcmp.eq.f32.partialorder %v966, %v968
        %v970 = vsel %vm969, %v965, inf
        %971 = vmin.xlane.f32.xlu0 %v970
        %v972 = vpop.xlane.xlu0 %971
        %v973 = vcvt.f32.s32 %v972
        %v974 = vcvt.f32.s32 %v968
        %v975 = vshll.u32 %v974, 16
        %v976 = vadd.s32 %v975, %v973
        %v977 = vand.u32 %v909, 65535
        %v978 = vshra.s32 %v909, 16
        %v979 = vcvt.s32.f32 %v977
        %v980 = vcvt.s32.f32 %v978
        %981 = vmin.xlane.f32.xlu0 %v980
        %v982 = vpop.xlane.xlu0 %981
        %vm983 = vcmp.eq.f32.partialorder %v980, %v982
        %v984 = vsel %vm983, %v979, inf
        %985 = vmin.xlane.f32.xlu0 %v984
        %v986 = vpop.xlane.xlu0 %985
        %v987 = vcvt.f32.s32 %v986
        %v988 = vcvt.f32.s32 %v982
        %v989 = vshll.u32 %v988, 16
        %v990 = vadd.s32 %v989, %v987
        %v991 = vand.u32 %v910, 65535
        %v992 = vshra.s32 %v910, 16
        %v993 = vcvt.s32.f32 %v991
        %v994 = vcvt.s32.f32 %v992
        %995 = vmin.xlane.f32.xlu0 %v994
        %v996 = vpop.xlane.xlu0 %995
        %vm997 = vcmp.eq.f32.partialorder %v994, %v996
        %v998 = vsel %vm997, %v993, inf
        %999 = vmin.xlane.f32.xlu0 %v998
        %v1000 = vpop.xlane.xlu0 %999
        %v1001 = vcvt.f32.s32 %v1000
        %v1002 = vcvt.f32.s32 %v996
        %v1003 = vshll.u32 %v1002, 16
        %v1004 = vadd.s32 %v1003, %v1001
        %v1005 = vand.u32 %v911, 65535
        %v1006 = vshra.s32 %v911, 16
        %v1007 = vcvt.s32.f32 %v1005
        %v1008 = vcvt.s32.f32 %v1006
        %1009 = vmin.xlane.f32.xlu0 %v1008
        %v1010 = vpop.xlane.xlu0 %1009
        %vm1011 = vcmp.eq.f32.partialorder %v1008, %v1010
        %v1012 = vsel %vm1011, %v1007, inf
        %1013 = vmin.xlane.f32.xlu0 %v1012
        %v1014 = vpop.xlane.xlu0 %1013
        %v1015 = vcvt.f32.s32 %v1014
        %v1016 = vcvt.f32.s32 %v1010
        %v1017 = vshll.u32 %v1016, 16
        %v1018 = vadd.s32 %v1017, %v1015
        %v1019 = vand.u32 %v912, 65535
        %v1020 = vshra.s32 %v912, 16
        %v1021 = vcvt.s32.f32 %v1019
        %v1022 = vcvt.s32.f32 %v1020
        %1023 = vmin.xlane.f32.xlu0 %v1022
        %v1024 = vpop.xlane.xlu0 %1023
        %vm1025 = vcmp.eq.f32.partialorder %v1022, %v1024
        %v1026 = vsel %vm1025, %v1021, inf
        %1027 = vmin.xlane.f32.xlu0 %v1026
        %v1028 = vpop.xlane.xlu0 %1027
        %v1029 = vcvt.f32.s32 %v1028
        %v1030 = vcvt.f32.s32 %v1024
        %v1031 = vshll.u32 %v1030, 16
        %v1032 = vadd.s32 %v1031, %v1029
        %v1033 = vand.u32 %v913, 65535
        %v1034 = vshra.s32 %v913, 16
        %v1035 = vcvt.s32.f32 %v1033
        %v1036 = vcvt.s32.f32 %v1034
        %1037 = vmin.xlane.f32.xlu0 %v1036
        %v1038 = vpop.xlane.xlu0 %1037
        %vm1039 = vcmp.eq.f32.partialorder %v1036, %v1038
        %v1040 = vsel %vm1039, %v1035, inf
        %1041 = vmin.xlane.f32.xlu0 %v1040
        %v1042 = vpop.xlane.xlu0 %1041
        %v1043 = vcvt.f32.s32 %v1042
        %v1044 = vcvt.f32.s32 %v1038
        %v1045 = vshll.u32 %v1044, 16
        %v1046 = vadd.s32 %v1045, %v1043
        %v1047 = vand.u32 %v914, 65535
        %v1048 = vshra.s32 %v914, 16
        %v1049 = vcvt.s32.f32 %v1047
        %v1050 = vcvt.s32.f32 %v1048
        %1051 = vmin.xlane.f32.xlu0 %v1050
        %v1052 = vpop.xlane.xlu0 %1051
        %vm1053 = vcmp.eq.f32.partialorder %v1050, %v1052
        %v1054 = vsel %vm1053, %v1049, inf
        %1055 = vmin.xlane.f32.xlu0 %v1054
        %v1056 = vpop.xlane.xlu0 %1055
        %v1057 = vcvt.f32.s32 %v1056
        %v1058 = vcvt.f32.s32 %v1052
        %v1059 = vshll.u32 %v1058, 16
        %v1060 = vadd.s32 %v1059, %v1057
        %v1061 = vand.u32 %v915, 65535
        %v1062 = vshra.s32 %v915, 16
        %v1063 = vcvt.s32.f32 %v1061
        %v1064 = vcvt.s32.f32 %v1062
        %1065 = vmin.xlane.f32.xlu0 %v1064
        %v1066 = vpop.xlane.xlu0 %1065
        %vm1067 = vcmp.eq.f32.partialorder %v1064, %v1066
        %v1068 = vsel %vm1067, %v1063, inf
        %1069 = vmin.xlane.f32.xlu0 %v1068
        %v1070 = vpop.xlane.xlu0 %1069
        %v1071 = vcvt.f32.s32 %v1070
        %v1072 = vcvt.f32.s32 %v1066
        %v1073 = vshll.u32 %v1072, 16
        %v1074 = vadd.s32 %v1073, %v1071
        %v1075 = vand.u32 %v916, 65535
        %v1076 = vshra.s32 %v916, 16
        %v1077 = vcvt.s32.f32 %v1075
        %v1078 = vcvt.s32.f32 %v1076
        %1079 = vmin.xlane.f32.xlu0 %v1078
        %v1080 = vpop.xlane.xlu0 %1079
        %vm1081 = vcmp.eq.f32.partialorder %v1078, %v1080
        %v1082 = vsel %vm1081, %v1077, inf
        %1083 = vmin.xlane.f32.xlu0 %v1082
        %v1084 = vpop.xlane.xlu0 %1083
        %v1085 = vcvt.f32.s32 %v1084
        %v1086 = vcvt.f32.s32 %v1080
        %v1087 = vshll.u32 %v1086, 16
        %v1088 = vadd.s32 %v1087, %v1085
        %v1089 = vand.u32 %v917, 65535
        %v1090 = vshra.s32 %v917, 16
        %v1091 = vcvt.s32.f32 %v1089
        %v1092 = vcvt.s32.f32 %v1090
        %1093 = vmin.xlane.f32.xlu0 %v1092
        %v1094 = vpop.xlane.xlu0 %1093
        %vm1095 = vcmp.eq.f32.partialorder %v1092, %v1094
        %v1096 = vsel %vm1095, %v1091, inf
        %1097 = vmin.xlane.f32.xlu0 %v1096
        %v1098 = vpop.xlane.xlu0 %1097
        %v1099 = vcvt.f32.s32 %v1098
        %v1100 = vcvt.f32.s32 %v1094
        %v1101 = vshll.u32 %v1100, 16
        %v1102 = vadd.s32 %v1101, %v1099
        %v1103 = vand.u32 %v918, 65535
        %v1104 = vshra.s32 %v918, 16
        %v1105 = vcvt.s32.f32 %v1103
        %v1106 = vcvt.s32.f32 %v1104
        %1107 = vmin.xlane.f32.xlu0 %v1106
        %v1108 = vpop.xlane.xlu0 %1107
        %vm1109 = vcmp.eq.f32.partialorder %v1106, %v1108
        %v1110 = vsel %vm1109, %v1105, inf
        %1111 = vmin.xlane.f32.xlu0 %v1110
        %v1112 = vpop.xlane.xlu0 %1111
        %v1113 = vcvt.f32.s32 %v1112
        %v1114 = vcvt.f32.s32 %v1108
        %v1115 = vshll.u32 %v1114, 16
        %v1116 = vadd.s32 %v1115, %v1113
        %v1117 = vand.u32 %v919, 65535
        %v1118 = vshra.s32 %v919, 16
        %v1119 = vcvt.s32.f32 %v1117
        %v1120 = vcvt.s32.f32 %v1118
        %1121 = vmin.xlane.f32.xlu0 %v1120
        %v1122 = vpop.xlane.xlu0 %1121
        %vm1123 = vcmp.eq.f32.partialorder %v1120, %v1122
        %v1124 = vsel %vm1123, %v1119, inf
        %1125 = vmin.xlane.f32.xlu0 %v1124
        %v1126 = vpop.xlane.xlu0 %1125
        %v1127 = vcvt.f32.s32 %v1126
        %v1128 = vcvt.f32.s32 %v1122
        %v1129 = vshll.u32 %v1128, 16
        %v1130 = vadd.s32 %v1129, %v1127
        %v1131 = vand.u32 %v920, 65535
        %v1132 = vshra.s32 %v920, 16
        %v1133 = vcvt.s32.f32 %v1131
        %v1134 = vcvt.s32.f32 %v1132
        %1135 = vmin.xlane.f32.xlu0 %v1134
        %v1136 = vpop.xlane.xlu0 %1135
        %vm1137 = vcmp.eq.f32.partialorder %v1134, %v1136
        %v1138 = vsel %vm1137, %v1133, inf
        %1139 = vmin.xlane.f32.xlu0 %v1138
        %v1140 = vpop.xlane.xlu0 %1139
        %v1141 = vcvt.f32.s32 %v1140
        %v1142 = vcvt.f32.s32 %v1136
        %v1143 = vshll.u32 %v1142, 16
        %v1144 = vadd.s32 %v1143, %v1141
        %v1145 = vcvt.s32.f32 %v934
        %v1146 = vcvt.s32.f32 %v948
        %v1147 = vcvt.s32.f32 %v962
        %v1148 = vcvt.s32.f32 %v976
        %v1149 = vcvt.s32.f32 %v990
        %v1150 = vcvt.s32.f32 %v1004
        %v1151 = vcvt.s32.f32 %v1018
        %v1152 = vcvt.s32.f32 %v1032
        %v1153 = vcvt.s32.f32 %v1046
        %v1154 = vcvt.s32.f32 %v1060
        %v1155 = vcvt.s32.f32 %v1074
        %v1156 = vcvt.s32.f32 %v1088
        %v1157 = vcvt.s32.f32 %v1102
        %v1158 = vcvt.s32.f32 %v1116
        %v1159 = vcvt.s32.f32 %v1130
        %v1160 = vcvt.s32.f32 %v1144
        %v1161 = vmul.f32 %v1145, 0.1904762
        %v1162 = vmul.f32 %v1146, 0.1904762
        %v1163 = vmul.f32 %v1147, 0.1904762
        %v1164 = vmul.f32 %v1148, 0.1904762
        %v1165 = vmul.f32 %v1149, 0.1904762
        %v1166 = vmul.f32 %v1150, 0.1904762
        %v1167 = vmul.f32 %v1151, 0.1904762
        %v1168 = vmul.f32 %v1152, 0.1904762
        %v1169 = vmul.f32 %v1153, 0.1904762
        %v1170 = vmul.f32 %v1154, 0.1904762
        %v1171 = vmul.f32 %v1155, 0.1904762
        %v1172 = vmul.f32 %v1156, 0.1904762
        %v1173 = vmul.f32 %v1157, 0.1904762
        %v1174 = vmul.f32 %v1158, 0.1904762
        %v1175 = vmul.f32 %v1159, 0.1904762
        %v1176 = vmul.f32 %v1160, 0.1904762
        %v1177 = vadd.f32 %v1161, 0.0952381
        %v1178 = vadd.f32 %v1162, 0.0952381
        %v1179 = vadd.f32 %v1163, 0.0952381
        %v1180 = vadd.f32 %v1164, 0.0952381
        %v1181 = vadd.f32 %v1165, 0.0952381
        %v1182 = vadd.f32 %v1166, 0.0952381
        %v1183 = vadd.f32 %v1167, 0.0952381
        %v1184 = vadd.f32 %v1168, 0.0952381
        %v1185 = vadd.f32 %v1169, 0.0952381
        %v1186 = vadd.f32 %v1170, 0.0952381
        %v1187 = vadd.f32 %v1171, 0.0952381
        %v1188 = vadd.f32 %v1172, 0.0952381
        %v1189 = vadd.f32 %v1173, 0.0952381
        %v1190 = vadd.f32 %v1174, 0.0952381
        %v1191 = vadd.f32 %v1175, 0.0952381
        %v1192 = vadd.f32 %v1176, 0.0952381
        %v1193 = vsel %vm726, %v395, -1e+30
        %v1194 = vsel %vm726, %v399, -1e+30
        %v1195 = vsel %vm726, %v405, -1e+30
        %v1196 = vsel %vm726, %v409, -1e+30
        %v1197 = vsel %vm726, %v415, -1e+30
        %v1198 = vsel %vm726, %v419, -1e+30
        %v1199 = vsel %vm726, %v425, -1e+30
        %v1200 = vsel %vm726, %v429, -1e+30
        %v1201 = vsel %vm726, %v435, -1e+30
        %v1202 = vsel %vm726, %v439, -1e+30
        %v1203 = vsel %vm726, %v445, -1e+30
        %v1204 = vsel %vm726, %v449, -1e+30
        %v1205 = vsel %vm726, %v455, -1e+30
        %v1206 = vsel %vm726, %v459, -1e+30
        %v1207 = vsel %vm726, %v465, -1e+30
        %v1208 = vsel %vm726, %v469, -1e+30
        %1209 = vmax.xlane.f32.xlu0 %v1193
        %v1210 = vpop.xlane.xlu0 %1209
        %1211 = vmax.xlane.f32.xlu0 %v1194
        %v1212 = vpop.xlane.xlu0 %1211
        %1213 = vmax.xlane.f32.xlu0 %v1195
        %v1214 = vpop.xlane.xlu0 %1213
        %1215 = vmax.xlane.f32.xlu0 %v1196
        %v1216 = vpop.xlane.xlu0 %1215
        %1217 = vmax.xlane.f32.xlu0 %v1197
        %v1218 = vpop.xlane.xlu0 %1217
        %1219 = vmax.xlane.f32.xlu0 %v1198
        %v1220 = vpop.xlane.xlu0 %1219
        %1221 = vmax.xlane.f32.xlu0 %v1199
        %v1222 = vpop.xlane.xlu0 %1221
        %1223 = vmax.xlane.f32.xlu0 %v1200
        %v1224 = vpop.xlane.xlu0 %1223
        %1225 = vmax.xlane.f32.xlu0 %v1201
        %v1226 = vpop.xlane.xlu0 %1225
        %1227 = vmax.xlane.f32.xlu0 %v1202
        %v1228 = vpop.xlane.xlu0 %1227
        %1229 = vmax.xlane.f32.xlu0 %v1203
        %v1230 = vpop.xlane.xlu0 %1229
        %1231 = vmax.xlane.f32.xlu0 %v1204
        %v1232 = vpop.xlane.xlu0 %1231
        %1233 = vmax.xlane.f32.xlu0 %v1205
        %v1234 = vpop.xlane.xlu0 %1233
        %1235 = vmax.xlane.f32.xlu0 %v1206
        %v1236 = vpop.xlane.xlu0 %1235
        %1237 = vmax.xlane.f32.xlu0 %v1207
        %v1238 = vpop.xlane.xlu0 %1237
        %1239 = vmax.xlane.f32.xlu0 %v1208
        %v1240 = vpop.xlane.xlu0 %1239
        %vm1241 = vcmp.eq.f32.partialorder %v1193, %v1210
        %vm1242 = vcmp.eq.f32.partialorder %v1194, %v1212
        %vm1243 = vcmp.eq.f32.partialorder %v1195, %v1214
        %vm1244 = vcmp.eq.f32.partialorder %v1196, %v1216
        %vm1245 = vcmp.eq.f32.partialorder %v1197, %v1218
        %vm1246 = vcmp.eq.f32.partialorder %v1198, %v1220
        %vm1247 = vcmp.eq.f32.partialorder %v1199, %v1222
        %vm1248 = vcmp.eq.f32.partialorder %v1200, %v1224
        %vm1249 = vcmp.eq.f32.partialorder %v1201, %v1226
        %vm1250 = vcmp.eq.f32.partialorder %v1202, %v1228
        %vm1251 = vcmp.eq.f32.partialorder %v1203, %v1230
        %vm1252 = vcmp.eq.f32.partialorder %v1204, %v1232
        %vm1253 = vcmp.eq.f32.partialorder %v1205, %v1234
        %vm1254 = vcmp.eq.f32.partialorder %v1206, %v1236
        %vm1255 = vcmp.eq.f32.partialorder %v1207, %v1238
        %vm1256 = vcmp.eq.f32.partialorder %v1208, %v1240
        %v1257 = vsub.s32 %v720, 25
        %v1258 = vsel %vm1241, %v1257, 21
        %v1259 = vsel %vm1242, %v1257, 21
        %v1260 = vsel %vm1243, %v1257, 21
        %v1261 = vsel %vm1244, %v1257, 21
        %v1262 = vsel %vm1245, %v1257, 21
        %v1263 = vsel %vm1246, %v1257, 21
        %v1264 = vsel %vm1247, %v1257, 21
        %v1265 = vsel %vm1248, %v1257, 21
        %v1266 = vsel %vm1249, %v1257, 21
        %v1267 = vsel %vm1250, %v1257, 21
        %v1268 = vsel %vm1251, %v1257, 21
        %v1269 = vsel %vm1252, %v1257, 21
        %v1270 = vsel %vm1253, %v1257, 21
        %v1271 = vsel %vm1254, %v1257, 21
        %v1272 = vsel %vm1255, %v1257, 21
        %v1273 = vsel %vm1256, %v1257, 21
        %v1274 = vand.u32 %v1258, 65535
        %v1275 = vshra.s32 %v1258, 16
        %v1276 = vcvt.s32.f32 %v1274
        %v1277 = vcvt.s32.f32 %v1275
        %1278 = vmin.xlane.f32.xlu0 %v1277
        %v1279 = vpop.xlane.xlu0 %1278
        %vm1280 = vcmp.eq.f32.partialorder %v1277, %v1279
        %v1281 = vsel %vm1280, %v1276, inf
        %1282 = vmin.xlane.f32.xlu0 %v1281
        %v1283 = vpop.xlane.xlu0 %1282
        %v1284 = vcvt.f32.s32 %v1283
        %v1285 = vcvt.f32.s32 %v1279
        %v1286 = vshll.u32 %v1285, 16
        %v1287 = vadd.s32 %v1286, %v1284
        %v1288 = vand.u32 %v1259, 65535
        %v1289 = vshra.s32 %v1259, 16
        %v1290 = vcvt.s32.f32 %v1288
        %v1291 = vcvt.s32.f32 %v1289
        %1292 = vmin.xlane.f32.xlu0 %v1291
        %v1293 = vpop.xlane.xlu0 %1292
        %vm1294 = vcmp.eq.f32.partialorder %v1291, %v1293
        %v1295 = vsel %vm1294, %v1290, inf
        %1296 = vmin.xlane.f32.xlu0 %v1295
        %v1297 = vpop.xlane.xlu0 %1296
        %v1298 = vcvt.f32.s32 %v1297
        %v1299 = vcvt.f32.s32 %v1293
        %v1300 = vshll.u32 %v1299, 16
        %v1301 = vadd.s32 %v1300, %v1298
        %v1302 = vand.u32 %v1260, 65535
        %v1303 = vshra.s32 %v1260, 16
        %v1304 = vcvt.s32.f32 %v1302
        %v1305 = vcvt.s32.f32 %v1303
        %1306 = vmin.xlane.f32.xlu0 %v1305
        %v1307 = vpop.xlane.xlu0 %1306
        %vm1308 = vcmp.eq.f32.partialorder %v1305, %v1307
        %v1309 = vsel %vm1308, %v1304, inf
        %1310 = vmin.xlane.f32.xlu0 %v1309
        %v1311 = vpop.xlane.xlu0 %1310
        %v1312 = vcvt.f32.s32 %v1311
        %v1313 = vcvt.f32.s32 %v1307
        %v1314 = vshll.u32 %v1313, 16
        %v1315 = vadd.s32 %v1314, %v1312
        %v1316 = vand.u32 %v1261, 65535
        %v1317 = vshra.s32 %v1261, 16
        %v1318 = vcvt.s32.f32 %v1316
        %v1319 = vcvt.s32.f32 %v1317
        %1320 = vmin.xlane.f32.xlu0 %v1319
        %v1321 = vpop.xlane.xlu0 %1320
        %vm1322 = vcmp.eq.f32.partialorder %v1319, %v1321
        %v1323 = vsel %vm1322, %v1318, inf
        %1324 = vmin.xlane.f32.xlu0 %v1323
        %v1325 = vpop.xlane.xlu0 %1324
        %v1326 = vcvt.f32.s32 %v1325
        %v1327 = vcvt.f32.s32 %v1321
        %v1328 = vshll.u32 %v1327, 16
        %v1329 = vadd.s32 %v1328, %v1326
        %v1330 = vand.u32 %v1262, 65535
        %v1331 = vshra.s32 %v1262, 16
        %v1332 = vcvt.s32.f32 %v1330
        %v1333 = vcvt.s32.f32 %v1331
        %1334 = vmin.xlane.f32.xlu0 %v1333
        %v1335 = vpop.xlane.xlu0 %1334
        %vm1336 = vcmp.eq.f32.partialorder %v1333, %v1335
        %v1337 = vsel %vm1336, %v1332, inf
        %1338 = vmin.xlane.f32.xlu0 %v1337
        %v1339 = vpop.xlane.xlu0 %1338
        %v1340 = vcvt.f32.s32 %v1339
        %v1341 = vcvt.f32.s32 %v1335
        %v1342 = vshll.u32 %v1341, 16
        %v1343 = vadd.s32 %v1342, %v1340
        %v1344 = vand.u32 %v1263, 65535
        %v1345 = vshra.s32 %v1263, 16
        %v1346 = vcvt.s32.f32 %v1344
        %v1347 = vcvt.s32.f32 %v1345
        %1348 = vmin.xlane.f32.xlu0 %v1347
        %v1349 = vpop.xlane.xlu0 %1348
        %vm1350 = vcmp.eq.f32.partialorder %v1347, %v1349
        %v1351 = vsel %vm1350, %v1346, inf
        %1352 = vmin.xlane.f32.xlu0 %v1351
        %v1353 = vpop.xlane.xlu0 %1352
        %v1354 = vcvt.f32.s32 %v1353
        %v1355 = vcvt.f32.s32 %v1349
        %v1356 = vshll.u32 %v1355, 16
        %v1357 = vadd.s32 %v1356, %v1354
        %v1358 = vand.u32 %v1264, 65535
        %v1359 = vshra.s32 %v1264, 16
        %v1360 = vcvt.s32.f32 %v1358
        %v1361 = vcvt.s32.f32 %v1359
        %1362 = vmin.xlane.f32.xlu0 %v1361
        %v1363 = vpop.xlane.xlu0 %1362
        %vm1364 = vcmp.eq.f32.partialorder %v1361, %v1363
        %v1365 = vsel %vm1364, %v1360, inf
        %1366 = vmin.xlane.f32.xlu0 %v1365
        %v1367 = vpop.xlane.xlu0 %1366
        %v1368 = vcvt.f32.s32 %v1367
        %v1369 = vcvt.f32.s32 %v1363
        %v1370 = vshll.u32 %v1369, 16
        %v1371 = vadd.s32 %v1370, %v1368
        %v1372 = vand.u32 %v1265, 65535
        %v1373 = vshra.s32 %v1265, 16
        %v1374 = vcvt.s32.f32 %v1372
        %v1375 = vcvt.s32.f32 %v1373
        %1376 = vmin.xlane.f32.xlu0 %v1375
        %v1377 = vpop.xlane.xlu0 %1376
        %vm1378 = vcmp.eq.f32.partialorder %v1375, %v1377
        %v1379 = vsel %vm1378, %v1374, inf
        %1380 = vmin.xlane.f32.xlu0 %v1379
        %v1381 = vpop.xlane.xlu0 %1380
        %v1382 = vcvt.f32.s32 %v1381
        %v1383 = vcvt.f32.s32 %v1377
        %v1384 = vshll.u32 %v1383, 16
        %v1385 = vadd.s32 %v1384, %v1382
        %v1386 = vand.u32 %v1266, 65535
        %v1387 = vshra.s32 %v1266, 16
        %v1388 = vcvt.s32.f32 %v1386
        %v1389 = vcvt.s32.f32 %v1387
        %1390 = vmin.xlane.f32.xlu0 %v1389
        %v1391 = vpop.xlane.xlu0 %1390
        %vm1392 = vcmp.eq.f32.partialorder %v1389, %v1391
        %v1393 = vsel %vm1392, %v1388, inf
        %1394 = vmin.xlane.f32.xlu0 %v1393
        %v1395 = vpop.xlane.xlu0 %1394
        %v1396 = vcvt.f32.s32 %v1395
        %v1397 = vcvt.f32.s32 %v1391
        %v1398 = vshll.u32 %v1397, 16
        %v1399 = vadd.s32 %v1398, %v1396
        %v1400 = vand.u32 %v1267, 65535
        %v1401 = vshra.s32 %v1267, 16
        %v1402 = vcvt.s32.f32 %v1400
        %v1403 = vcvt.s32.f32 %v1401
        %1404 = vmin.xlane.f32.xlu0 %v1403
        %v1405 = vpop.xlane.xlu0 %1404
        %vm1406 = vcmp.eq.f32.partialorder %v1403, %v1405
        %v1407 = vsel %vm1406, %v1402, inf
        %1408 = vmin.xlane.f32.xlu0 %v1407
        %v1409 = vpop.xlane.xlu0 %1408
        %v1410 = vcvt.f32.s32 %v1409
        %v1411 = vcvt.f32.s32 %v1405
        %v1412 = vshll.u32 %v1411, 16
        %v1413 = vadd.s32 %v1412, %v1410
        %v1414 = vand.u32 %v1268, 65535
        %v1415 = vshra.s32 %v1268, 16
        %v1416 = vcvt.s32.f32 %v1414
        %v1417 = vcvt.s32.f32 %v1415
        %1418 = vmin.xlane.f32.xlu0 %v1417
        %v1419 = vpop.xlane.xlu0 %1418
        %vm1420 = vcmp.eq.f32.partialorder %v1417, %v1419
        %v1421 = vsel %vm1420, %v1416, inf
        %1422 = vmin.xlane.f32.xlu0 %v1421
        %v1423 = vpop.xlane.xlu0 %1422
        %v1424 = vcvt.f32.s32 %v1423
        %v1425 = vcvt.f32.s32 %v1419
        %v1426 = vshll.u32 %v1425, 16
        %v1427 = vadd.s32 %v1426, %v1424
        %v1428 = vand.u32 %v1269, 65535
        %v1429 = vshra.s32 %v1269, 16
        %v1430 = vcvt.s32.f32 %v1428
        %v1431 = vcvt.s32.f32 %v1429
        %1432 = vmin.xlane.f32.xlu0 %v1431
        %v1433 = vpop.xlane.xlu0 %1432
        %vm1434 = vcmp.eq.f32.partialorder %v1431, %v1433
        %v1435 = vsel %vm1434, %v1430, inf
        %1436 = vmin.xlane.f32.xlu0 %v1435
        %v1437 = vpop.xlane.xlu0 %1436
        %v1438 = vcvt.f32.s32 %v1437
        %v1439 = vcvt.f32.s32 %v1433
        %v1440 = vshll.u32 %v1439, 16
        %v1441 = vadd.s32 %v1440, %v1438
        %v1442 = vand.u32 %v1270, 65535
        %v1443 = vshra.s32 %v1270, 16
        %v1444 = vcvt.s32.f32 %v1442
        %v1445 = vcvt.s32.f32 %v1443
        %1446 = vmin.xlane.f32.xlu0 %v1445
        %v1447 = vpop.xlane.xlu0 %1446
        %vm1448 = vcmp.eq.f32.partialorder %v1445, %v1447
        %v1449 = vsel %vm1448, %v1444, inf
        %1450 = vmin.xlane.f32.xlu0 %v1449
        %v1451 = vpop.xlane.xlu0 %1450
        %v1452 = vcvt.f32.s32 %v1451
        %v1453 = vcvt.f32.s32 %v1447
        %v1454 = vshll.u32 %v1453, 16
        %v1455 = vadd.s32 %v1454, %v1452
        %v1456 = vand.u32 %v1271, 65535
        %v1457 = vshra.s32 %v1271, 16
        %v1458 = vcvt.s32.f32 %v1456
        %v1459 = vcvt.s32.f32 %v1457
        %1460 = vmin.xlane.f32.xlu0 %v1459
        %v1461 = vpop.xlane.xlu0 %1460
        %vm1462 = vcmp.eq.f32.partialorder %v1459, %v1461
        %v1463 = vsel %vm1462, %v1458, inf
        %1464 = vmin.xlane.f32.xlu0 %v1463
        %v1465 = vpop.xlane.xlu0 %1464
        %v1466 = vcvt.f32.s32 %v1465
        %v1467 = vcvt.f32.s32 %v1461
        %v1468 = vshll.u32 %v1467, 16
        %v1469 = vadd.s32 %v1468, %v1466
        %v1470 = vand.u32 %v1272, 65535
        %v1471 = vshra.s32 %v1272, 16
        %v1472 = vcvt.s32.f32 %v1470
        %v1473 = vcvt.s32.f32 %v1471
        %1474 = vmin.xlane.f32.xlu0 %v1473
        %v1475 = vpop.xlane.xlu0 %1474
        %vm1476 = vcmp.eq.f32.partialorder %v1473, %v1475
        %v1477 = vsel %vm1476, %v1472, inf
        %1478 = vmin.xlane.f32.xlu0 %v1477
        %v1479 = vpop.xlane.xlu0 %1478
        %v1480 = vcvt.f32.s32 %v1479
        %v1481 = vcvt.f32.s32 %v1475
        %v1482 = vshll.u32 %v1481, 16
        %v1483 = vadd.s32 %v1482, %v1480
        %v1484 = vand.u32 %v1273, 65535
        %v1485 = vshra.s32 %v1273, 16
        %v1486 = vcvt.s32.f32 %v1484
        %v1487 = vcvt.s32.f32 %v1485
        %1488 = vmin.xlane.f32.xlu0 %v1487
        %v1489 = vpop.xlane.xlu0 %1488
        %vm1490 = vcmp.eq.f32.partialorder %v1487, %v1489
        %v1491 = vsel %vm1490, %v1486, inf
        %1492 = vmin.xlane.f32.xlu0 %v1491
        %v1493 = vpop.xlane.xlu0 %1492
        %v1494 = vcvt.f32.s32 %v1493
        %v1495 = vcvt.f32.s32 %v1489
        %v1496 = vshll.u32 %v1495, 16
        %v1497 = vadd.s32 %v1496, %v1494
        %v1498 = vcvt.s32.f32 %v1287
        %v1499 = vcvt.s32.f32 %v1301
        %v1500 = vcvt.s32.f32 %v1315
        %v1501 = vcvt.s32.f32 %v1329
        %v1502 = vcvt.s32.f32 %v1343
        %v1503 = vcvt.s32.f32 %v1357
        %v1504 = vcvt.s32.f32 %v1371
        %v1505 = vcvt.s32.f32 %v1385
        %v1506 = vcvt.s32.f32 %v1399
        %v1507 = vcvt.s32.f32 %v1413
        %v1508 = vcvt.s32.f32 %v1427
        %v1509 = vcvt.s32.f32 %v1441
        %v1510 = vcvt.s32.f32 %v1455
        %v1511 = vcvt.s32.f32 %v1469
        %v1512 = vcvt.s32.f32 %v1483
        %v1513 = vcvt.s32.f32 %v1497
        %v1514 = vmul.f32 %v1498, 0.1904762
        %v1515 = vmul.f32 %v1499, 0.1904762
        %v1516 = vmul.f32 %v1500, 0.1904762
        %v1517 = vmul.f32 %v1501, 0.1904762
        %v1518 = vmul.f32 %v1502, 0.1904762
        %v1519 = vmul.f32 %v1503, 0.1904762
        %v1520 = vmul.f32 %v1504, 0.1904762
        %v1521 = vmul.f32 %v1505, 0.1904762
        %v1522 = vmul.f32 %v1506, 0.1904762
        %v1523 = vmul.f32 %v1507, 0.1904762
        %v1524 = vmul.f32 %v1508, 0.1904762
        %v1525 = vmul.f32 %v1509, 0.1904762
        %v1526 = vmul.f32 %v1510, 0.1904762
        %v1527 = vmul.f32 %v1511, 0.1904762
        %v1528 = vmul.f32 %v1512, 0.1904762
        %v1529 = vmul.f32 %v1513, 0.1904762
        %v1530 = vadd.f32 %v1514, 0.0952381
        %v1531 = vadd.f32 %v1515, 0.0952381
        %v1532 = vadd.f32 %v1516, 0.0952381
        %v1533 = vadd.f32 %v1517, 0.0952381
        %v1534 = vadd.f32 %v1518, 0.0952381
        %v1535 = vadd.f32 %v1519, 0.0952381
        %v1536 = vadd.f32 %v1520, 0.0952381
        %v1537 = vadd.f32 %v1521, 0.0952381
        %v1538 = vadd.f32 %v1522, 0.0952381
        %v1539 = vadd.f32 %v1523, 0.0952381
        %v1540 = vadd.f32 %v1524, 0.0952381
        %v1541 = vadd.f32 %v1525, 0.0952381
        %v1542 = vadd.f32 %v1526, 0.0952381
        %v1543 = vadd.f32 %v1527, 0.0952381
        %v1544 = vadd.f32 %v1528, 0.0952381
        %v1545 = vadd.f32 %v1529, 0.0952381
        %v1546 = vmul.f32 %v809, 2.0
        %v1547 = vmul.f32 %v811, 2.0
        %v1548 = vmul.f32 %v813, 2.0
        %v1549 = vmul.f32 %v815, 2.0
        %v1550 = vmul.f32 %v817, 2.0
        %v1551 = vmul.f32 %v819, 2.0
        %v1552 = vmul.f32 %v821, 2.0
        %v1553 = vmul.f32 %v823, 2.0
        %v1554 = vmul.f32 %v825, 2.0
        %v1555 = vmul.f32 %v827, 2.0
        %v1556 = vmul.f32 %v829, 2.0
        %v1557 = vmul.f32 %v831, 2.0
        %v1558 = vmul.f32 %v833, 2.0
        %v1559 = vmul.f32 %v835, 2.0
        %v1560 = vmul.f32 %v837, 2.0
        %v1561 = vmul.f32 %v839, 2.0
        %v1562 = vsub.f32 %v1546, 1.0
        %v1563 = vsub.f32 %v1547, 1.0
        %v1564 = vsub.f32 %v1548, 1.0
        %v1565 = vsub.f32 %v1549, 1.0
        %v1566 = vsub.f32 %v1550, 1.0
        %v1567 = vsub.f32 %v1551, 1.0
        %v1568 = vsub.f32 %v1552, 1.0
        %v1569 = vsub.f32 %v1553, 1.0
        %v1570 = vsub.f32 %v1554, 1.0
        %v1571 = vsub.f32 %v1555, 1.0
        %v1572 = vsub.f32 %v1556, 1.0
        %v1573 = vsub.f32 %v1557, 1.0
        %v1574 = vsub.f32 %v1558, 1.0
        %v1575 = vsub.f32 %v1559, 1.0
        %v1576 = vsub.f32 %v1560, 1.0
        %v1577 = vsub.f32 %v1561, 1.0
        %v1578 = vmul.f32 %v1562, 0.1904762
        %v1579 = vmul.f32 %v1563, 0.1904762
        %v1580 = vmul.f32 %v1564, 0.1904762
        %v1581 = vmul.f32 %v1565, 0.1904762
        %v1582 = vmul.f32 %v1566, 0.1904762
        %v1583 = vmul.f32 %v1567, 0.1904762
        %v1584 = vmul.f32 %v1568, 0.1904762
        %v1585 = vmul.f32 %v1569, 0.1904762
        %v1586 = vmul.f32 %v1570, 0.1904762
        %v1587 = vmul.f32 %v1571, 0.1904762
        %v1588 = vmul.f32 %v1572, 0.1904762
        %v1589 = vmul.f32 %v1573, 0.1904762
        %v1590 = vmul.f32 %v1574, 0.1904762
        %v1591 = vmul.f32 %v1575, 0.1904762
        %v1592 = vmul.f32 %v1576, 0.1904762
        %v1593 = vmul.f32 %v1577, 0.1904762
        %v1594 = vadd.f32 %v1578, %v1177
        %v1595 = vadd.f32 %v1579, %v1178
        %v1596 = vadd.f32 %v1580, %v1179
        %v1597 = vadd.f32 %v1581, %v1180
        %v1598 = vadd.f32 %v1582, %v1181
        %v1599 = vadd.f32 %v1583, %v1182
        %v1600 = vadd.f32 %v1584, %v1183
        %v1601 = vadd.f32 %v1585, %v1184
        %v1602 = vadd.f32 %v1586, %v1185
        %v1603 = vadd.f32 %v1587, %v1186
        %v1604 = vadd.f32 %v1588, %v1187
        %v1605 = vadd.f32 %v1589, %v1188
        %v1606 = vadd.f32 %v1590, %v1189
        %v1607 = vadd.f32 %v1591, %v1190
        %v1608 = vadd.f32 %v1592, %v1191
        %v1609 = vadd.f32 %v1593, %v1192
        %v1610 = vmax.f32 %v1594, 0.0
        %v1611 = vmax.f32 %v1595, 0.0
        %v1612 = vmax.f32 %v1596, 0.0
        %v1613 = vmax.f32 %v1597, 0.0
        %v1614 = vmax.f32 %v1598, 0.0
        %v1615 = vmax.f32 %v1599, 0.0
        %v1616 = vmax.f32 %v1600, 0.0
        %v1617 = vmax.f32 %v1601, 0.0
        %v1618 = vmax.f32 %v1602, 0.0
        %v1619 = vmax.f32 %v1603, 0.0
        %v1620 = vmax.f32 %v1604, 0.0
        %v1621 = vmax.f32 %v1605, 0.0
        %v1622 = vmax.f32 %v1606, 0.0
        %v1623 = vmax.f32 %v1607, 0.0
        %v1624 = vmax.f32 %v1608, 0.0
        %v1625 = vmax.f32 %v1609, 0.0
        %v1626 = vmin.f32 %v1610, 4.0
        %v1627 = vmin.f32 %v1611, 4.0
        %v1628 = vmin.f32 %v1612, 4.0
        %v1629 = vmin.f32 %v1613, 4.0
        %v1630 = vmin.f32 %v1614, 4.0
        %v1631 = vmin.f32 %v1615, 4.0
        %v1632 = vmin.f32 %v1616, 4.0
        %v1633 = vmin.f32 %v1617, 4.0
        %v1634 = vmin.f32 %v1618, 4.0
        %v1635 = vmin.f32 %v1619, 4.0
        %v1636 = vmin.f32 %v1620, 4.0
        %v1637 = vmin.f32 %v1621, 4.0
        %v1638 = vmin.f32 %v1622, 4.0
        %v1639 = vmin.f32 %v1623, 4.0
        %v1640 = vmin.f32 %v1624, 4.0
        %v1641 = vmin.f32 %v1625, 4.0
        %v1642 = vmul.f32 %v1626, 10.0
        %v1643 = vmul.f32 %v1627, 10.0
        %v1644 = vmul.f32 %v1628, 10.0
        %v1645 = vmul.f32 %v1629, 10.0
        %v1646 = vmul.f32 %v1630, 10.0
        %v1647 = vmul.f32 %v1631, 10.0
        %v1648 = vmul.f32 %v1632, 10.0
        %v1649 = vmul.f32 %v1633, 10.0
        %v1650 = vmul.f32 %v1634, 10.0
        %v1651 = vmul.f32 %v1635, 10.0
        %v1652 = vmul.f32 %v1636, 10.0
        %v1653 = vmul.f32 %v1637, 10.0
        %v1654 = vmul.f32 %v1638, 10.0
        %v1655 = vmul.f32 %v1639, 10.0
        %v1656 = vmul.f32 %v1640, 10.0
        %v1657 = vmul.f32 %v1641, 10.0
        %v1658 = vadd.f32 %v1578, %v1530
        %v1659 = vadd.f32 %v1579, %v1531
        %v1660 = vadd.f32 %v1580, %v1532
        %v1661 = vadd.f32 %v1581, %v1533
        %v1662 = vadd.f32 %v1582, %v1534
        %v1663 = vadd.f32 %v1583, %v1535
        %v1664 = vadd.f32 %v1584, %v1536
        %v1665 = vadd.f32 %v1585, %v1537
        %v1666 = vadd.f32 %v1586, %v1538
        %v1667 = vadd.f32 %v1587, %v1539
        %v1668 = vadd.f32 %v1588, %v1540
        %v1669 = vadd.f32 %v1589, %v1541
        %v1670 = vadd.f32 %v1590, %v1542
        %v1671 = vadd.f32 %v1591, %v1543
        %v1672 = vadd.f32 %v1592, %v1544
        %v1673 = vadd.f32 %v1593, %v1545
        %v1674 = vmax.f32 %v1658, 0.0
        %v1675 = vmax.f32 %v1659, 0.0
        %v1676 = vmax.f32 %v1660, 0.0
        %v1677 = vmax.f32 %v1661, 0.0
        %v1678 = vmax.f32 %v1662, 0.0
        %v1679 = vmax.f32 %v1663, 0.0
        %v1680 = vmax.f32 %v1664, 0.0
        %v1681 = vmax.f32 %v1665, 0.0
        %v1682 = vmax.f32 %v1666, 0.0
        %v1683 = vmax.f32 %v1667, 0.0
        %v1684 = vmax.f32 %v1668, 0.0
        %v1685 = vmax.f32 %v1669, 0.0
        %v1686 = vmax.f32 %v1670, 0.0
        %v1687 = vmax.f32 %v1671, 0.0
        %v1688 = vmax.f32 %v1672, 0.0
        %v1689 = vmax.f32 %v1673, 0.0
        %v1690 = vmin.f32 %v1674, 4.0
        %v1691 = vmin.f32 %v1675, 4.0
        %v1692 = vmin.f32 %v1676, 4.0
        %v1693 = vmin.f32 %v1677, 4.0
        %v1694 = vmin.f32 %v1678, 4.0
        %v1695 = vmin.f32 %v1679, 4.0
        %v1696 = vmin.f32 %v1680, 4.0
        %v1697 = vmin.f32 %v1681, 4.0
        %v1698 = vmin.f32 %v1682, 4.0
        %v1699 = vmin.f32 %v1683, 4.0
        %v1700 = vmin.f32 %v1684, 4.0
        %v1701 = vmin.f32 %v1685, 4.0
        %v1702 = vmin.f32 %v1686, 4.0
        %v1703 = vmin.f32 %v1687, 4.0
        %v1704 = vmin.f32 %v1688, 4.0
        %v1705 = vmin.f32 %v1689, 4.0
        %v1706 = vmul.f32 %v1690, 13.0
        %v1707 = vmul.f32 %v1691, 13.0
        %v1708 = vmul.f32 %v1692, 13.0
        %v1709 = vmul.f32 %v1693, 13.0
        %v1710 = vmul.f32 %v1694, 13.0
        %v1711 = vmul.f32 %v1695, 13.0
        %v1712 = vmul.f32 %v1696, 13.0
        %v1713 = vmul.f32 %v1697, 13.0
        %v1714 = vmul.f32 %v1698, 13.0
        %v1715 = vmul.f32 %v1699, 13.0
        %v1716 = vmul.f32 %v1700, 13.0
        %v1717 = vmul.f32 %v1701, 13.0
        %v1718 = vmul.f32 %v1702, 13.0
        %v1719 = vmul.f32 %v1703, 13.0
        %v1720 = vmul.f32 %v1704, 13.0
        %v1721 = vmul.f32 %v1705, 13.0
        %v1722 = vsub.f32 %v1546, 0.5
        %v1723 = vsub.f32 %v1547, 0.5
        %v1724 = vsub.f32 %v1548, 0.5
        %v1725 = vsub.f32 %v1549, 0.5
        %v1726 = vsub.f32 %v1550, 0.5
        %v1727 = vsub.f32 %v1551, 0.5
        %v1728 = vsub.f32 %v1552, 0.5
        %v1729 = vsub.f32 %v1553, 0.5
        %v1730 = vsub.f32 %v1554, 0.5
        %v1731 = vsub.f32 %v1555, 0.5
        %v1732 = vsub.f32 %v1556, 0.5
        %v1733 = vsub.f32 %v1557, 0.5
        %v1734 = vsub.f32 %v1558, 0.5
        %v1735 = vsub.f32 %v1559, 0.5
        %v1736 = vsub.f32 %v1560, 0.5
        %v1737 = vsub.f32 %v1561, 0.5
        %v1738 = vadd.f32 %v1722, %v703
        %v1739 = vadd.f32 %v1723, %v704
        %v1740 = vadd.f32 %v1724, %v705
        %v1741 = vadd.f32 %v1725, %v706
        %v1742 = vadd.f32 %v1726, %v707
        %v1743 = vadd.f32 %v1727, %v708
        %v1744 = vadd.f32 %v1728, %v709
        %v1745 = vadd.f32 %v1729, %v710
        %v1746 = vadd.f32 %v1730, %v711
        %v1747 = vadd.f32 %v1731, %v712
        %v1748 = vadd.f32 %v1732, %v713
        %v1749 = vadd.f32 %v1733, %v714
        %v1750 = vadd.f32 %v1734, %v715
        %v1751 = vadd.f32 %v1735, %v716
        %v1752 = vadd.f32 %v1736, %v717
        %v1753 = vadd.f32 %v1737, %v718
        %v1754 = vmul.f32 %v1738, 8.0
        %v1755 = vmul.f32 %v1739, 8.0
        %v1756 = vmul.f32 %v1740, 8.0
        %v1757 = vmul.f32 %v1741, 8.0
        %v1758 = vmul.f32 %v1742, 8.0
        %v1759 = vmul.f32 %v1743, 8.0
        %v1760 = vmul.f32 %v1744, 8.0
        %v1761 = vmul.f32 %v1745, 8.0
        %v1762 = vmul.f32 %v1746, 8.0
        %v1763 = vmul.f32 %v1747, 8.0
        %v1764 = vmul.f32 %v1748, 8.0
        %v1765 = vmul.f32 %v1749, 8.0
        %v1766 = vmul.f32 %v1750, 8.0
        %v1767 = vmul.f32 %v1751, 8.0
        %v1768 = vmul.f32 %v1752, 8.0
        %v1769 = vmul.f32 %v1753, 8.0
        %1786 = vrot.lane.b32.xlu0 %v1706, 107
        %v1787 = vpop.permute.xlu0 %1786
        %1788 = vrot.lane.b32.xlu0 %v1707, 107
        %v1789 = vpop.permute.xlu0 %1788
        %1790 = vrot.lane.b32.xlu0 %v1708, 107
        %v1791 = vpop.permute.xlu0 %1790
        %1792 = vrot.lane.b32.xlu0 %v1709, 107
        %v1793 = vpop.permute.xlu0 %1792
        %1794 = vrot.lane.b32.xlu0 %v1710, 107
        %v1795 = vpop.permute.xlu0 %1794
        %1796 = vrot.lane.b32.xlu0 %v1711, 107
        %v1797 = vpop.permute.xlu0 %1796
        %1798 = vrot.lane.b32.xlu0 %v1712, 107
        %v1799 = vpop.permute.xlu0 %1798
        %1800 = vrot.lane.b32.xlu0 %v1713, 107
        %v1801 = vpop.permute.xlu0 %1800
        %1802 = vrot.lane.b32.xlu0 %v1714, 107
        %v1803 = vpop.permute.xlu0 %1802
        %1804 = vrot.lane.b32.xlu0 %v1715, 107
        %v1805 = vpop.permute.xlu0 %1804
        %1806 = vrot.lane.b32.xlu0 %v1716, 107
        %v1807 = vpop.permute.xlu0 %1806
        %1808 = vrot.lane.b32.xlu0 %v1717, 107
        %v1809 = vpop.permute.xlu0 %1808
        %1810 = vrot.lane.b32.xlu0 %v1718, 107
        %v1811 = vpop.permute.xlu0 %1810
        %1812 = vrot.lane.b32.xlu0 %v1719, 107
        %v1813 = vpop.permute.xlu0 %1812
        %1814 = vrot.lane.b32.xlu0 %v1720, 107
        %v1815 = vpop.permute.xlu0 %1814
        %1816 = vrot.lane.b32.xlu0 %v1721, 107
        %v1817 = vpop.permute.xlu0 %1816
        %1850 = vrot.lane.b32.xlu0 %v809, 86
        %v1851 = vpop.permute.xlu0 %1850
        %1852 = vrot.lane.b32.xlu0 %v811, 86
        %v1853 = vpop.permute.xlu0 %1852
        %1854 = vrot.lane.b32.xlu0 %v813, 86
        %v1855 = vpop.permute.xlu0 %1854
        %1856 = vrot.lane.b32.xlu0 %v815, 86
        %v1857 = vpop.permute.xlu0 %1856
        %1858 = vrot.lane.b32.xlu0 %v817, 86
        %v1859 = vpop.permute.xlu0 %1858
        %1860 = vrot.lane.b32.xlu0 %v819, 86
        %v1861 = vpop.permute.xlu0 %1860
        %1862 = vrot.lane.b32.xlu0 %v821, 86
        %v1863 = vpop.permute.xlu0 %1862
        %1864 = vrot.lane.b32.xlu0 %v823, 86
        %v1865 = vpop.permute.xlu0 %1864
        %1866 = vrot.lane.b32.xlu0 %v825, 86
        %v1867 = vpop.permute.xlu0 %1866
        %1868 = vrot.lane.b32.xlu0 %v827, 86
        %v1869 = vpop.permute.xlu0 %1868
        %1870 = vrot.lane.b32.xlu0 %v829, 86
        %v1871 = vpop.permute.xlu0 %1870
        %1872 = vrot.lane.b32.xlu0 %v831, 86
        %v1873 = vpop.permute.xlu0 %1872
        %1874 = vrot.lane.b32.xlu0 %v833, 86
        %v1875 = vpop.permute.xlu0 %1874
        %1876 = vrot.lane.b32.xlu0 %v835, 86
        %v1877 = vpop.permute.xlu0 %1876
        %1878 = vrot.lane.b32.xlu0 %v837, 86
        %v1879 = vpop.permute.xlu0 %1878
        %1880 = vrot.lane.b32.xlu0 %v839, 86
        %v1881 = vpop.permute.xlu0 %1880
        %vm1898 = vcmask 15360
        %v1899 = vsel %vm1898, %v1754, %v1642
        %v1900 = vsel %vm1898, %v1755, %v1643
        %v1901 = vsel %vm1898, %v1756, %v1644
        %v1902 = vsel %vm1898, %v1757, %v1645
        %v1903 = vsel %vm1898, %v1758, %v1646
        %v1904 = vsel %vm1898, %v1759, %v1647
        %v1905 = vsel %vm1898, %v1760, %v1648
        %v1906 = vsel %vm1898, %v1761, %v1649
        %v1907 = vsel %vm1898, %v1762, %v1650
        %v1908 = vsel %vm1898, %v1763, %v1651
        %v1909 = vsel %vm1898, %v1764, %v1652
        %v1910 = vsel %vm1898, %v1765, %v1653
        %v1911 = vsel %vm1898, %v1766, %v1654
        %v1912 = vsel %vm1898, %v1767, %v1655
        %v1913 = vsel %vm1898, %v1768, %v1656
        %v1914 = vsel %vm1898, %v1769, %v1657
        %vm1915 = vcmask 23552
        %v1916 = vsel %vm1915, %v1899, %v1787
        %v1917 = vsel %vm1915, %v1900, %v1789
        %v1918 = vsel %vm1915, %v1901, %v1791
        %v1919 = vsel %vm1915, %v1902, %v1793
        %v1920 = vsel %vm1915, %v1903, %v1795
        %v1921 = vsel %vm1915, %v1904, %v1797
        %v1922 = vsel %vm1915, %v1905, %v1799
        %v1923 = vsel %vm1915, %v1906, %v1801
        %v1924 = vsel %vm1915, %v1907, %v1803
        %v1925 = vsel %vm1915, %v1908, %v1805
        %v1926 = vsel %vm1915, %v1909, %v1807
        %v1927 = vsel %vm1915, %v1910, %v1809
        %v1928 = vsel %vm1915, %v1911, %v1811
        %v1929 = vsel %vm1915, %v1912, %v1813
        %v1930 = vsel %vm1915, %v1913, %v1815
        %v1931 = vsel %vm1915, %v1914, %v1817
        %vm1932 = vcmask 31744
        %v1933 = vsel %vm1932, %v1916, %v1851
        %v1934 = vsel %vm1932, %v1917, %v1853
        %v1935 = vsel %vm1932, %v1918, %v1855
        %v1936 = vsel %vm1932, %v1919, %v1857
        %v1937 = vsel %vm1932, %v1920, %v1859
        %v1938 = vsel %vm1932, %v1921, %v1861
        %v1939 = vsel %vm1932, %v1922, %v1863
        %v1940 = vsel %vm1932, %v1923, %v1865
        %v1941 = vsel %vm1932, %v1924, %v1867
        %v1942 = vsel %vm1932, %v1925, %v1869
        %v1943 = vsel %vm1932, %v1926, %v1871
        %v1944 = vsel %vm1932, %v1927, %v1873
        %v1945 = vsel %vm1932, %v1928, %v1875
        %v1946 = vsel %vm1932, %v1929, %v1877
        %v1947 = vsel %vm1932, %v1930, %v1879
        %v1948 = vsel %vm1932, %v1931, %v1881
        %vm1949 = vcmask 105472
        %1950 = vst.msk [vmem:[%s252] sm:$0xff] %vm1949, %v1933
        %1951 = vst.msk [vmem:[%s252 + $0x8] sm:$0xff] %vm1949, %v1934
        %1952 = vst.msk [vmem:[%s252 + $0x10] sm:$0xff] %vm1949, %v1935
        %1953 = vst.msk [vmem:[%s252 + $0x18] sm:$0xff] %vm1949, %v1936
        %1954 = vst.msk [vmem:[%s252 + $0x20] sm:$0xff] %vm1949, %v1937
        %1955 = vst.msk [vmem:[%s252 + $0x28] sm:$0xff] %vm1949, %v1938
        %1956 = vst.msk [vmem:[%s252 + $0x30] sm:$0xff] %vm1949, %v1939
        %1957 = vst.msk [vmem:[%s252 + $0x38] sm:$0xff] %vm1949, %v1940
        %1958 = vst.msk [vmem:[%s252 + $0x40] sm:$0xff] %vm1949, %v1941
        %1959 = vst.msk [vmem:[%s252 + $0x48] sm:$0xff] %vm1949, %v1942
        %1960 = vst.msk [vmem:[%s252 + $0x50] sm:$0xff] %vm1949, %v1943
        %1961 = vst.msk [vmem:[%s252 + $0x58] sm:$0xff] %vm1949, %v1944
        %1962 = vst.msk [vmem:[%s252 + $0x60] sm:$0xff] %vm1949, %v1945
        %1963 = vst.msk [vmem:[%s252 + $0x68] sm:$0xff] %vm1949, %v1946
        %1964 = vst.msk [vmem:[%s252 + $0x70] sm:$0xff] %vm1949, %v1947
        %1965 = vst.msk [vmem:[%s252 + $0x78] sm:$0xff] %vm1949, %v1948
        %s1966 = scalar_lea.vmem %s246, 128 [#allocation6]
        %1967 = vst.msk [vmem:[%s1966] sm:$0xff] %vm727, %v397
        %1968 = vst.msk [vmem:[%s1966 + $0x8] sm:$0xff] %vm727, %v401
        %1969 = vst.msk [vmem:[%s1966 + $0x10] sm:$0xff] %vm727, %v407
        %1970 = vst.msk [vmem:[%s1966 + $0x18] sm:$0xff] %vm727, %v411
        %1971 = vst.msk [vmem:[%s1966 + $0x20] sm:$0xff] %vm727, %v417
        %1972 = vst.msk [vmem:[%s1966 + $0x28] sm:$0xff] %vm727, %v421
        %1973 = vst.msk [vmem:[%s1966 + $0x30] sm:$0xff] %vm727, %v427
        %1974 = vst.msk [vmem:[%s1966 + $0x38] sm:$0xff] %vm727, %v431
        %1975 = vst.msk [vmem:[%s1966 + $0x40] sm:$0xff] %vm727, %v437
        %1976 = vst.msk [vmem:[%s1966 + $0x48] sm:$0xff] %vm727, %v441
        %1977 = vst.msk [vmem:[%s1966 + $0x50] sm:$0xff] %vm727, %v447
        %1978 = vst.msk [vmem:[%s1966 + $0x58] sm:$0xff] %vm727, %v451
        %1979 = vst.msk [vmem:[%s1966 + $0x60] sm:$0xff] %vm727, %v457
        %1980 = vst.msk [vmem:[%s1966 + $0x68] sm:$0xff] %vm727, %v461
        %1981 = vst.msk [vmem:[%s1966 + $0x70] sm:$0xff] %vm727, %v467
        %1982 = vst.msk [vmem:[%s1966 + $0x78] sm:$0xff] %vm727, %v471
        %v1983 = vxor.u32 %v397, 2147483648
        %v1984 = vxor.u32 %v401, 2147483648
        %v1985 = vxor.u32 %v407, 2147483648
        %v1986 = vxor.u32 %v411, 2147483648
        %v1987 = vxor.u32 %v417, 2147483648
        %v1988 = vxor.u32 %v421, 2147483648
        %v1989 = vxor.u32 %v427, 2147483648
        %v1990 = vxor.u32 %v431, 2147483648
        %v1991 = vxor.u32 %v437, 2147483648
        %v1992 = vxor.u32 %v441, 2147483648
        %v1993 = vxor.u32 %v447, 2147483648
        %v1994 = vxor.u32 %v451, 2147483648
        %v1995 = vxor.u32 %v457, 2147483648
        %v1996 = vxor.u32 %v461, 2147483648
        %v1997 = vxor.u32 %v467, 2147483648
        %v1998 = vxor.u32 %v471, 2147483648
        %v1999 = vmul.f32 %v1983, 1.442695
        %v2000 = vpow.pop %v1999
        %v2001 = vmul.f32 %v1984, 1.442695
        %v2002 = vpow.pop %v2001
        %v2003 = vmul.f32 %v1985, 1.442695
        %v2004 = vpow.pop %v2003
        %v2005 = vmul.f32 %v1986, 1.442695
        %v2006 = vpow.pop %v2005
        %v2007 = vmul.f32 %v1987, 1.442695
        %v2008 = vpow.pop %v2007
        %v2009 = vmul.f32 %v1988, 1.442695
        %v2010 = vpow.pop %v2009
        %v2011 = vmul.f32 %v1989, 1.442695
        %v2012 = vpow.pop %v2011
        %v2013 = vmul.f32 %v1990, 1.442695
        %v2014 = vpow.pop %v2013
        %v2015 = vmul.f32 %v1991, 1.442695
        %v2016 = vpow.pop %v2015
        %v2017 = vmul.f32 %v1992, 1.442695
        %v2018 = vpow.pop %v2017
        %v2019 = vmul.f32 %v1993, 1.442695
        %v2020 = vpow.pop %v2019
        %v2021 = vmul.f32 %v1994, 1.442695
        %v2022 = vpow.pop %v2021
        %v2023 = vmul.f32 %v1995, 1.442695
        %v2024 = vpow.pop %v2023
        %v2025 = vmul.f32 %v1996, 1.442695
        %v2026 = vpow.pop %v2025
        %v2027 = vmul.f32 %v1997, 1.442695
        %v2028 = vpow.pop %v2027
        %v2029 = vmul.f32 %v1998, 1.442695
        %v2030 = vpow.pop %v2029
        %v2031 = vadd.f32 %v2000, 1.0
        %v2032 = vadd.f32 %v2002, 1.0
        %v2033 = vadd.f32 %v2004, 1.0
        %v2034 = vadd.f32 %v2006, 1.0
        %v2035 = vadd.f32 %v2008, 1.0
        %v2036 = vadd.f32 %v2010, 1.0
        %v2037 = vadd.f32 %v2012, 1.0
        %v2038 = vadd.f32 %v2014, 1.0
        %v2039 = vadd.f32 %v2016, 1.0
        %v2040 = vadd.f32 %v2018, 1.0
        %v2041 = vadd.f32 %v2020, 1.0
        %v2042 = vadd.f32 %v2022, 1.0
        %v2043 = vadd.f32 %v2024, 1.0
        %v2044 = vadd.f32 %v2026, 1.0
        %v2045 = vadd.f32 %v2028, 1.0
        %v2046 = vadd.f32 %v2030, 1.0
        %v2047 = vrcp.pop %v2031
        %v2048 = vmul.f32 1.0, %v2047
        %v2049 = vrcp.pop %v2032
        %v2050 = vmul.f32 1.0, %v2049
        %v2051 = vrcp.pop %v2033
        %v2052 = vmul.f32 1.0, %v2051
        %v2053 = vrcp.pop %v2034
        %v2054 = vmul.f32 1.0, %v2053
        %v2055 = vrcp.pop %v2035
        %v2056 = vmul.f32 1.0, %v2055
        %v2057 = vrcp.pop %v2036
        %v2058 = vmul.f32 1.0, %v2057
        %v2059 = vrcp.pop %v2037
        %v2060 = vmul.f32 1.0, %v2059
        %v2061 = vrcp.pop %v2038
        %v2062 = vmul.f32 1.0, %v2061
        %v2063 = vrcp.pop %v2039
        %v2064 = vmul.f32 1.0, %v2063
        %v2065 = vrcp.pop %v2040
        %v2066 = vmul.f32 1.0, %v2065
        %v2067 = vrcp.pop %v2041
        %v2068 = vmul.f32 1.0, %v2067
        %v2069 = vrcp.pop %v2042
        %v2070 = vmul.f32 1.0, %v2069
        %v2071 = vrcp.pop %v2043
        %v2072 = vmul.f32 1.0, %v2071
        %v2073 = vrcp.pop %v2044
        %v2074 = vmul.f32 1.0, %v2073
        %v2075 = vrcp.pop %v2045
        %v2076 = vmul.f32 1.0, %v2075
        %v2077 = vrcp.pop %v2046
        %v2078 = vmul.f32 1.0, %v2077
        %v2079 = vsel %vm723, %v397, -1e+30
        %v2080 = vsel %vm723, %v401, -1e+30
        %v2081 = vsel %vm723, %v407, -1e+30
        %v2082 = vsel %vm723, %v411, -1e+30
        %v2083 = vsel %vm723, %v417, -1e+30
        %v2084 = vsel %vm723, %v421, -1e+30
        %v2085 = vsel %vm723, %v427, -1e+30
        %v2086 = vsel %vm723, %v431, -1e+30
        %v2087 = vsel %vm723, %v437, -1e+30
        %v2088 = vsel %vm723, %v441, -1e+30
        %v2089 = vsel %vm723, %v447, -1e+30
        %v2090 = vsel %vm723, %v451, -1e+30
        %v2091 = vsel %vm723, %v457, -1e+30
        %v2092 = vsel %vm723, %v461, -1e+30
        %v2093 = vsel %vm723, %v467, -1e+30
        %v2094 = vsel %vm723, %v471, -1e+30
        %2095 = vmax.xlane.f32.xlu0 %v2079
        %v2096 = vpop.xlane.xlu0 %2095
        %2097 = vmax.xlane.f32.xlu0 %v2080
        %v2098 = vpop.xlane.xlu0 %2097
        %2099 = vmax.xlane.f32.xlu0 %v2081
        %v2100 = vpop.xlane.xlu0 %2099
        %2101 = vmax.xlane.f32.xlu0 %v2082
        %v2102 = vpop.xlane.xlu0 %2101
        %2103 = vmax.xlane.f32.xlu0 %v2083
        %v2104 = vpop.xlane.xlu0 %2103
        %2105 = vmax.xlane.f32.xlu0 %v2084
        %v2106 = vpop.xlane.xlu0 %2105
        %2107 = vmax.xlane.f32.xlu0 %v2085
        %v2108 = vpop.xlane.xlu0 %2107
        %2109 = vmax.xlane.f32.xlu0 %v2086
        %v2110 = vpop.xlane.xlu0 %2109
        %2111 = vmax.xlane.f32.xlu0 %v2087
        %v2112 = vpop.xlane.xlu0 %2111
        %2113 = vmax.xlane.f32.xlu0 %v2088
        %v2114 = vpop.xlane.xlu0 %2113
        %2115 = vmax.xlane.f32.xlu0 %v2089
        %v2116 = vpop.xlane.xlu0 %2115
        %2117 = vmax.xlane.f32.xlu0 %v2090
        %v2118 = vpop.xlane.xlu0 %2117
        %2119 = vmax.xlane.f32.xlu0 %v2091
        %v2120 = vpop.xlane.xlu0 %2119
        %2121 = vmax.xlane.f32.xlu0 %v2092
        %v2122 = vpop.xlane.xlu0 %2121
        %2123 = vmax.xlane.f32.xlu0 %v2093
        %v2124 = vpop.xlane.xlu0 %2123
        %2125 = vmax.xlane.f32.xlu0 %v2094
        %v2126 = vpop.xlane.xlu0 %2125
        %vm2127 = vcmp.eq.f32.partialorder %v2079, %v2096
        %vm2128 = vcmp.eq.f32.partialorder %v2080, %v2098
        %vm2129 = vcmp.eq.f32.partialorder %v2081, %v2100
        %vm2130 = vcmp.eq.f32.partialorder %v2082, %v2102
        %vm2131 = vcmp.eq.f32.partialorder %v2083, %v2104
        %vm2132 = vcmp.eq.f32.partialorder %v2084, %v2106
        %vm2133 = vcmp.eq.f32.partialorder %v2085, %v2108
        %vm2134 = vcmp.eq.f32.partialorder %v2086, %v2110
        %vm2135 = vcmp.eq.f32.partialorder %v2087, %v2112
        %vm2136 = vcmp.eq.f32.partialorder %v2088, %v2114
        %vm2137 = vcmp.eq.f32.partialorder %v2089, %v2116
        %vm2138 = vcmp.eq.f32.partialorder %v2090, %v2118
        %vm2139 = vcmp.eq.f32.partialorder %v2091, %v2120
        %vm2140 = vcmp.eq.f32.partialorder %v2092, %v2122
        %vm2141 = vcmp.eq.f32.partialorder %v2093, %v2124
        %vm2142 = vcmp.eq.f32.partialorder %v2094, %v2126
        %v2143 = vsel %vm2127, %v904, 21
        %v2144 = vsel %vm2128, %v904, 21
        %v2145 = vsel %vm2129, %v904, 21
        %v2146 = vsel %vm2130, %v904, 21
        %v2147 = vsel %vm2131, %v904, 21
        %v2148 = vsel %vm2132, %v904, 21
        %v2149 = vsel %vm2133, %v904, 21
        %v2150 = vsel %vm2134, %v904, 21
        %v2151 = vsel %vm2135, %v904, 21
        %v2152 = vsel %vm2136, %v904, 21
        %v2153 = vsel %vm2137, %v904, 21
        %v2154 = vsel %vm2138, %v904, 21
        %v2155 = vsel %vm2139, %v904, 21
        %v2156 = vsel %vm2140, %v904, 21
        %v2157 = vsel %vm2141, %v904, 21
        %v2158 = vsel %vm2142, %v904, 21
        %v2159 = vand.u32 %v2143, 65535
        %v2160 = vshra.s32 %v2143, 16
        %v2161 = vcvt.s32.f32 %v2159
        %v2162 = vcvt.s32.f32 %v2160
        %2163 = vmin.xlane.f32.xlu0 %v2162
        %v2164 = vpop.xlane.xlu0 %2163
        %vm2165 = vcmp.eq.f32.partialorder %v2162, %v2164
        %v2166 = vsel %vm2165, %v2161, inf
        %2167 = vmin.xlane.f32.xlu0 %v2166
        %v2168 = vpop.xlane.xlu0 %2167
        %v2169 = vcvt.f32.s32 %v2168
        %v2170 = vcvt.f32.s32 %v2164
        %v2171 = vshll.u32 %v2170, 16
        %v2172 = vadd.s32 %v2171, %v2169
        %v2173 = vand.u32 %v2144, 65535
        %v2174 = vshra.s32 %v2144, 16
        %v2175 = vcvt.s32.f32 %v2173
        %v2176 = vcvt.s32.f32 %v2174
        %2177 = vmin.xlane.f32.xlu0 %v2176
        %v2178 = vpop.xlane.xlu0 %2177
        %vm2179 = vcmp.eq.f32.partialorder %v2176, %v2178
        %v2180 = vsel %vm2179, %v2175, inf
        %2181 = vmin.xlane.f32.xlu0 %v2180
        %v2182 = vpop.xlane.xlu0 %2181
        %v2183 = vcvt.f32.s32 %v2182
        %v2184 = vcvt.f32.s32 %v2178
        %v2185 = vshll.u32 %v2184, 16
        %v2186 = vadd.s32 %v2185, %v2183
        %v2187 = vand.u32 %v2145, 65535
        %v2188 = vshra.s32 %v2145, 16
        %v2189 = vcvt.s32.f32 %v2187
        %v2190 = vcvt.s32.f32 %v2188
        %2191 = vmin.xlane.f32.xlu0 %v2190
        %v2192 = vpop.xlane.xlu0 %2191
        %vm2193 = vcmp.eq.f32.partialorder %v2190, %v2192
        %v2194 = vsel %vm2193, %v2189, inf
        %2195 = vmin.xlane.f32.xlu0 %v2194
        %v2196 = vpop.xlane.xlu0 %2195
        %v2197 = vcvt.f32.s32 %v2196
        %v2198 = vcvt.f32.s32 %v2192
        %v2199 = vshll.u32 %v2198, 16
        %v2200 = vadd.s32 %v2199, %v2197
        %v2201 = vand.u32 %v2146, 65535
        %v2202 = vshra.s32 %v2146, 16
        %v2203 = vcvt.s32.f32 %v2201
        %v2204 = vcvt.s32.f32 %v2202
        %2205 = vmin.xlane.f32.xlu0 %v2204
        %v2206 = vpop.xlane.xlu0 %2205
        %vm2207 = vcmp.eq.f32.partialorder %v2204, %v2206
        %v2208 = vsel %vm2207, %v2203, inf
        %2209 = vmin.xlane.f32.xlu0 %v2208
        %v2210 = vpop.xlane.xlu0 %2209
        %v2211 = vcvt.f32.s32 %v2210
        %v2212 = vcvt.f32.s32 %v2206
        %v2213 = vshll.u32 %v2212, 16
        %v2214 = vadd.s32 %v2213, %v2211
        %v2215 = vand.u32 %v2147, 65535
        %v2216 = vshra.s32 %v2147, 16
        %v2217 = vcvt.s32.f32 %v2215
        %v2218 = vcvt.s32.f32 %v2216
        %2219 = vmin.xlane.f32.xlu0 %v2218
        %v2220 = vpop.xlane.xlu0 %2219
        %vm2221 = vcmp.eq.f32.partialorder %v2218, %v2220
        %v2222 = vsel %vm2221, %v2217, inf
        %2223 = vmin.xlane.f32.xlu0 %v2222
        %v2224 = vpop.xlane.xlu0 %2223
        %v2225 = vcvt.f32.s32 %v2224
        %v2226 = vcvt.f32.s32 %v2220
        %v2227 = vshll.u32 %v2226, 16
        %v2228 = vadd.s32 %v2227, %v2225
        %v2229 = vand.u32 %v2148, 65535
        %v2230 = vshra.s32 %v2148, 16
        %v2231 = vcvt.s32.f32 %v2229
        %v2232 = vcvt.s32.f32 %v2230
        %2233 = vmin.xlane.f32.xlu0 %v2232
        %v2234 = vpop.xlane.xlu0 %2233
        %vm2235 = vcmp.eq.f32.partialorder %v2232, %v2234
        %v2236 = vsel %vm2235, %v2231, inf
        %2237 = vmin.xlane.f32.xlu0 %v2236
        %v2238 = vpop.xlane.xlu0 %2237
        %v2239 = vcvt.f32.s32 %v2238
        %v2240 = vcvt.f32.s32 %v2234
        %v2241 = vshll.u32 %v2240, 16
        %v2242 = vadd.s32 %v2241, %v2239
        %v2243 = vand.u32 %v2149, 65535
        %v2244 = vshra.s32 %v2149, 16
        %v2245 = vcvt.s32.f32 %v2243
        %v2246 = vcvt.s32.f32 %v2244
        %2247 = vmin.xlane.f32.xlu0 %v2246
        %v2248 = vpop.xlane.xlu0 %2247
        %vm2249 = vcmp.eq.f32.partialorder %v2246, %v2248
        %v2250 = vsel %vm2249, %v2245, inf
        %2251 = vmin.xlane.f32.xlu0 %v2250
        %v2252 = vpop.xlane.xlu0 %2251
        %v2253 = vcvt.f32.s32 %v2252
        %v2254 = vcvt.f32.s32 %v2248
        %v2255 = vshll.u32 %v2254, 16
        %v2256 = vadd.s32 %v2255, %v2253
        %v2257 = vand.u32 %v2150, 65535
        %v2258 = vshra.s32 %v2150, 16
        %v2259 = vcvt.s32.f32 %v2257
        %v2260 = vcvt.s32.f32 %v2258
        %2261 = vmin.xlane.f32.xlu0 %v2260
        %v2262 = vpop.xlane.xlu0 %2261
        %vm2263 = vcmp.eq.f32.partialorder %v2260, %v2262
        %v2264 = vsel %vm2263, %v2259, inf
        %2265 = vmin.xlane.f32.xlu0 %v2264
        %v2266 = vpop.xlane.xlu0 %2265
        %v2267 = vcvt.f32.s32 %v2266
        %v2268 = vcvt.f32.s32 %v2262
        %v2269 = vshll.u32 %v2268, 16
        %v2270 = vadd.s32 %v2269, %v2267
        %v2271 = vand.u32 %v2151, 65535
        %v2272 = vshra.s32 %v2151, 16
        %v2273 = vcvt.s32.f32 %v2271
        %v2274 = vcvt.s32.f32 %v2272
        %2275 = vmin.xlane.f32.xlu0 %v2274
        %v2276 = vpop.xlane.xlu0 %2275
        %vm2277 = vcmp.eq.f32.partialorder %v2274, %v2276
        %v2278 = vsel %vm2277, %v2273, inf
        %2279 = vmin.xlane.f32.xlu0 %v2278
        %v2280 = vpop.xlane.xlu0 %2279
        %v2281 = vcvt.f32.s32 %v2280
        %v2282 = vcvt.f32.s32 %v2276
        %v2283 = vshll.u32 %v2282, 16
        %v2284 = vadd.s32 %v2283, %v2281
        %v2285 = vand.u32 %v2152, 65535
        %v2286 = vshra.s32 %v2152, 16
        %v2287 = vcvt.s32.f32 %v2285
        %v2288 = vcvt.s32.f32 %v2286
        %2289 = vmin.xlane.f32.xlu0 %v2288
        %v2290 = vpop.xlane.xlu0 %2289
        %vm2291 = vcmp.eq.f32.partialorder %v2288, %v2290
        %v2292 = vsel %vm2291, %v2287, inf
        %2293 = vmin.xlane.f32.xlu0 %v2292
        %v2294 = vpop.xlane.xlu0 %2293
        %v2295 = vcvt.f32.s32 %v2294
        %v2296 = vcvt.f32.s32 %v2290
        %v2297 = vshll.u32 %v2296, 16
        %v2298 = vadd.s32 %v2297, %v2295
        %v2299 = vand.u32 %v2153, 65535
        %v2300 = vshra.s32 %v2153, 16
        %v2301 = vcvt.s32.f32 %v2299
        %v2302 = vcvt.s32.f32 %v2300
        %2303 = vmin.xlane.f32.xlu0 %v2302
        %v2304 = vpop.xlane.xlu0 %2303
        %vm2305 = vcmp.eq.f32.partialorder %v2302, %v2304
        %v2306 = vsel %vm2305, %v2301, inf
        %2307 = vmin.xlane.f32.xlu0 %v2306
        %v2308 = vpop.xlane.xlu0 %2307
        %v2309 = vcvt.f32.s32 %v2308
        %v2310 = vcvt.f32.s32 %v2304
        %v2311 = vshll.u32 %v2310, 16
        %v2312 = vadd.s32 %v2311, %v2309
        %v2313 = vand.u32 %v2154, 65535
        %v2314 = vshra.s32 %v2154, 16
        %v2315 = vcvt.s32.f32 %v2313
        %v2316 = vcvt.s32.f32 %v2314
        %2317 = vmin.xlane.f32.xlu0 %v2316
        %v2318 = vpop.xlane.xlu0 %2317
        %vm2319 = vcmp.eq.f32.partialorder %v2316, %v2318
        %v2320 = vsel %vm2319, %v2315, inf
        %2321 = vmin.xlane.f32.xlu0 %v2320
        %v2322 = vpop.xlane.xlu0 %2321
        %v2323 = vcvt.f32.s32 %v2322
        %v2324 = vcvt.f32.s32 %v2318
        %v2325 = vshll.u32 %v2324, 16
        %v2326 = vadd.s32 %v2325, %v2323
        %v2327 = vand.u32 %v2155, 65535
        %v2328 = vshra.s32 %v2155, 16
        %v2329 = vcvt.s32.f32 %v2327
        %v2330 = vcvt.s32.f32 %v2328
        %2331 = vmin.xlane.f32.xlu0 %v2330
        %v2332 = vpop.xlane.xlu0 %2331
        %vm2333 = vcmp.eq.f32.partialorder %v2330, %v2332
        %v2334 = vsel %vm2333, %v2329, inf
        %2335 = vmin.xlane.f32.xlu0 %v2334
        %v2336 = vpop.xlane.xlu0 %2335
        %v2337 = vcvt.f32.s32 %v2336
        %v2338 = vcvt.f32.s32 %v2332
        %v2339 = vshll.u32 %v2338, 16
        %v2340 = vadd.s32 %v2339, %v2337
        %v2341 = vand.u32 %v2156, 65535
        %v2342 = vshra.s32 %v2156, 16
        %v2343 = vcvt.s32.f32 %v2341
        %v2344 = vcvt.s32.f32 %v2342
        %2345 = vmin.xlane.f32.xlu0 %v2344
        %v2346 = vpop.xlane.xlu0 %2345
        %vm2347 = vcmp.eq.f32.partialorder %v2344, %v2346
        %v2348 = vsel %vm2347, %v2343, inf
        %2349 = vmin.xlane.f32.xlu0 %v2348
        %v2350 = vpop.xlane.xlu0 %2349
        %v2351 = vcvt.f32.s32 %v2350
        %v2352 = vcvt.f32.s32 %v2346
        %v2353 = vshll.u32 %v2352, 16
        %v2354 = vadd.s32 %v2353, %v2351
        %v2355 = vand.u32 %v2157, 65535
        %v2356 = vshra.s32 %v2157, 16
        %v2357 = vcvt.s32.f32 %v2355
        %v2358 = vcvt.s32.f32 %v2356
        %2359 = vmin.xlane.f32.xlu0 %v2358
        %v2360 = vpop.xlane.xlu0 %2359
        %vm2361 = vcmp.eq.f32.partialorder %v2358, %v2360
        %v2362 = vsel %vm2361, %v2357, inf
        %2363 = vmin.xlane.f32.xlu0 %v2362
        %v2364 = vpop.xlane.xlu0 %2363
        %v2365 = vcvt.f32.s32 %v2364
        %v2366 = vcvt.f32.s32 %v2360
        %v2367 = vshll.u32 %v2366, 16
        %v2368 = vadd.s32 %v2367, %v2365
        %v2369 = vand.u32 %v2158, 65535
        %v2370 = vshra.s32 %v2158, 16
        %v2371 = vcvt.s32.f32 %v2369
        %v2372 = vcvt.s32.f32 %v2370
        %2373 = vmin.xlane.f32.xlu0 %v2372
        %v2374 = vpop.xlane.xlu0 %2373
        %vm2375 = vcmp.eq.f32.partialorder %v2372, %v2374
        %v2376 = vsel %vm2375, %v2371, inf
        %2377 = vmin.xlane.f32.xlu0 %v2376
        %v2378 = vpop.xlane.xlu0 %2377
        %v2379 = vcvt.f32.s32 %v2378
        %v2380 = vcvt.f32.s32 %v2374
        %v2381 = vshll.u32 %v2380, 16
        %v2382 = vadd.s32 %v2381, %v2379
        %v2383 = vcvt.s32.f32 %v2172
        %v2384 = vcvt.s32.f32 %v2186
        %v2385 = vcvt.s32.f32 %v2200
        %v2386 = vcvt.s32.f32 %v2214
        %v2387 = vcvt.s32.f32 %v2228
        %v2388 = vcvt.s32.f32 %v2242
        %v2389 = vcvt.s32.f32 %v2256
        %v2390 = vcvt.s32.f32 %v2270
        %v2391 = vcvt.s32.f32 %v2284
        %v2392 = vcvt.s32.f32 %v2298
        %v2393 = vcvt.s32.f32 %v2312
        %v2394 = vcvt.s32.f32 %v2326
        %v2395 = vcvt.s32.f32 %v2340
        %v2396 = vcvt.s32.f32 %v2354
        %v2397 = vcvt.s32.f32 %v2368
        %v2398 = vcvt.s32.f32 %v2382
        %v2399 = vmul.f32 %v2383, 0.1904762
        %v2400 = vmul.f32 %v2384, 0.1904762
        %v2401 = vmul.f32 %v2385, 0.1904762
        %v2402 = vmul.f32 %v2386, 0.1904762
        %v2403 = vmul.f32 %v2387, 0.1904762
        %v2404 = vmul.f32 %v2388, 0.1904762
        %v2405 = vmul.f32 %v2389, 0.1904762
        %v2406 = vmul.f32 %v2390, 0.1904762
        %v2407 = vmul.f32 %v2391, 0.1904762
        %v2408 = vmul.f32 %v2392, 0.1904762
        %v2409 = vmul.f32 %v2393, 0.1904762
        %v2410 = vmul.f32 %v2394, 0.1904762
        %v2411 = vmul.f32 %v2395, 0.1904762
        %v2412 = vmul.f32 %v2396, 0.1904762
        %v2413 = vmul.f32 %v2397, 0.1904762
        %v2414 = vmul.f32 %v2398, 0.1904762
        %v2415 = vadd.f32 %v2399, 0.0952381
        %v2416 = vadd.f32 %v2400, 0.0952381
        %v2417 = vadd.f32 %v2401, 0.0952381
        %v2418 = vadd.f32 %v2402, 0.0952381
        %v2419 = vadd.f32 %v2403, 0.0952381
        %v2420 = vadd.f32 %v2404, 0.0952381
        %v2421 = vadd.f32 %v2405, 0.0952381
        %v2422 = vadd.f32 %v2406, 0.0952381
        %v2423 = vadd.f32 %v2407, 0.0952381
        %v2424 = vadd.f32 %v2408, 0.0952381
        %v2425 = vadd.f32 %v2409, 0.0952381
        %v2426 = vadd.f32 %v2410, 0.0952381
        %v2427 = vadd.f32 %v2411, 0.0952381
        %v2428 = vadd.f32 %v2412, 0.0952381
        %v2429 = vadd.f32 %v2413, 0.0952381
        %v2430 = vadd.f32 %v2414, 0.0952381
        %v2431 = vsel %vm726, %v397, -1e+30
        %v2432 = vsel %vm726, %v401, -1e+30
        %v2433 = vsel %vm726, %v407, -1e+30
        %v2434 = vsel %vm726, %v411, -1e+30
        %v2435 = vsel %vm726, %v417, -1e+30
        %v2436 = vsel %vm726, %v421, -1e+30
        %v2437 = vsel %vm726, %v427, -1e+30
        %v2438 = vsel %vm726, %v431, -1e+30
        %v2439 = vsel %vm726, %v437, -1e+30
        %v2440 = vsel %vm726, %v441, -1e+30
        %v2441 = vsel %vm726, %v447, -1e+30
        %v2442 = vsel %vm726, %v451, -1e+30
        %v2443 = vsel %vm726, %v457, -1e+30
        %v2444 = vsel %vm726, %v461, -1e+30
        %v2445 = vsel %vm726, %v467, -1e+30
        %v2446 = vsel %vm726, %v471, -1e+30
        %2447 = vmax.xlane.f32.xlu0 %v2431
        %v2448 = vpop.xlane.xlu0 %2447
        %2449 = vmax.xlane.f32.xlu0 %v2432
        %v2450 = vpop.xlane.xlu0 %2449
        %2451 = vmax.xlane.f32.xlu0 %v2433
        %v2452 = vpop.xlane.xlu0 %2451
        %2453 = vmax.xlane.f32.xlu0 %v2434
        %v2454 = vpop.xlane.xlu0 %2453
        %2455 = vmax.xlane.f32.xlu0 %v2435
        %v2456 = vpop.xlane.xlu0 %2455
        %2457 = vmax.xlane.f32.xlu0 %v2436
        %v2458 = vpop.xlane.xlu0 %2457
        %2459 = vmax.xlane.f32.xlu0 %v2437
        %v2460 = vpop.xlane.xlu0 %2459
        %2461 = vmax.xlane.f32.xlu0 %v2438
        %v2462 = vpop.xlane.xlu0 %2461
        %2463 = vmax.xlane.f32.xlu0 %v2439
        %v2464 = vpop.xlane.xlu0 %2463
        %2465 = vmax.xlane.f32.xlu0 %v2440
        %v2466 = vpop.xlane.xlu0 %2465
        %2467 = vmax.xlane.f32.xlu0 %v2441
        %v2468 = vpop.xlane.xlu0 %2467
        %2469 = vmax.xlane.f32.xlu0 %v2442
        %v2470 = vpop.xlane.xlu0 %2469
        %2471 = vmax.xlane.f32.xlu0 %v2443
        %v2472 = vpop.xlane.xlu0 %2471
        %2473 = vmax.xlane.f32.xlu0 %v2444
        %v2474 = vpop.xlane.xlu0 %2473
        %2475 = vmax.xlane.f32.xlu0 %v2445
        %v2476 = vpop.xlane.xlu0 %2475
        %2477 = vmax.xlane.f32.xlu0 %v2446
        %v2478 = vpop.xlane.xlu0 %2477
        %vm2479 = vcmp.eq.f32.partialorder %v2431, %v2448
        %vm2480 = vcmp.eq.f32.partialorder %v2432, %v2450
        %vm2481 = vcmp.eq.f32.partialorder %v2433, %v2452
        %vm2482 = vcmp.eq.f32.partialorder %v2434, %v2454
        %vm2483 = vcmp.eq.f32.partialorder %v2435, %v2456
        %vm2484 = vcmp.eq.f32.partialorder %v2436, %v2458
        %vm2485 = vcmp.eq.f32.partialorder %v2437, %v2460
        %vm2486 = vcmp.eq.f32.partialorder %v2438, %v2462
        %vm2487 = vcmp.eq.f32.partialorder %v2439, %v2464
        %vm2488 = vcmp.eq.f32.partialorder %v2440, %v2466
        %vm2489 = vcmp.eq.f32.partialorder %v2441, %v2468
        %vm2490 = vcmp.eq.f32.partialorder %v2442, %v2470
        %vm2491 = vcmp.eq.f32.partialorder %v2443, %v2472
        %vm2492 = vcmp.eq.f32.partialorder %v2444, %v2474
        %vm2493 = vcmp.eq.f32.partialorder %v2445, %v2476
        %vm2494 = vcmp.eq.f32.partialorder %v2446, %v2478
        %v2495 = vsel %vm2479, %v1257, 21
        %v2496 = vsel %vm2480, %v1257, 21
        %v2497 = vsel %vm2481, %v1257, 21
        %v2498 = vsel %vm2482, %v1257, 21
        %v2499 = vsel %vm2483, %v1257, 21
        %v2500 = vsel %vm2484, %v1257, 21
        %v2501 = vsel %vm2485, %v1257, 21
        %v2502 = vsel %vm2486, %v1257, 21
        %v2503 = vsel %vm2487, %v1257, 21
        %v2504 = vsel %vm2488, %v1257, 21
        %v2505 = vsel %vm2489, %v1257, 21
        %v2506 = vsel %vm2490, %v1257, 21
        %v2507 = vsel %vm2491, %v1257, 21
        %v2508 = vsel %vm2492, %v1257, 21
        %v2509 = vsel %vm2493, %v1257, 21
        %v2510 = vsel %vm2494, %v1257, 21
        %v2511 = vand.u32 %v2495, 65535
        %v2512 = vshra.s32 %v2495, 16
        %v2513 = vcvt.s32.f32 %v2511
        %v2514 = vcvt.s32.f32 %v2512
        %2515 = vmin.xlane.f32.xlu0 %v2514
        %v2516 = vpop.xlane.xlu0 %2515
        %vm2517 = vcmp.eq.f32.partialorder %v2514, %v2516
        %v2518 = vsel %vm2517, %v2513, inf
        %2519 = vmin.xlane.f32.xlu0 %v2518
        %v2520 = vpop.xlane.xlu0 %2519
        %v2521 = vcvt.f32.s32 %v2520
        %v2522 = vcvt.f32.s32 %v2516
        %v2523 = vshll.u32 %v2522, 16
        %v2524 = vadd.s32 %v2523, %v2521
        %v2525 = vand.u32 %v2496, 65535
        %v2526 = vshra.s32 %v2496, 16
        %v2527 = vcvt.s32.f32 %v2525
        %v2528 = vcvt.s32.f32 %v2526
        %2529 = vmin.xlane.f32.xlu0 %v2528
        %v2530 = vpop.xlane.xlu0 %2529
        %vm2531 = vcmp.eq.f32.partialorder %v2528, %v2530
        %v2532 = vsel %vm2531, %v2527, inf
        %2533 = vmin.xlane.f32.xlu0 %v2532
        %v2534 = vpop.xlane.xlu0 %2533
        %v2535 = vcvt.f32.s32 %v2534
        %v2536 = vcvt.f32.s32 %v2530
        %v2537 = vshll.u32 %v2536, 16
        %v2538 = vadd.s32 %v2537, %v2535
        %v2539 = vand.u32 %v2497, 65535
        %v2540 = vshra.s32 %v2497, 16
        %v2541 = vcvt.s32.f32 %v2539
        %v2542 = vcvt.s32.f32 %v2540
        %2543 = vmin.xlane.f32.xlu0 %v2542
        %v2544 = vpop.xlane.xlu0 %2543
        %vm2545 = vcmp.eq.f32.partialorder %v2542, %v2544
        %v2546 = vsel %vm2545, %v2541, inf
        %2547 = vmin.xlane.f32.xlu0 %v2546
        %v2548 = vpop.xlane.xlu0 %2547
        %v2549 = vcvt.f32.s32 %v2548
        %v2550 = vcvt.f32.s32 %v2544
        %v2551 = vshll.u32 %v2550, 16
        %v2552 = vadd.s32 %v2551, %v2549
        %v2553 = vand.u32 %v2498, 65535
        %v2554 = vshra.s32 %v2498, 16
        %v2555 = vcvt.s32.f32 %v2553
        %v2556 = vcvt.s32.f32 %v2554
        %2557 = vmin.xlane.f32.xlu0 %v2556
        %v2558 = vpop.xlane.xlu0 %2557
        %vm2559 = vcmp.eq.f32.partialorder %v2556, %v2558
        %v2560 = vsel %vm2559, %v2555, inf
        %2561 = vmin.xlane.f32.xlu0 %v2560
        %v2562 = vpop.xlane.xlu0 %2561
        %v2563 = vcvt.f32.s32 %v2562
        %v2564 = vcvt.f32.s32 %v2558
        %v2565 = vshll.u32 %v2564, 16
        %v2566 = vadd.s32 %v2565, %v2563
        %v2567 = vand.u32 %v2499, 65535
        %v2568 = vshra.s32 %v2499, 16
        %v2569 = vcvt.s32.f32 %v2567
        %v2570 = vcvt.s32.f32 %v2568
        %2571 = vmin.xlane.f32.xlu0 %v2570
        %v2572 = vpop.xlane.xlu0 %2571
        %vm2573 = vcmp.eq.f32.partialorder %v2570, %v2572
        %v2574 = vsel %vm2573, %v2569, inf
        %2575 = vmin.xlane.f32.xlu0 %v2574
        %v2576 = vpop.xlane.xlu0 %2575
        %v2577 = vcvt.f32.s32 %v2576
        %v2578 = vcvt.f32.s32 %v2572
        %v2579 = vshll.u32 %v2578, 16
        %v2580 = vadd.s32 %v2579, %v2577
        %v2581 = vand.u32 %v2500, 65535
        %v2582 = vshra.s32 %v2500, 16
        %v2583 = vcvt.s32.f32 %v2581
        %v2584 = vcvt.s32.f32 %v2582
        %2585 = vmin.xlane.f32.xlu0 %v2584
        %v2586 = vpop.xlane.xlu0 %2585
        %vm2587 = vcmp.eq.f32.partialorder %v2584, %v2586
        %v2588 = vsel %vm2587, %v2583, inf
        %2589 = vmin.xlane.f32.xlu0 %v2588
        %v2590 = vpop.xlane.xlu0 %2589
        %v2591 = vcvt.f32.s32 %v2590
        %v2592 = vcvt.f32.s32 %v2586
        %v2593 = vshll.u32 %v2592, 16
        %v2594 = vadd.s32 %v2593, %v2591
        %v2595 = vand.u32 %v2501, 65535
        %v2596 = vshra.s32 %v2501, 16
        %v2597 = vcvt.s32.f32 %v2595
        %v2598 = vcvt.s32.f32 %v2596
        %2599 = vmin.xlane.f32.xlu0 %v2598
        %v2600 = vpop.xlane.xlu0 %2599
        %vm2601 = vcmp.eq.f32.partialorder %v2598, %v2600
        %v2602 = vsel %vm2601, %v2597, inf
        %2603 = vmin.xlane.f32.xlu0 %v2602
        %v2604 = vpop.xlane.xlu0 %2603
        %v2605 = vcvt.f32.s32 %v2604
        %v2606 = vcvt.f32.s32 %v2600
        %v2607 = vshll.u32 %v2606, 16
        %v2608 = vadd.s32 %v2607, %v2605
        %v2609 = vand.u32 %v2502, 65535
        %v2610 = vshra.s32 %v2502, 16
        %v2611 = vcvt.s32.f32 %v2609
        %v2612 = vcvt.s32.f32 %v2610
        %2613 = vmin.xlane.f32.xlu0 %v2612
        %v2614 = vpop.xlane.xlu0 %2613
        %vm2615 = vcmp.eq.f32.partialorder %v2612, %v2614
        %v2616 = vsel %vm2615, %v2611, inf
        %2617 = vmin.xlane.f32.xlu0 %v2616
        %v2618 = vpop.xlane.xlu0 %2617
        %v2619 = vcvt.f32.s32 %v2618
        %v2620 = vcvt.f32.s32 %v2614
        %v2621 = vshll.u32 %v2620, 16
        %v2622 = vadd.s32 %v2621, %v2619
        %v2623 = vand.u32 %v2503, 65535
        %v2624 = vshra.s32 %v2503, 16
        %v2625 = vcvt.s32.f32 %v2623
        %v2626 = vcvt.s32.f32 %v2624
        %2627 = vmin.xlane.f32.xlu0 %v2626
        %v2628 = vpop.xlane.xlu0 %2627
        %vm2629 = vcmp.eq.f32.partialorder %v2626, %v2628
        %v2630 = vsel %vm2629, %v2625, inf
        %2631 = vmin.xlane.f32.xlu0 %v2630
        %v2632 = vpop.xlane.xlu0 %2631
        %v2633 = vcvt.f32.s32 %v2632
        %v2634 = vcvt.f32.s32 %v2628
        %v2635 = vshll.u32 %v2634, 16
        %v2636 = vadd.s32 %v2635, %v2633
        %v2637 = vand.u32 %v2504, 65535
        %v2638 = vshra.s32 %v2504, 16
        %v2639 = vcvt.s32.f32 %v2637
        %v2640 = vcvt.s32.f32 %v2638
        %2641 = vmin.xlane.f32.xlu0 %v2640
        %v2642 = vpop.xlane.xlu0 %2641
        %vm2643 = vcmp.eq.f32.partialorder %v2640, %v2642
        %v2644 = vsel %vm2643, %v2639, inf
        %2645 = vmin.xlane.f32.xlu0 %v2644
        %v2646 = vpop.xlane.xlu0 %2645
        %v2647 = vcvt.f32.s32 %v2646
        %v2648 = vcvt.f32.s32 %v2642
        %v2649 = vshll.u32 %v2648, 16
        %v2650 = vadd.s32 %v2649, %v2647
        %v2651 = vand.u32 %v2505, 65535
        %v2652 = vshra.s32 %v2505, 16
        %v2653 = vcvt.s32.f32 %v2651
        %v2654 = vcvt.s32.f32 %v2652
        %2655 = vmin.xlane.f32.xlu0 %v2654
        %v2656 = vpop.xlane.xlu0 %2655
        %vm2657 = vcmp.eq.f32.partialorder %v2654, %v2656
        %v2658 = vsel %vm2657, %v2653, inf
        %2659 = vmin.xlane.f32.xlu0 %v2658
        %v2660 = vpop.xlane.xlu0 %2659
        %v2661 = vcvt.f32.s32 %v2660
        %v2662 = vcvt.f32.s32 %v2656
        %v2663 = vshll.u32 %v2662, 16
        %v2664 = vadd.s32 %v2663, %v2661
        %v2665 = vand.u32 %v2506, 65535
        %v2666 = vshra.s32 %v2506, 16
        %v2667 = vcvt.s32.f32 %v2665
        %v2668 = vcvt.s32.f32 %v2666
        %2669 = vmin.xlane.f32.xlu0 %v2668
        %v2670 = vpop.xlane.xlu0 %2669
        %vm2671 = vcmp.eq.f32.partialorder %v2668, %v2670
        %v2672 = vsel %vm2671, %v2667, inf
        %2673 = vmin.xlane.f32.xlu0 %v2672
        %v2674 = vpop.xlane.xlu0 %2673
        %v2675 = vcvt.f32.s32 %v2674
        %v2676 = vcvt.f32.s32 %v2670
        %v2677 = vshll.u32 %v2676, 16
        %v2678 = vadd.s32 %v2677, %v2675
        %v2679 = vand.u32 %v2507, 65535
        %v2680 = vshra.s32 %v2507, 16
        %v2681 = vcvt.s32.f32 %v2679
        %v2682 = vcvt.s32.f32 %v2680
        %2683 = vmin.xlane.f32.xlu0 %v2682
        %v2684 = vpop.xlane.xlu0 %2683
        %vm2685 = vcmp.eq.f32.partialorder %v2682, %v2684
        %v2686 = vsel %vm2685, %v2681, inf
        %2687 = vmin.xlane.f32.xlu0 %v2686
        %v2688 = vpop.xlane.xlu0 %2687
        %v2689 = vcvt.f32.s32 %v2688
        %v2690 = vcvt.f32.s32 %v2684
        %v2691 = vshll.u32 %v2690, 16
        %v2692 = vadd.s32 %v2691, %v2689
        %v2693 = vand.u32 %v2508, 65535
        %v2694 = vshra.s32 %v2508, 16
        %v2695 = vcvt.s32.f32 %v2693
        %v2696 = vcvt.s32.f32 %v2694
        %2697 = vmin.xlane.f32.xlu0 %v2696
        %v2698 = vpop.xlane.xlu0 %2697
        %vm2699 = vcmp.eq.f32.partialorder %v2696, %v2698
        %v2700 = vsel %vm2699, %v2695, inf
        %2701 = vmin.xlane.f32.xlu0 %v2700
        %v2702 = vpop.xlane.xlu0 %2701
        %v2703 = vcvt.f32.s32 %v2702
        %v2704 = vcvt.f32.s32 %v2698
        %v2705 = vshll.u32 %v2704, 16
        %v2706 = vadd.s32 %v2705, %v2703
        %v2707 = vand.u32 %v2509, 65535
        %v2708 = vshra.s32 %v2509, 16
        %v2709 = vcvt.s32.f32 %v2707
        %v2710 = vcvt.s32.f32 %v2708
        %2711 = vmin.xlane.f32.xlu0 %v2710
        %v2712 = vpop.xlane.xlu0 %2711
        %vm2713 = vcmp.eq.f32.partialorder %v2710, %v2712
        %v2714 = vsel %vm2713, %v2709, inf
        %2715 = vmin.xlane.f32.xlu0 %v2714
        %v2716 = vpop.xlane.xlu0 %2715
        %v2717 = vcvt.f32.s32 %v2716
        %v2718 = vcvt.f32.s32 %v2712
        %v2719 = vshll.u32 %v2718, 16
        %v2720 = vadd.s32 %v2719, %v2717
        %v2721 = vand.u32 %v2510, 65535
        %v2722 = vshra.s32 %v2510, 16
        %v2723 = vcvt.s32.f32 %v2721
        %v2724 = vcvt.s32.f32 %v2722
        %2725 = vmin.xlane.f32.xlu0 %v2724
        %v2726 = vpop.xlane.xlu0 %2725
        %vm2727 = vcmp.eq.f32.partialorder %v2724, %v2726
        %v2728 = vsel %vm2727, %v2723, inf
        %2729 = vmin.xlane.f32.xlu0 %v2728
        %v2730 = vpop.xlane.xlu0 %2729
        %v2731 = vcvt.f32.s32 %v2730
        %v2732 = vcvt.f32.s32 %v2726
        %v2733 = vshll.u32 %v2732, 16
        %v2734 = vadd.s32 %v2733, %v2731
        %v2735 = vcvt.s32.f32 %v2524
        %v2736 = vcvt.s32.f32 %v2538
        %v2737 = vcvt.s32.f32 %v2552
        %v2738 = vcvt.s32.f32 %v2566
        %v2739 = vcvt.s32.f32 %v2580
        %v2740 = vcvt.s32.f32 %v2594
        %v2741 = vcvt.s32.f32 %v2608
        %v2742 = vcvt.s32.f32 %v2622
        %v2743 = vcvt.s32.f32 %v2636
        %v2744 = vcvt.s32.f32 %v2650
        %v2745 = vcvt.s32.f32 %v2664
        %v2746 = vcvt.s32.f32 %v2678
        %v2747 = vcvt.s32.f32 %v2692
        %v2748 = vcvt.s32.f32 %v2706
        %v2749 = vcvt.s32.f32 %v2720
        %v2750 = vcvt.s32.f32 %v2734
        %v2751 = vmul.f32 %v2735, 0.1904762
        %v2752 = vmul.f32 %v2736, 0.1904762
        %v2753 = vmul.f32 %v2737, 0.1904762
        %v2754 = vmul.f32 %v2738, 0.1904762
        %v2755 = vmul.f32 %v2739, 0.1904762
        %v2756 = vmul.f32 %v2740, 0.1904762
        %v2757 = vmul.f32 %v2741, 0.1904762
        %v2758 = vmul.f32 %v2742, 0.1904762
        %v2759 = vmul.f32 %v2743, 0.1904762
        %v2760 = vmul.f32 %v2744, 0.1904762
        %v2761 = vmul.f32 %v2745, 0.1904762
        %v2762 = vmul.f32 %v2746, 0.1904762
        %v2763 = vmul.f32 %v2747, 0.1904762
        %v2764 = vmul.f32 %v2748, 0.1904762
        %v2765 = vmul.f32 %v2749, 0.1904762
        %v2766 = vmul.f32 %v2750, 0.1904762
        %v2767 = vadd.f32 %v2751, 0.0952381
        %v2768 = vadd.f32 %v2752, 0.0952381
        %v2769 = vadd.f32 %v2753, 0.0952381
        %v2770 = vadd.f32 %v2754, 0.0952381
        %v2771 = vadd.f32 %v2755, 0.0952381
        %v2772 = vadd.f32 %v2756, 0.0952381
        %v2773 = vadd.f32 %v2757, 0.0952381
        %v2774 = vadd.f32 %v2758, 0.0952381
        %v2775 = vadd.f32 %v2759, 0.0952381
        %v2776 = vadd.f32 %v2760, 0.0952381
        %v2777 = vadd.f32 %v2761, 0.0952381
        %v2778 = vadd.f32 %v2762, 0.0952381
        %v2779 = vadd.f32 %v2763, 0.0952381
        %v2780 = vadd.f32 %v2764, 0.0952381
        %v2781 = vadd.f32 %v2765, 0.0952381
        %v2782 = vadd.f32 %v2766, 0.0952381
        %v2783 = vmul.f32 %v2048, 2.0
        %v2784 = vmul.f32 %v2050, 2.0
        %v2785 = vmul.f32 %v2052, 2.0
        %v2786 = vmul.f32 %v2054, 2.0
        %v2787 = vmul.f32 %v2056, 2.0
        %v2788 = vmul.f32 %v2058, 2.0
        %v2789 = vmul.f32 %v2060, 2.0
        %v2790 = vmul.f32 %v2062, 2.0
        %v2791 = vmul.f32 %v2064, 2.0
        %v2792 = vmul.f32 %v2066, 2.0
        %v2793 = vmul.f32 %v2068, 2.0
        %v2794 = vmul.f32 %v2070, 2.0
        %v2795 = vmul.f32 %v2072, 2.0
        %v2796 = vmul.f32 %v2074, 2.0
        %v2797 = vmul.f32 %v2076, 2.0
        %v2798 = vmul.f32 %v2078, 2.0
        %v2799 = vsub.f32 %v2783, 1.0
        %v2800 = vsub.f32 %v2784, 1.0
        %v2801 = vsub.f32 %v2785, 1.0
        %v2802 = vsub.f32 %v2786, 1.0
        %v2803 = vsub.f32 %v2787, 1.0
        %v2804 = vsub.f32 %v2788, 1.0
        %v2805 = vsub.f32 %v2789, 1.0
        %v2806 = vsub.f32 %v2790, 1.0
        %v2807 = vsub.f32 %v2791, 1.0
        %v2808 = vsub.f32 %v2792, 1.0
        %v2809 = vsub.f32 %v2793, 1.0
        %v2810 = vsub.f32 %v2794, 1.0
        %v2811 = vsub.f32 %v2795, 1.0
        %v2812 = vsub.f32 %v2796, 1.0
        %v2813 = vsub.f32 %v2797, 1.0
        %v2814 = vsub.f32 %v2798, 1.0
        %v2815 = vmul.f32 %v2799, 0.1904762
        %v2816 = vmul.f32 %v2800, 0.1904762
        %v2817 = vmul.f32 %v2801, 0.1904762
        %v2818 = vmul.f32 %v2802, 0.1904762
        %v2819 = vmul.f32 %v2803, 0.1904762
        %v2820 = vmul.f32 %v2804, 0.1904762
        %v2821 = vmul.f32 %v2805, 0.1904762
        %v2822 = vmul.f32 %v2806, 0.1904762
        %v2823 = vmul.f32 %v2807, 0.1904762
        %v2824 = vmul.f32 %v2808, 0.1904762
        %v2825 = vmul.f32 %v2809, 0.1904762
        %v2826 = vmul.f32 %v2810, 0.1904762
        %v2827 = vmul.f32 %v2811, 0.1904762
        %v2828 = vmul.f32 %v2812, 0.1904762
        %v2829 = vmul.f32 %v2813, 0.1904762
        %v2830 = vmul.f32 %v2814, 0.1904762
        %v2831 = vadd.f32 %v2815, %v2415
        %v2832 = vadd.f32 %v2816, %v2416
        %v2833 = vadd.f32 %v2817, %v2417
        %v2834 = vadd.f32 %v2818, %v2418
        %v2835 = vadd.f32 %v2819, %v2419
        %v2836 = vadd.f32 %v2820, %v2420
        %v2837 = vadd.f32 %v2821, %v2421
        %v2838 = vadd.f32 %v2822, %v2422
        %v2839 = vadd.f32 %v2823, %v2423
        %v2840 = vadd.f32 %v2824, %v2424
        %v2841 = vadd.f32 %v2825, %v2425
        %v2842 = vadd.f32 %v2826, %v2426
        %v2843 = vadd.f32 %v2827, %v2427
        %v2844 = vadd.f32 %v2828, %v2428
        %v2845 = vadd.f32 %v2829, %v2429
        %v2846 = vadd.f32 %v2830, %v2430
        %v2847 = vmax.f32 %v2831, 0.0
        %v2848 = vmax.f32 %v2832, 0.0
        %v2849 = vmax.f32 %v2833, 0.0
        %v2850 = vmax.f32 %v2834, 0.0
        %v2851 = vmax.f32 %v2835, 0.0
        %v2852 = vmax.f32 %v2836, 0.0
        %v2853 = vmax.f32 %v2837, 0.0
        %v2854 = vmax.f32 %v2838, 0.0
        %v2855 = vmax.f32 %v2839, 0.0
        %v2856 = vmax.f32 %v2840, 0.0
        %v2857 = vmax.f32 %v2841, 0.0
        %v2858 = vmax.f32 %v2842, 0.0
        %v2859 = vmax.f32 %v2843, 0.0
        %v2860 = vmax.f32 %v2844, 0.0
        %v2861 = vmax.f32 %v2845, 0.0
        %v2862 = vmax.f32 %v2846, 0.0
        %v2863 = vmin.f32 %v2847, 4.0
        %v2864 = vmin.f32 %v2848, 4.0
        %v2865 = vmin.f32 %v2849, 4.0
        %v2866 = vmin.f32 %v2850, 4.0
        %v2867 = vmin.f32 %v2851, 4.0
        %v2868 = vmin.f32 %v2852, 4.0
        %v2869 = vmin.f32 %v2853, 4.0
        %v2870 = vmin.f32 %v2854, 4.0
        %v2871 = vmin.f32 %v2855, 4.0
        %v2872 = vmin.f32 %v2856, 4.0
        %v2873 = vmin.f32 %v2857, 4.0
        %v2874 = vmin.f32 %v2858, 4.0
        %v2875 = vmin.f32 %v2859, 4.0
        %v2876 = vmin.f32 %v2860, 4.0
        %v2877 = vmin.f32 %v2861, 4.0
        %v2878 = vmin.f32 %v2862, 4.0
        %v2879 = vmul.f32 %v2863, 16.0
        %v2880 = vmul.f32 %v2864, 16.0
        %v2881 = vmul.f32 %v2865, 16.0
        %v2882 = vmul.f32 %v2866, 16.0
        %v2883 = vmul.f32 %v2867, 16.0
        %v2884 = vmul.f32 %v2868, 16.0
        %v2885 = vmul.f32 %v2869, 16.0
        %v2886 = vmul.f32 %v2870, 16.0
        %v2887 = vmul.f32 %v2871, 16.0
        %v2888 = vmul.f32 %v2872, 16.0
        %v2889 = vmul.f32 %v2873, 16.0
        %v2890 = vmul.f32 %v2874, 16.0
        %v2891 = vmul.f32 %v2875, 16.0
        %v2892 = vmul.f32 %v2876, 16.0
        %v2893 = vmul.f32 %v2877, 16.0
        %v2894 = vmul.f32 %v2878, 16.0
        %v2895 = vadd.f32 %v2815, %v2767
        %v2896 = vadd.f32 %v2816, %v2768
        %v2897 = vadd.f32 %v2817, %v2769
        %v2898 = vadd.f32 %v2818, %v2770
        %v2899 = vadd.f32 %v2819, %v2771
        %v2900 = vadd.f32 %v2820, %v2772
        %v2901 = vadd.f32 %v2821, %v2773
        %v2902 = vadd.f32 %v2822, %v2774
        %v2903 = vadd.f32 %v2823, %v2775
        %v2904 = vadd.f32 %v2824, %v2776
        %v2905 = vadd.f32 %v2825, %v2777
        %v2906 = vadd.f32 %v2826, %v2778
        %v2907 = vadd.f32 %v2827, %v2779
        %v2908 = vadd.f32 %v2828, %v2780
        %v2909 = vadd.f32 %v2829, %v2781
        %v2910 = vadd.f32 %v2830, %v2782
        %v2911 = vmax.f32 %v2895, 0.0
        %v2912 = vmax.f32 %v2896, 0.0
        %v2913 = vmax.f32 %v2897, 0.0
        %v2914 = vmax.f32 %v2898, 0.0
        %v2915 = vmax.f32 %v2899, 0.0
        %v2916 = vmax.f32 %v2900, 0.0
        %v2917 = vmax.f32 %v2901, 0.0
        %v2918 = vmax.f32 %v2902, 0.0
        %v2919 = vmax.f32 %v2903, 0.0
        %v2920 = vmax.f32 %v2904, 0.0
        %v2921 = vmax.f32 %v2905, 0.0
        %v2922 = vmax.f32 %v2906, 0.0
        %v2923 = vmax.f32 %v2907, 0.0
        %v2924 = vmax.f32 %v2908, 0.0
        %v2925 = vmax.f32 %v2909, 0.0
        %v2926 = vmax.f32 %v2910, 0.0
        %v2927 = vmin.f32 %v2911, 4.0
        %v2928 = vmin.f32 %v2912, 4.0
        %v2929 = vmin.f32 %v2913, 4.0
        %v2930 = vmin.f32 %v2914, 4.0
        %v2931 = vmin.f32 %v2915, 4.0
        %v2932 = vmin.f32 %v2916, 4.0
        %v2933 = vmin.f32 %v2917, 4.0
        %v2934 = vmin.f32 %v2918, 4.0
        %v2935 = vmin.f32 %v2919, 4.0
        %v2936 = vmin.f32 %v2920, 4.0
        %v2937 = vmin.f32 %v2921, 4.0
        %v2938 = vmin.f32 %v2922, 4.0
        %v2939 = vmin.f32 %v2923, 4.0
        %v2940 = vmin.f32 %v2924, 4.0
        %v2941 = vmin.f32 %v2925, 4.0
        %v2942 = vmin.f32 %v2926, 4.0
        %v2943 = vmul.f32 %v2927, 30.0
        %v2944 = vmul.f32 %v2928, 30.0
        %v2945 = vmul.f32 %v2929, 30.0
        %v2946 = vmul.f32 %v2930, 30.0
        %v2947 = vmul.f32 %v2931, 30.0
        %v2948 = vmul.f32 %v2932, 30.0
        %v2949 = vmul.f32 %v2933, 30.0
        %v2950 = vmul.f32 %v2934, 30.0
        %v2951 = vmul.f32 %v2935, 30.0
        %v2952 = vmul.f32 %v2936, 30.0
        %v2953 = vmul.f32 %v2937, 30.0
        %v2954 = vmul.f32 %v2938, 30.0
        %v2955 = vmul.f32 %v2939, 30.0
        %v2956 = vmul.f32 %v2940, 30.0
        %v2957 = vmul.f32 %v2941, 30.0
        %v2958 = vmul.f32 %v2942, 30.0
        %v2959 = vsub.f32 %v2783, 0.5
        %v2960 = vsub.f32 %v2784, 0.5
        %v2961 = vsub.f32 %v2785, 0.5
        %v2962 = vsub.f32 %v2786, 0.5
        %v2963 = vsub.f32 %v2787, 0.5
        %v2964 = vsub.f32 %v2788, 0.5
        %v2965 = vsub.f32 %v2789, 0.5
        %v2966 = vsub.f32 %v2790, 0.5
        %v2967 = vsub.f32 %v2791, 0.5
        %v2968 = vsub.f32 %v2792, 0.5
        %v2969 = vsub.f32 %v2793, 0.5
        %v2970 = vsub.f32 %v2794, 0.5
        %v2971 = vsub.f32 %v2795, 0.5
        %v2972 = vsub.f32 %v2796, 0.5
        %v2973 = vsub.f32 %v2797, 0.5
        %v2974 = vsub.f32 %v2798, 0.5
        %v2975 = vadd.f32 %v2959, %v703
        %v2976 = vadd.f32 %v2960, %v704
        %v2977 = vadd.f32 %v2961, %v705
        %v2978 = vadd.f32 %v2962, %v706
        %v2979 = vadd.f32 %v2963, %v707
        %v2980 = vadd.f32 %v2964, %v708
        %v2981 = vadd.f32 %v2965, %v709
        %v2982 = vadd.f32 %v2966, %v710
        %v2983 = vadd.f32 %v2967, %v711
        %v2984 = vadd.f32 %v2968, %v712
        %v2985 = vadd.f32 %v2969, %v713
        %v2986 = vadd.f32 %v2970, %v714
        %v2987 = vadd.f32 %v2971, %v715
        %v2988 = vadd.f32 %v2972, %v716
        %v2989 = vadd.f32 %v2973, %v717
        %v2990 = vadd.f32 %v2974, %v718
        %v2991 = vmul.f32 %v2975, 8.0
        %v2992 = vmul.f32 %v2976, 8.0
        %v2993 = vmul.f32 %v2977, 8.0
        %v2994 = vmul.f32 %v2978, 8.0
        %v2995 = vmul.f32 %v2979, 8.0
        %v2996 = vmul.f32 %v2980, 8.0
        %v2997 = vmul.f32 %v2981, 8.0
        %v2998 = vmul.f32 %v2982, 8.0
        %v2999 = vmul.f32 %v2983, 8.0
        %v3000 = vmul.f32 %v2984, 8.0
        %v3001 = vmul.f32 %v2985, 8.0
        %v3002 = vmul.f32 %v2986, 8.0
        %v3003 = vmul.f32 %v2987, 8.0
        %v3004 = vmul.f32 %v2988, 8.0
        %v3005 = vmul.f32 %v2989, 8.0
        %v3006 = vmul.f32 %v2990, 8.0
        %3023 = vrot.lane.b32.xlu0 %v2943, 107
        %v3024 = vpop.permute.xlu0 %3023
        %3025 = vrot.lane.b32.xlu0 %v2944, 107
        %v3026 = vpop.permute.xlu0 %3025
        %3027 = vrot.lane.b32.xlu0 %v2945, 107
        %v3028 = vpop.permute.xlu0 %3027
        %3029 = vrot.lane.b32.xlu0 %v2946, 107
        %v3030 = vpop.permute.xlu0 %3029
        %3031 = vrot.lane.b32.xlu0 %v2947, 107
        %v3032 = vpop.permute.xlu0 %3031
        %3033 = vrot.lane.b32.xlu0 %v2948, 107
        %v3034 = vpop.permute.xlu0 %3033
        %3035 = vrot.lane.b32.xlu0 %v2949, 107
        %v3036 = vpop.permute.xlu0 %3035
        %3037 = vrot.lane.b32.xlu0 %v2950, 107
        %v3038 = vpop.permute.xlu0 %3037
        %3039 = vrot.lane.b32.xlu0 %v2951, 107
        %v3040 = vpop.permute.xlu0 %3039
        %3041 = vrot.lane.b32.xlu0 %v2952, 107
        %v3042 = vpop.permute.xlu0 %3041
        %3043 = vrot.lane.b32.xlu0 %v2953, 107
        %v3044 = vpop.permute.xlu0 %3043
        %3045 = vrot.lane.b32.xlu0 %v2954, 107
        %v3046 = vpop.permute.xlu0 %3045
        %3047 = vrot.lane.b32.xlu0 %v2955, 107
        %v3048 = vpop.permute.xlu0 %3047
        %3049 = vrot.lane.b32.xlu0 %v2956, 107
        %v3050 = vpop.permute.xlu0 %3049
        %3051 = vrot.lane.b32.xlu0 %v2957, 107
        %v3052 = vpop.permute.xlu0 %3051
        %3053 = vrot.lane.b32.xlu0 %v2958, 107
        %v3054 = vpop.permute.xlu0 %3053
        %3087 = vrot.lane.b32.xlu0 %v2048, 86
        %v3088 = vpop.permute.xlu0 %3087
        %3089 = vrot.lane.b32.xlu0 %v2050, 86
        %v3090 = vpop.permute.xlu0 %3089
        %3091 = vrot.lane.b32.xlu0 %v2052, 86
        %v3092 = vpop.permute.xlu0 %3091
        %3093 = vrot.lane.b32.xlu0 %v2054, 86
        %v3094 = vpop.permute.xlu0 %3093
        %3095 = vrot.lane.b32.xlu0 %v2056, 86
        %v3096 = vpop.permute.xlu0 %3095
        %3097 = vrot.lane.b32.xlu0 %v2058, 86
        %v3098 = vpop.permute.xlu0 %3097
        %3099 = vrot.lane.b32.xlu0 %v2060, 86
        %v3100 = vpop.permute.xlu0 %3099
        %3101 = vrot.lane.b32.xlu0 %v2062, 86
        %v3102 = vpop.permute.xlu0 %3101
        %3103 = vrot.lane.b32.xlu0 %v2064, 86
        %v3104 = vpop.permute.xlu0 %3103
        %3105 = vrot.lane.b32.xlu0 %v2066, 86
        %v3106 = vpop.permute.xlu0 %3105
        %3107 = vrot.lane.b32.xlu0 %v2068, 86
        %v3108 = vpop.permute.xlu0 %3107
        %3109 = vrot.lane.b32.xlu0 %v2070, 86
        %v3110 = vpop.permute.xlu0 %3109
        %3111 = vrot.lane.b32.xlu0 %v2072, 86
        %v3112 = vpop.permute.xlu0 %3111
        %3113 = vrot.lane.b32.xlu0 %v2074, 86
        %v3114 = vpop.permute.xlu0 %3113
        %3115 = vrot.lane.b32.xlu0 %v2076, 86
        %v3116 = vpop.permute.xlu0 %3115
        %3117 = vrot.lane.b32.xlu0 %v2078, 86
        %v3118 = vpop.permute.xlu0 %3117
        %v3135 = vsel %vm1898, %v2991, %v2879
        %v3136 = vsel %vm1898, %v2992, %v2880
        %v3137 = vsel %vm1898, %v2993, %v2881
        %v3138 = vsel %vm1898, %v2994, %v2882
        %v3139 = vsel %vm1898, %v2995, %v2883
        %v3140 = vsel %vm1898, %v2996, %v2884
        %v3141 = vsel %vm1898, %v2997, %v2885
        %v3142 = vsel %vm1898, %v2998, %v2886
        %v3143 = vsel %vm1898, %v2999, %v2887
        %v3144 = vsel %vm1898, %v3000, %v2888
        %v3145 = vsel %vm1898, %v3001, %v2889
        %v3146 = vsel %vm1898, %v3002, %v2890
        %v3147 = vsel %vm1898, %v3003, %v2891
        %v3148 = vsel %vm1898, %v3004, %v2892
        %v3149 = vsel %vm1898, %v3005, %v2893
        %v3150 = vsel %vm1898, %v3006, %v2894
        %v3151 = vsel %vm1915, %v3135, %v3024
        %v3152 = vsel %vm1915, %v3136, %v3026
        %v3153 = vsel %vm1915, %v3137, %v3028
        %v3154 = vsel %vm1915, %v3138, %v3030
        %v3155 = vsel %vm1915, %v3139, %v3032
        %v3156 = vsel %vm1915, %v3140, %v3034
        %v3157 = vsel %vm1915, %v3141, %v3036
        %v3158 = vsel %vm1915, %v3142, %v3038
        %v3159 = vsel %vm1915, %v3143, %v3040
        %v3160 = vsel %vm1915, %v3144, %v3042
        %v3161 = vsel %vm1915, %v3145, %v3044
        %v3162 = vsel %vm1915, %v3146, %v3046
        %v3163 = vsel %vm1915, %v3147, %v3048
        %v3164 = vsel %vm1915, %v3148, %v3050
        %v3165 = vsel %vm1915, %v3149, %v3052
        %v3166 = vsel %vm1915, %v3150, %v3054
        %v3167 = vsel %vm1932, %v3151, %v3088
        %v3168 = vsel %vm1932, %v3152, %v3090
        %v3169 = vsel %vm1932, %v3153, %v3092
        %v3170 = vsel %vm1932, %v3154, %v3094
        %v3171 = vsel %vm1932, %v3155, %v3096
        %v3172 = vsel %vm1932, %v3156, %v3098
        %v3173 = vsel %vm1932, %v3157, %v3100
        %v3174 = vsel %vm1932, %v3158, %v3102
        %v3175 = vsel %vm1932, %v3159, %v3104
        %v3176 = vsel %vm1932, %v3160, %v3106
        %v3177 = vsel %vm1932, %v3161, %v3108
        %v3178 = vsel %vm1932, %v3162, %v3110
        %v3179 = vsel %vm1932, %v3163, %v3112
        %v3180 = vsel %vm1932, %v3164, %v3114
        %v3181 = vsel %vm1932, %v3165, %v3116
        %v3182 = vsel %vm1932, %v3166, %v3118
        %s3183 = scalar_lea.vmem %s252, 128 [#allocation7]
        %3184 = vst.msk [vmem:[%s3183] sm:$0xff] %vm1949, %v3167
        %3185 = vst.msk [vmem:[%s3183 + $0x8] sm:$0xff] %vm1949, %v3168
        %3186 = vst.msk [vmem:[%s3183 + $0x10] sm:$0xff] %vm1949, %v3169
        %3187 = vst.msk [vmem:[%s3183 + $0x18] sm:$0xff] %vm1949, %v3170
        %3188 = vst.msk [vmem:[%s3183 + $0x20] sm:$0xff] %vm1949, %v3171
        %3189 = vst.msk [vmem:[%s3183 + $0x28] sm:$0xff] %vm1949, %v3172
        %3190 = vst.msk [vmem:[%s3183 + $0x30] sm:$0xff] %vm1949, %v3173
        %3191 = vst.msk [vmem:[%s3183 + $0x38] sm:$0xff] %vm1949, %v3174
        %3192 = vst.msk [vmem:[%s3183 + $0x40] sm:$0xff] %vm1949, %v3175
        %3193 = vst.msk [vmem:[%s3183 + $0x48] sm:$0xff] %vm1949, %v3176
        %3194 = vst.msk [vmem:[%s3183 + $0x50] sm:$0xff] %vm1949, %v3177
        %3195 = vst.msk [vmem:[%s3183 + $0x58] sm:$0xff] %vm1949, %v3178
        %3196 = vst.msk [vmem:[%s3183 + $0x60] sm:$0xff] %vm1949, %v3179
        %3197 = vst.msk [vmem:[%s3183 + $0x68] sm:$0xff] %vm1949, %v3180
        %3198 = vst.msk [vmem:[%s3183 + $0x70] sm:$0xff] %vm1949, %v3181
        %3199 = vst.msk [vmem:[%s3183 + $0x78] sm:$0xff] %vm1949, %v3182
        %s3200 = scalar_lea.vmem %s246, 256 [#allocation6]
        %3201 = vst.msk [vmem:[%s3200] sm:$0xff] %vm727, %v508
        %3202 = vst.msk [vmem:[%s3200 + $0x8] sm:$0xff] %vm727, %v511
        %3203 = vst.msk [vmem:[%s3200 + $0x10] sm:$0xff] %vm727, %v516
        %3204 = vst.msk [vmem:[%s3200 + $0x18] sm:$0xff] %vm727, %v519
        %3205 = vst.msk [vmem:[%s3200 + $0x20] sm:$0xff] %vm727, %v524
        %3206 = vst.msk [vmem:[%s3200 + $0x28] sm:$0xff] %vm727, %v527
        %3207 = vst.msk [vmem:[%s3200 + $0x30] sm:$0xff] %vm727, %v532
        %3208 = vst.msk [vmem:[%s3200 + $0x38] sm:$0xff] %vm727, %v535
        %3209 = vst.msk [vmem:[%s3200 + $0x40] sm:$0xff] %vm727, %v540
        %3210 = vst.msk [vmem:[%s3200 + $0x48] sm:$0xff] %vm727, %v543
        %3211 = vst.msk [vmem:[%s3200 + $0x50] sm:$0xff] %vm727, %v548
        %3212 = vst.msk [vmem:[%s3200 + $0x58] sm:$0xff] %vm727, %v551
        %3213 = vst.msk [vmem:[%s3200 + $0x60] sm:$0xff] %vm727, %v556
        %3214 = vst.msk [vmem:[%s3200 + $0x68] sm:$0xff] %vm727, %v559
        %3215 = vst.msk [vmem:[%s3200 + $0x70] sm:$0xff] %vm727, %v564
        %3216 = vst.msk [vmem:[%s3200 + $0x78] sm:$0xff] %vm727, %v567
        %v3217 = vxor.u32 %v508, 2147483648
        %v3218 = vxor.u32 %v511, 2147483648
        %v3219 = vxor.u32 %v516, 2147483648
        %v3220 = vxor.u32 %v519, 2147483648
        %v3221 = vxor.u32 %v524, 2147483648
        %v3222 = vxor.u32 %v527, 2147483648
        %v3223 = vxor.u32 %v532, 2147483648
        %v3224 = vxor.u32 %v535, 2147483648
        %v3225 = vxor.u32 %v540, 2147483648
        %v3226 = vxor.u32 %v543, 2147483648
        %v3227 = vxor.u32 %v548, 2147483648
        %v3228 = vxor.u32 %v551, 2147483648
        %v3229 = vxor.u32 %v556, 2147483648
        %v3230 = vxor.u32 %v559, 2147483648
        %v3231 = vxor.u32 %v564, 2147483648
        %v3232 = vxor.u32 %v567, 2147483648
        %v3233 = vmul.f32 %v3217, 1.442695
        %v3234 = vpow.pop %v3233
        %v3235 = vmul.f32 %v3218, 1.442695
        %v3236 = vpow.pop %v3235
        %v3237 = vmul.f32 %v3219, 1.442695
        %v3238 = vpow.pop %v3237
        %v3239 = vmul.f32 %v3220, 1.442695
        %v3240 = vpow.pop %v3239
        %v3241 = vmul.f32 %v3221, 1.442695
        %v3242 = vpow.pop %v3241
        %v3243 = vmul.f32 %v3222, 1.442695
        %v3244 = vpow.pop %v3243
        %v3245 = vmul.f32 %v3223, 1.442695
        %v3246 = vpow.pop %v3245
        %v3247 = vmul.f32 %v3224, 1.442695
        %v3248 = vpow.pop %v3247
        %v3249 = vmul.f32 %v3225, 1.442695
        %v3250 = vpow.pop %v3249
        %v3251 = vmul.f32 %v3226, 1.442695
        %v3252 = vpow.pop %v3251
        %v3253 = vmul.f32 %v3227, 1.442695
        %v3254 = vpow.pop %v3253
        %v3255 = vmul.f32 %v3228, 1.442695
        %v3256 = vpow.pop %v3255
        %v3257 = vmul.f32 %v3229, 1.442695
        %v3258 = vpow.pop %v3257
        %v3259 = vmul.f32 %v3230, 1.442695
        %v3260 = vpow.pop %v3259
        %v3261 = vmul.f32 %v3231, 1.442695
        %v3262 = vpow.pop %v3261
        %v3263 = vmul.f32 %v3232, 1.442695
        %v3264 = vpow.pop %v3263
        %v3265 = vadd.f32 %v3234, 1.0
        %v3266 = vadd.f32 %v3236, 1.0
        %v3267 = vadd.f32 %v3238, 1.0
        %v3268 = vadd.f32 %v3240, 1.0
        %v3269 = vadd.f32 %v3242, 1.0
        %v3270 = vadd.f32 %v3244, 1.0
        %v3271 = vadd.f32 %v3246, 1.0
        %v3272 = vadd.f32 %v3248, 1.0
        %v3273 = vadd.f32 %v3250, 1.0
        %v3274 = vadd.f32 %v3252, 1.0
        %v3275 = vadd.f32 %v3254, 1.0
        %v3276 = vadd.f32 %v3256, 1.0
        %v3277 = vadd.f32 %v3258, 1.0
        %v3278 = vadd.f32 %v3260, 1.0
        %v3279 = vadd.f32 %v3262, 1.0
        %v3280 = vadd.f32 %v3264, 1.0
        %v3281 = vrcp.pop %v3265
        %v3282 = vmul.f32 1.0, %v3281
        %v3283 = vrcp.pop %v3266
        %v3284 = vmul.f32 1.0, %v3283
        %v3285 = vrcp.pop %v3267
        %v3286 = vmul.f32 1.0, %v3285
        %v3287 = vrcp.pop %v3268
        %v3288 = vmul.f32 1.0, %v3287
        %v3289 = vrcp.pop %v3269
        %v3290 = vmul.f32 1.0, %v3289
        %v3291 = vrcp.pop %v3270
        %v3292 = vmul.f32 1.0, %v3291
        %v3293 = vrcp.pop %v3271
        %v3294 = vmul.f32 1.0, %v3293
        %v3295 = vrcp.pop %v3272
        %v3296 = vmul.f32 1.0, %v3295
        %v3297 = vrcp.pop %v3273
        %v3298 = vmul.f32 1.0, %v3297
        %v3299 = vrcp.pop %v3274
        %v3300 = vmul.f32 1.0, %v3299
        %v3301 = vrcp.pop %v3275
        %v3302 = vmul.f32 1.0, %v3301
        %v3303 = vrcp.pop %v3276
        %v3304 = vmul.f32 1.0, %v3303
        %v3305 = vrcp.pop %v3277
        %v3306 = vmul.f32 1.0, %v3305
        %v3307 = vrcp.pop %v3278
        %v3308 = vmul.f32 1.0, %v3307
        %v3309 = vrcp.pop %v3279
        %v3310 = vmul.f32 1.0, %v3309
        %v3311 = vrcp.pop %v3280
        %v3312 = vmul.f32 1.0, %v3311
        %v3313 = vsel %vm723, %v508, -1e+30
        %v3314 = vsel %vm723, %v511, -1e+30
        %v3315 = vsel %vm723, %v516, -1e+30
        %v3316 = vsel %vm723, %v519, -1e+30
        %v3317 = vsel %vm723, %v524, -1e+30
        %v3318 = vsel %vm723, %v527, -1e+30
        %v3319 = vsel %vm723, %v532, -1e+30
        %v3320 = vsel %vm723, %v535, -1e+30
        %v3321 = vsel %vm723, %v540, -1e+30
        %v3322 = vsel %vm723, %v543, -1e+30
        %v3323 = vsel %vm723, %v548, -1e+30
        %v3324 = vsel %vm723, %v551, -1e+30
        %v3325 = vsel %vm723, %v556, -1e+30
        %v3326 = vsel %vm723, %v559, -1e+30
        %v3327 = vsel %vm723, %v564, -1e+30
        %v3328 = vsel %vm723, %v567, -1e+30
        %3329 = vmax.xlane.f32.xlu0 %v3313
        %v3330 = vpop.xlane.xlu0 %3329
        %3331 = vmax.xlane.f32.xlu0 %v3314
        %v3332 = vpop.xlane.xlu0 %3331
        %3333 = vmax.xlane.f32.xlu0 %v3315
        %v3334 = vpop.xlane.xlu0 %3333
        %3335 = vmax.xlane.f32.xlu0 %v3316
        %v3336 = vpop.xlane.xlu0 %3335
        %3337 = vmax.xlane.f32.xlu0 %v3317
        %v3338 = vpop.xlane.xlu0 %3337
        %3339 = vmax.xlane.f32.xlu0 %v3318
        %v3340 = vpop.xlane.xlu0 %3339
        %3341 = vmax.xlane.f32.xlu0 %v3319
        %v3342 = vpop.xlane.xlu0 %3341
        %3343 = vmax.xlane.f32.xlu0 %v3320
        %v3344 = vpop.xlane.xlu0 %3343
        %3345 = vmax.xlane.f32.xlu0 %v3321
        %v3346 = vpop.xlane.xlu0 %3345
        %3347 = vmax.xlane.f32.xlu0 %v3322
        %v3348 = vpop.xlane.xlu0 %3347
        %3349 = vmax.xlane.f32.xlu0 %v3323
        %v3350 = vpop.xlane.xlu0 %3349
        %3351 = vmax.xlane.f32.xlu0 %v3324
        %v3352 = vpop.xlane.xlu0 %3351
        %3353 = vmax.xlane.f32.xlu0 %v3325
        %v3354 = vpop.xlane.xlu0 %3353
        %3355 = vmax.xlane.f32.xlu0 %v3326
        %v3356 = vpop.xlane.xlu0 %3355
        %3357 = vmax.xlane.f32.xlu0 %v3327
        %v3358 = vpop.xlane.xlu0 %3357
        %3359 = vmax.xlane.f32.xlu0 %v3328
        %v3360 = vpop.xlane.xlu0 %3359
        %vm3361 = vcmp.eq.f32.partialorder %v3313, %v3330
        %vm3362 = vcmp.eq.f32.partialorder %v3314, %v3332
        %vm3363 = vcmp.eq.f32.partialorder %v3315, %v3334
        %vm3364 = vcmp.eq.f32.partialorder %v3316, %v3336
        %vm3365 = vcmp.eq.f32.partialorder %v3317, %v3338
        %vm3366 = vcmp.eq.f32.partialorder %v3318, %v3340
        %vm3367 = vcmp.eq.f32.partialorder %v3319, %v3342
        %vm3368 = vcmp.eq.f32.partialorder %v3320, %v3344
        %vm3369 = vcmp.eq.f32.partialorder %v3321, %v3346
        %vm3370 = vcmp.eq.f32.partialorder %v3322, %v3348
        %vm3371 = vcmp.eq.f32.partialorder %v3323, %v3350
        %vm3372 = vcmp.eq.f32.partialorder %v3324, %v3352
        %vm3373 = vcmp.eq.f32.partialorder %v3325, %v3354
        %vm3374 = vcmp.eq.f32.partialorder %v3326, %v3356
        %vm3375 = vcmp.eq.f32.partialorder %v3327, %v3358
        %vm3376 = vcmp.eq.f32.partialorder %v3328, %v3360
        %v3377 = vsel %vm3361, %v904, 21
        %v3378 = vsel %vm3362, %v904, 21
        %v3379 = vsel %vm3363, %v904, 21
        %v3380 = vsel %vm3364, %v904, 21
        %v3381 = vsel %vm3365, %v904, 21
        %v3382 = vsel %vm3366, %v904, 21
        %v3383 = vsel %vm3367, %v904, 21
        %v3384 = vsel %vm3368, %v904, 21
        %v3385 = vsel %vm3369, %v904, 21
        %v3386 = vsel %vm3370, %v904, 21
        %v3387 = vsel %vm3371, %v904, 21
        %v3388 = vsel %vm3372, %v904, 21
        %v3389 = vsel %vm3373, %v904, 21
        %v3390 = vsel %vm3374, %v904, 21
        %v3391 = vsel %vm3375, %v904, 21
        %v3392 = vsel %vm3376, %v904, 21
        %v3393 = vand.u32 %v3377, 65535
        %v3394 = vshra.s32 %v3377, 16
        %v3395 = vcvt.s32.f32 %v3393
        %v3396 = vcvt.s32.f32 %v3394
        %3397 = vmin.xlane.f32.xlu0 %v3396
        %v3398 = vpop.xlane.xlu0 %3397
        %vm3399 = vcmp.eq.f32.partialorder %v3396, %v3398
        %v3400 = vsel %vm3399, %v3395, inf
        %3401 = vmin.xlane.f32.xlu0 %v3400
        %v3402 = vpop.xlane.xlu0 %3401
        %v3403 = vcvt.f32.s32 %v3402
        %v3404 = vcvt.f32.s32 %v3398
        %v3405 = vshll.u32 %v3404, 16
        %v3406 = vadd.s32 %v3405, %v3403
        %v3407 = vand.u32 %v3378, 65535
        %v3408 = vshra.s32 %v3378, 16
        %v3409 = vcvt.s32.f32 %v3407
        %v3410 = vcvt.s32.f32 %v3408
        %3411 = vmin.xlane.f32.xlu0 %v3410
        %v3412 = vpop.xlane.xlu0 %3411
        %vm3413 = vcmp.eq.f32.partialorder %v3410, %v3412
        %v3414 = vsel %vm3413, %v3409, inf
        %3415 = vmin.xlane.f32.xlu0 %v3414
        %v3416 = vpop.xlane.xlu0 %3415
        %v3417 = vcvt.f32.s32 %v3416
        %v3418 = vcvt.f32.s32 %v3412
        %v3419 = vshll.u32 %v3418, 16
        %v3420 = vadd.s32 %v3419, %v3417
        %v3421 = vand.u32 %v3379, 65535
        %v3422 = vshra.s32 %v3379, 16
        %v3423 = vcvt.s32.f32 %v3421
        %v3424 = vcvt.s32.f32 %v3422
        %3425 = vmin.xlane.f32.xlu0 %v3424
        %v3426 = vpop.xlane.xlu0 %3425
        %vm3427 = vcmp.eq.f32.partialorder %v3424, %v3426
        %v3428 = vsel %vm3427, %v3423, inf
        %3429 = vmin.xlane.f32.xlu0 %v3428
        %v3430 = vpop.xlane.xlu0 %3429
        %v3431 = vcvt.f32.s32 %v3430
        %v3432 = vcvt.f32.s32 %v3426
        %v3433 = vshll.u32 %v3432, 16
        %v3434 = vadd.s32 %v3433, %v3431
        %v3435 = vand.u32 %v3380, 65535
        %v3436 = vshra.s32 %v3380, 16
        %v3437 = vcvt.s32.f32 %v3435
        %v3438 = vcvt.s32.f32 %v3436
        %3439 = vmin.xlane.f32.xlu0 %v3438
        %v3440 = vpop.xlane.xlu0 %3439
        %vm3441 = vcmp.eq.f32.partialorder %v3438, %v3440
        %v3442 = vsel %vm3441, %v3437, inf
        %3443 = vmin.xlane.f32.xlu0 %v3442
        %v3444 = vpop.xlane.xlu0 %3443
        %v3445 = vcvt.f32.s32 %v3444
        %v3446 = vcvt.f32.s32 %v3440
        %v3447 = vshll.u32 %v3446, 16
        %v3448 = vadd.s32 %v3447, %v3445
        %v3449 = vand.u32 %v3381, 65535
        %v3450 = vshra.s32 %v3381, 16
        %v3451 = vcvt.s32.f32 %v3449
        %v3452 = vcvt.s32.f32 %v3450
        %3453 = vmin.xlane.f32.xlu0 %v3452
        %v3454 = vpop.xlane.xlu0 %3453
        %vm3455 = vcmp.eq.f32.partialorder %v3452, %v3454
        %v3456 = vsel %vm3455, %v3451, inf
        %3457 = vmin.xlane.f32.xlu0 %v3456
        %v3458 = vpop.xlane.xlu0 %3457
        %v3459 = vcvt.f32.s32 %v3458
        %v3460 = vcvt.f32.s32 %v3454
        %v3461 = vshll.u32 %v3460, 16
        %v3462 = vadd.s32 %v3461, %v3459
        %v3463 = vand.u32 %v3382, 65535
        %v3464 = vshra.s32 %v3382, 16
        %v3465 = vcvt.s32.f32 %v3463
        %v3466 = vcvt.s32.f32 %v3464
        %3467 = vmin.xlane.f32.xlu0 %v3466
        %v3468 = vpop.xlane.xlu0 %3467
        %vm3469 = vcmp.eq.f32.partialorder %v3466, %v3468
        %v3470 = vsel %vm3469, %v3465, inf
        %3471 = vmin.xlane.f32.xlu0 %v3470
        %v3472 = vpop.xlane.xlu0 %3471
        %v3473 = vcvt.f32.s32 %v3472
        %v3474 = vcvt.f32.s32 %v3468
        %v3475 = vshll.u32 %v3474, 16
        %v3476 = vadd.s32 %v3475, %v3473
        %v3477 = vand.u32 %v3383, 65535
        %v3478 = vshra.s32 %v3383, 16
        %v3479 = vcvt.s32.f32 %v3477
        %v3480 = vcvt.s32.f32 %v3478
        %3481 = vmin.xlane.f32.xlu0 %v3480
        %v3482 = vpop.xlane.xlu0 %3481
        %vm3483 = vcmp.eq.f32.partialorder %v3480, %v3482
        %v3484 = vsel %vm3483, %v3479, inf
        %3485 = vmin.xlane.f32.xlu0 %v3484
        %v3486 = vpop.xlane.xlu0 %3485
        %v3487 = vcvt.f32.s32 %v3486
        %v3488 = vcvt.f32.s32 %v3482
        %v3489 = vshll.u32 %v3488, 16
        %v3490 = vadd.s32 %v3489, %v3487
        %v3491 = vand.u32 %v3384, 65535
        %v3492 = vshra.s32 %v3384, 16
        %v3493 = vcvt.s32.f32 %v3491
        %v3494 = vcvt.s32.f32 %v3492
        %3495 = vmin.xlane.f32.xlu0 %v3494
        %v3496 = vpop.xlane.xlu0 %3495
        %vm3497 = vcmp.eq.f32.partialorder %v3494, %v3496
        %v3498 = vsel %vm3497, %v3493, inf
        %3499 = vmin.xlane.f32.xlu0 %v3498
        %v3500 = vpop.xlane.xlu0 %3499
        %v3501 = vcvt.f32.s32 %v3500
        %v3502 = vcvt.f32.s32 %v3496
        %v3503 = vshll.u32 %v3502, 16
        %v3504 = vadd.s32 %v3503, %v3501
        %v3505 = vand.u32 %v3385, 65535
        %v3506 = vshra.s32 %v3385, 16
        %v3507 = vcvt.s32.f32 %v3505
        %v3508 = vcvt.s32.f32 %v3506
        %3509 = vmin.xlane.f32.xlu0 %v3508
        %v3510 = vpop.xlane.xlu0 %3509
        %vm3511 = vcmp.eq.f32.partialorder %v3508, %v3510
        %v3512 = vsel %vm3511, %v3507, inf
        %3513 = vmin.xlane.f32.xlu0 %v3512
        %v3514 = vpop.xlane.xlu0 %3513
        %v3515 = vcvt.f32.s32 %v3514
        %v3516 = vcvt.f32.s32 %v3510
        %v3517 = vshll.u32 %v3516, 16
        %v3518 = vadd.s32 %v3517, %v3515
        %v3519 = vand.u32 %v3386, 65535
        %v3520 = vshra.s32 %v3386, 16
        %v3521 = vcvt.s32.f32 %v3519
        %v3522 = vcvt.s32.f32 %v3520
        %3523 = vmin.xlane.f32.xlu0 %v3522
        %v3524 = vpop.xlane.xlu0 %3523
        %vm3525 = vcmp.eq.f32.partialorder %v3522, %v3524
        %v3526 = vsel %vm3525, %v3521, inf
        %3527 = vmin.xlane.f32.xlu0 %v3526
        %v3528 = vpop.xlane.xlu0 %3527
        %v3529 = vcvt.f32.s32 %v3528
        %v3530 = vcvt.f32.s32 %v3524
        %v3531 = vshll.u32 %v3530, 16
        %v3532 = vadd.s32 %v3531, %v3529
        %v3533 = vand.u32 %v3387, 65535
        %v3534 = vshra.s32 %v3387, 16
        %v3535 = vcvt.s32.f32 %v3533
        %v3536 = vcvt.s32.f32 %v3534
        %3537 = vmin.xlane.f32.xlu0 %v3536
        %v3538 = vpop.xlane.xlu0 %3537
        %vm3539 = vcmp.eq.f32.partialorder %v3536, %v3538
        %v3540 = vsel %vm3539, %v3535, inf
        %3541 = vmin.xlane.f32.xlu0 %v3540
        %v3542 = vpop.xlane.xlu0 %3541
        %v3543 = vcvt.f32.s32 %v3542
        %v3544 = vcvt.f32.s32 %v3538
        %v3545 = vshll.u32 %v3544, 16
        %v3546 = vadd.s32 %v3545, %v3543
        %v3547 = vand.u32 %v3388, 65535
        %v3548 = vshra.s32 %v3388, 16
        %v3549 = vcvt.s32.f32 %v3547
        %v3550 = vcvt.s32.f32 %v3548
        %3551 = vmin.xlane.f32.xlu0 %v3550
        %v3552 = vpop.xlane.xlu0 %3551
        %vm3553 = vcmp.eq.f32.partialorder %v3550, %v3552
        %v3554 = vsel %vm3553, %v3549, inf
        %3555 = vmin.xlane.f32.xlu0 %v3554
        %v3556 = vpop.xlane.xlu0 %3555
        %v3557 = vcvt.f32.s32 %v3556
        %v3558 = vcvt.f32.s32 %v3552
        %v3559 = vshll.u32 %v3558, 16
        %v3560 = vadd.s32 %v3559, %v3557
        %v3561 = vand.u32 %v3389, 65535
        %v3562 = vshra.s32 %v3389, 16
        %v3563 = vcvt.s32.f32 %v3561
        %v3564 = vcvt.s32.f32 %v3562
        %3565 = vmin.xlane.f32.xlu0 %v3564
        %v3566 = vpop.xlane.xlu0 %3565
        %vm3567 = vcmp.eq.f32.partialorder %v3564, %v3566
        %v3568 = vsel %vm3567, %v3563, inf
        %3569 = vmin.xlane.f32.xlu0 %v3568
        %v3570 = vpop.xlane.xlu0 %3569
        %v3571 = vcvt.f32.s32 %v3570
        %v3572 = vcvt.f32.s32 %v3566
        %v3573 = vshll.u32 %v3572, 16
        %v3574 = vadd.s32 %v3573, %v3571
        %v3575 = vand.u32 %v3390, 65535
        %v3576 = vshra.s32 %v3390, 16
        %v3577 = vcvt.s32.f32 %v3575
        %v3578 = vcvt.s32.f32 %v3576
        %3579 = vmin.xlane.f32.xlu0 %v3578
        %v3580 = vpop.xlane.xlu0 %3579
        %vm3581 = vcmp.eq.f32.partialorder %v3578, %v3580
        %v3582 = vsel %vm3581, %v3577, inf
        %3583 = vmin.xlane.f32.xlu0 %v3582
        %v3584 = vpop.xlane.xlu0 %3583
        %v3585 = vcvt.f32.s32 %v3584
        %v3586 = vcvt.f32.s32 %v3580
        %v3587 = vshll.u32 %v3586, 16
        %v3588 = vadd.s32 %v3587, %v3585
        %v3589 = vand.u32 %v3391, 65535
        %v3590 = vshra.s32 %v3391, 16
        %v3591 = vcvt.s32.f32 %v3589
        %v3592 = vcvt.s32.f32 %v3590
        %3593 = vmin.xlane.f32.xlu0 %v3592
        %v3594 = vpop.xlane.xlu0 %3593
        %vm3595 = vcmp.eq.f32.partialorder %v3592, %v3594
        %v3596 = vsel %vm3595, %v3591, inf
        %3597 = vmin.xlane.f32.xlu0 %v3596
        %v3598 = vpop.xlane.xlu0 %3597
        %v3599 = vcvt.f32.s32 %v3598
        %v3600 = vcvt.f32.s32 %v3594
        %v3601 = vshll.u32 %v3600, 16
        %v3602 = vadd.s32 %v3601, %v3599
        %v3603 = vand.u32 %v3392, 65535
        %v3604 = vshra.s32 %v3392, 16
        %v3605 = vcvt.s32.f32 %v3603
        %v3606 = vcvt.s32.f32 %v3604
        %3607 = vmin.xlane.f32.xlu0 %v3606
        %v3608 = vpop.xlane.xlu0 %3607
        %vm3609 = vcmp.eq.f32.partialorder %v3606, %v3608
        %v3610 = vsel %vm3609, %v3605, inf
        %3611 = vmin.xlane.f32.xlu0 %v3610
        %v3612 = vpop.xlane.xlu0 %3611
        %v3613 = vcvt.f32.s32 %v3612
        %v3614 = vcvt.f32.s32 %v3608
        %v3615 = vshll.u32 %v3614, 16
        %v3616 = vadd.s32 %v3615, %v3613
        %v3617 = vcvt.s32.f32 %v3406
        %v3618 = vcvt.s32.f32 %v3420
        %v3619 = vcvt.s32.f32 %v3434
        %v3620 = vcvt.s32.f32 %v3448
        %v3621 = vcvt.s32.f32 %v3462
        %v3622 = vcvt.s32.f32 %v3476
        %v3623 = vcvt.s32.f32 %v3490
        %v3624 = vcvt.s32.f32 %v3504
        %v3625 = vcvt.s32.f32 %v3518
        %v3626 = vcvt.s32.f32 %v3532
        %v3627 = vcvt.s32.f32 %v3546
        %v3628 = vcvt.s32.f32 %v3560
        %v3629 = vcvt.s32.f32 %v3574
        %v3630 = vcvt.s32.f32 %v3588
        %v3631 = vcvt.s32.f32 %v3602
        %v3632 = vcvt.s32.f32 %v3616
        %v3633 = vmul.f32 %v3617, 0.1904762
        %v3634 = vmul.f32 %v3618, 0.1904762
        %v3635 = vmul.f32 %v3619, 0.1904762
        %v3636 = vmul.f32 %v3620, 0.1904762
        %v3637 = vmul.f32 %v3621, 0.1904762
        %v3638 = vmul.f32 %v3622, 0.1904762
        %v3639 = vmul.f32 %v3623, 0.1904762
        %v3640 = vmul.f32 %v3624, 0.1904762
        %v3641 = vmul.f32 %v3625, 0.1904762
        %v3642 = vmul.f32 %v3626, 0.1904762
        %v3643 = vmul.f32 %v3627, 0.1904762
        %v3644 = vmul.f32 %v3628, 0.1904762
        %v3645 = vmul.f32 %v3629, 0.1904762
        %v3646 = vmul.f32 %v3630, 0.1904762
        %v3647 = vmul.f32 %v3631, 0.1904762
        %v3648 = vmul.f32 %v3632, 0.1904762
        %v3649 = vadd.f32 %v3633, 0.0952381
        %v3650 = vadd.f32 %v3634, 0.0952381
        %v3651 = vadd.f32 %v3635, 0.0952381
        %v3652 = vadd.f32 %v3636, 0.0952381
        %v3653 = vadd.f32 %v3637, 0.0952381
        %v3654 = vadd.f32 %v3638, 0.0952381
        %v3655 = vadd.f32 %v3639, 0.0952381
        %v3656 = vadd.f32 %v3640, 0.0952381
        %v3657 = vadd.f32 %v3641, 0.0952381
        %v3658 = vadd.f32 %v3642, 0.0952381
        %v3659 = vadd.f32 %v3643, 0.0952381
        %v3660 = vadd.f32 %v3644, 0.0952381
        %v3661 = vadd.f32 %v3645, 0.0952381
        %v3662 = vadd.f32 %v3646, 0.0952381
        %v3663 = vadd.f32 %v3647, 0.0952381
        %v3664 = vadd.f32 %v3648, 0.0952381
        %v3665 = vsel %vm726, %v508, -1e+30
        %v3666 = vsel %vm726, %v511, -1e+30
        %v3667 = vsel %vm726, %v516, -1e+30
        %v3668 = vsel %vm726, %v519, -1e+30
        %v3669 = vsel %vm726, %v524, -1e+30
        %v3670 = vsel %vm726, %v527, -1e+30
        %v3671 = vsel %vm726, %v532, -1e+30
        %v3672 = vsel %vm726, %v535, -1e+30
        %v3673 = vsel %vm726, %v540, -1e+30
        %v3674 = vsel %vm726, %v543, -1e+30
        %v3675 = vsel %vm726, %v548, -1e+30
        %v3676 = vsel %vm726, %v551, -1e+30
        %v3677 = vsel %vm726, %v556, -1e+30
        %v3678 = vsel %vm726, %v559, -1e+30
        %v3679 = vsel %vm726, %v564, -1e+30
        %v3680 = vsel %vm726, %v567, -1e+30
        %3681 = vmax.xlane.f32.xlu0 %v3665
        %v3682 = vpop.xlane.xlu0 %3681
        %3683 = vmax.xlane.f32.xlu0 %v3666
        %v3684 = vpop.xlane.xlu0 %3683
        %3685 = vmax.xlane.f32.xlu0 %v3667
        %v3686 = vpop.xlane.xlu0 %3685
        %3687 = vmax.xlane.f32.xlu0 %v3668
        %v3688 = vpop.xlane.xlu0 %3687
        %3689 = vmax.xlane.f32.xlu0 %v3669
        %v3690 = vpop.xlane.xlu0 %3689
        %3691 = vmax.xlane.f32.xlu0 %v3670
        %v3692 = vpop.xlane.xlu0 %3691
        %3693 = vmax.xlane.f32.xlu0 %v3671
        %v3694 = vpop.xlane.xlu0 %3693
        %3695 = vmax.xlane.f32.xlu0 %v3672
        %v3696 = vpop.xlane.xlu0 %3695
        %3697 = vmax.xlane.f32.xlu0 %v3673
        %v3698 = vpop.xlane.xlu0 %3697
        %3699 = vmax.xlane.f32.xlu0 %v3674
        %v3700 = vpop.xlane.xlu0 %3699
        %3701 = vmax.xlane.f32.xlu0 %v3675
        %v3702 = vpop.xlane.xlu0 %3701
        %3703 = vmax.xlane.f32.xlu0 %v3676
        %v3704 = vpop.xlane.xlu0 %3703
        %3705 = vmax.xlane.f32.xlu0 %v3677
        %v3706 = vpop.xlane.xlu0 %3705
        %3707 = vmax.xlane.f32.xlu0 %v3678
        %v3708 = vpop.xlane.xlu0 %3707
        %3709 = vmax.xlane.f32.xlu0 %v3679
        %v3710 = vpop.xlane.xlu0 %3709
        %3711 = vmax.xlane.f32.xlu0 %v3680
        %v3712 = vpop.xlane.xlu0 %3711
        %vm3713 = vcmp.eq.f32.partialorder %v3665, %v3682
        %vm3714 = vcmp.eq.f32.partialorder %v3666, %v3684
        %vm3715 = vcmp.eq.f32.partialorder %v3667, %v3686
        %vm3716 = vcmp.eq.f32.partialorder %v3668, %v3688
        %vm3717 = vcmp.eq.f32.partialorder %v3669, %v3690
        %vm3718 = vcmp.eq.f32.partialorder %v3670, %v3692
        %vm3719 = vcmp.eq.f32.partialorder %v3671, %v3694
        %vm3720 = vcmp.eq.f32.partialorder %v3672, %v3696
        %vm3721 = vcmp.eq.f32.partialorder %v3673, %v3698
        %vm3722 = vcmp.eq.f32.partialorder %v3674, %v3700
        %vm3723 = vcmp.eq.f32.partialorder %v3675, %v3702
        %vm3724 = vcmp.eq.f32.partialorder %v3676, %v3704
        %vm3725 = vcmp.eq.f32.partialorder %v3677, %v3706
        %vm3726 = vcmp.eq.f32.partialorder %v3678, %v3708
        %vm3727 = vcmp.eq.f32.partialorder %v3679, %v3710
        %vm3728 = vcmp.eq.f32.partialorder %v3680, %v3712
        %v3729 = vsel %vm3713, %v1257, 21
        %v3730 = vsel %vm3714, %v1257, 21
        %v3731 = vsel %vm3715, %v1257, 21
        %v3732 = vsel %vm3716, %v1257, 21
        %v3733 = vsel %vm3717, %v1257, 21
        %v3734 = vsel %vm3718, %v1257, 21
        %v3735 = vsel %vm3719, %v1257, 21
        %v3736 = vsel %vm3720, %v1257, 21
        %v3737 = vsel %vm3721, %v1257, 21
        %v3738 = vsel %vm3722, %v1257, 21
        %v3739 = vsel %vm3723, %v1257, 21
        %v3740 = vsel %vm3724, %v1257, 21
        %v3741 = vsel %vm3725, %v1257, 21
        %v3742 = vsel %vm3726, %v1257, 21
        %v3743 = vsel %vm3727, %v1257, 21
        %v3744 = vsel %vm3728, %v1257, 21
        %v3745 = vand.u32 %v3729, 65535
        %v3746 = vshra.s32 %v3729, 16
        %v3747 = vcvt.s32.f32 %v3745
        %v3748 = vcvt.s32.f32 %v3746
        %3749 = vmin.xlane.f32.xlu0 %v3748
        %v3750 = vpop.xlane.xlu0 %3749
        %vm3751 = vcmp.eq.f32.partialorder %v3748, %v3750
        %v3752 = vsel %vm3751, %v3747, inf
        %3753 = vmin.xlane.f32.xlu0 %v3752
        %v3754 = vpop.xlane.xlu0 %3753
        %v3755 = vcvt.f32.s32 %v3754
        %v3756 = vcvt.f32.s32 %v3750
        %v3757 = vshll.u32 %v3756, 16
        %v3758 = vadd.s32 %v3757, %v3755
        %v3759 = vand.u32 %v3730, 65535
        %v3760 = vshra.s32 %v3730, 16
        %v3761 = vcvt.s32.f32 %v3759
        %v3762 = vcvt.s32.f32 %v3760
        %3763 = vmin.xlane.f32.xlu0 %v3762
        %v3764 = vpop.xlane.xlu0 %3763
        %vm3765 = vcmp.eq.f32.partialorder %v3762, %v3764
        %v3766 = vsel %vm3765, %v3761, inf
        %3767 = vmin.xlane.f32.xlu0 %v3766
        %v3768 = vpop.xlane.xlu0 %3767
        %v3769 = vcvt.f32.s32 %v3768
        %v3770 = vcvt.f32.s32 %v3764
        %v3771 = vshll.u32 %v3770, 16
        %v3772 = vadd.s32 %v3771, %v3769
        %v3773 = vand.u32 %v3731, 65535
        %v3774 = vshra.s32 %v3731, 16
        %v3775 = vcvt.s32.f32 %v3773
        %v3776 = vcvt.s32.f32 %v3774
        %3777 = vmin.xlane.f32.xlu0 %v3776
        %v3778 = vpop.xlane.xlu0 %3777
        %vm3779 = vcmp.eq.f32.partialorder %v3776, %v3778
        %v3780 = vsel %vm3779, %v3775, inf
        %3781 = vmin.xlane.f32.xlu0 %v3780
        %v3782 = vpop.xlane.xlu0 %3781
        %v3783 = vcvt.f32.s32 %v3782
        %v3784 = vcvt.f32.s32 %v3778
        %v3785 = vshll.u32 %v3784, 16
        %v3786 = vadd.s32 %v3785, %v3783
        %v3787 = vand.u32 %v3732, 65535
        %v3788 = vshra.s32 %v3732, 16
        %v3789 = vcvt.s32.f32 %v3787
        %v3790 = vcvt.s32.f32 %v3788
        %3791 = vmin.xlane.f32.xlu0 %v3790
        %v3792 = vpop.xlane.xlu0 %3791
        %vm3793 = vcmp.eq.f32.partialorder %v3790, %v3792
        %v3794 = vsel %vm3793, %v3789, inf
        %3795 = vmin.xlane.f32.xlu0 %v3794
        %v3796 = vpop.xlane.xlu0 %3795
        %v3797 = vcvt.f32.s32 %v3796
        %v3798 = vcvt.f32.s32 %v3792
        %v3799 = vshll.u32 %v3798, 16
        %v3800 = vadd.s32 %v3799, %v3797
        %v3801 = vand.u32 %v3733, 65535
        %v3802 = vshra.s32 %v3733, 16
        %v3803 = vcvt.s32.f32 %v3801
        %v3804 = vcvt.s32.f32 %v3802
        %3805 = vmin.xlane.f32.xlu0 %v3804
        %v3806 = vpop.xlane.xlu0 %3805
        %vm3807 = vcmp.eq.f32.partialorder %v3804, %v3806
        %v3808 = vsel %vm3807, %v3803, inf
        %3809 = vmin.xlane.f32.xlu0 %v3808
        %v3810 = vpop.xlane.xlu0 %3809
        %v3811 = vcvt.f32.s32 %v3810
        %v3812 = vcvt.f32.s32 %v3806
        %v3813 = vshll.u32 %v3812, 16
        %v3814 = vadd.s32 %v3813, %v3811
        %v3815 = vand.u32 %v3734, 65535
        %v3816 = vshra.s32 %v3734, 16
        %v3817 = vcvt.s32.f32 %v3815
        %v3818 = vcvt.s32.f32 %v3816
        %3819 = vmin.xlane.f32.xlu0 %v3818
        %v3820 = vpop.xlane.xlu0 %3819
        %vm3821 = vcmp.eq.f32.partialorder %v3818, %v3820
        %v3822 = vsel %vm3821, %v3817, inf
        %3823 = vmin.xlane.f32.xlu0 %v3822
        %v3824 = vpop.xlane.xlu0 %3823
        %v3825 = vcvt.f32.s32 %v3824
        %v3826 = vcvt.f32.s32 %v3820
        %v3827 = vshll.u32 %v3826, 16
        %v3828 = vadd.s32 %v3827, %v3825
        %v3829 = vand.u32 %v3735, 65535
        %v3830 = vshra.s32 %v3735, 16
        %v3831 = vcvt.s32.f32 %v3829
        %v3832 = vcvt.s32.f32 %v3830
        %3833 = vmin.xlane.f32.xlu0 %v3832
        %v3834 = vpop.xlane.xlu0 %3833
        %vm3835 = vcmp.eq.f32.partialorder %v3832, %v3834
        %v3836 = vsel %vm3835, %v3831, inf
        %3837 = vmin.xlane.f32.xlu0 %v3836
        %v3838 = vpop.xlane.xlu0 %3837
        %v3839 = vcvt.f32.s32 %v3838
        %v3840 = vcvt.f32.s32 %v3834
        %v3841 = vshll.u32 %v3840, 16
        %v3842 = vadd.s32 %v3841, %v3839
        %v3843 = vand.u32 %v3736, 65535
        %v3844 = vshra.s32 %v3736, 16
        %v3845 = vcvt.s32.f32 %v3843
        %v3846 = vcvt.s32.f32 %v3844
        %3847 = vmin.xlane.f32.xlu0 %v3846
        %v3848 = vpop.xlane.xlu0 %3847
        %vm3849 = vcmp.eq.f32.partialorder %v3846, %v3848
        %v3850 = vsel %vm3849, %v3845, inf
        %3851 = vmin.xlane.f32.xlu0 %v3850
        %v3852 = vpop.xlane.xlu0 %3851
        %v3853 = vcvt.f32.s32 %v3852
        %v3854 = vcvt.f32.s32 %v3848
        %v3855 = vshll.u32 %v3854, 16
        %v3856 = vadd.s32 %v3855, %v3853
        %v3857 = vand.u32 %v3737, 65535
        %v3858 = vshra.s32 %v3737, 16
        %v3859 = vcvt.s32.f32 %v3857
        %v3860 = vcvt.s32.f32 %v3858
        %3861 = vmin.xlane.f32.xlu0 %v3860
        %v3862 = vpop.xlane.xlu0 %3861
        %vm3863 = vcmp.eq.f32.partialorder %v3860, %v3862
        %v3864 = vsel %vm3863, %v3859, inf
        %3865 = vmin.xlane.f32.xlu0 %v3864
        %v3866 = vpop.xlane.xlu0 %3865
        %v3867 = vcvt.f32.s32 %v3866
        %v3868 = vcvt.f32.s32 %v3862
        %v3869 = vshll.u32 %v3868, 16
        %v3870 = vadd.s32 %v3869, %v3867
        %v3871 = vand.u32 %v3738, 65535
        %v3872 = vshra.s32 %v3738, 16
        %v3873 = vcvt.s32.f32 %v3871
        %v3874 = vcvt.s32.f32 %v3872
        %3875 = vmin.xlane.f32.xlu0 %v3874
        %v3876 = vpop.xlane.xlu0 %3875
        %vm3877 = vcmp.eq.f32.partialorder %v3874, %v3876
        %v3878 = vsel %vm3877, %v3873, inf
        %3879 = vmin.xlane.f32.xlu0 %v3878
        %v3880 = vpop.xlane.xlu0 %3879
        %v3881 = vcvt.f32.s32 %v3880
        %v3882 = vcvt.f32.s32 %v3876
        %v3883 = vshll.u32 %v3882, 16
        %v3884 = vadd.s32 %v3883, %v3881
        %v3885 = vand.u32 %v3739, 65535
        %v3886 = vshra.s32 %v3739, 16
        %v3887 = vcvt.s32.f32 %v3885
        %v3888 = vcvt.s32.f32 %v3886
        %3889 = vmin.xlane.f32.xlu0 %v3888
        %v3890 = vpop.xlane.xlu0 %3889
        %vm3891 = vcmp.eq.f32.partialorder %v3888, %v3890
        %v3892 = vsel %vm3891, %v3887, inf
        %3893 = vmin.xlane.f32.xlu0 %v3892
        %v3894 = vpop.xlane.xlu0 %3893
        %v3895 = vcvt.f32.s32 %v3894
        %v3896 = vcvt.f32.s32 %v3890
        %v3897 = vshll.u32 %v3896, 16
        %v3898 = vadd.s32 %v3897, %v3895
        %v3899 = vand.u32 %v3740, 65535
        %v3900 = vshra.s32 %v3740, 16
        %v3901 = vcvt.s32.f32 %v3899
        %v3902 = vcvt.s32.f32 %v3900
        %3903 = vmin.xlane.f32.xlu0 %v3902
        %v3904 = vpop.xlane.xlu0 %3903
        %vm3905 = vcmp.eq.f32.partialorder %v3902, %v3904
        %v3906 = vsel %vm3905, %v3901, inf
        %3907 = vmin.xlane.f32.xlu0 %v3906
        %v3908 = vpop.xlane.xlu0 %3907
        %v3909 = vcvt.f32.s32 %v3908
        %v3910 = vcvt.f32.s32 %v3904
        %v3911 = vshll.u32 %v3910, 16
        %v3912 = vadd.s32 %v3911, %v3909
        %v3913 = vand.u32 %v3741, 65535
        %v3914 = vshra.s32 %v3741, 16
        %v3915 = vcvt.s32.f32 %v3913
        %v3916 = vcvt.s32.f32 %v3914
        %3917 = vmin.xlane.f32.xlu0 %v3916
        %v3918 = vpop.xlane.xlu0 %3917
        %vm3919 = vcmp.eq.f32.partialorder %v3916, %v3918
        %v3920 = vsel %vm3919, %v3915, inf
        %3921 = vmin.xlane.f32.xlu0 %v3920
        %v3922 = vpop.xlane.xlu0 %3921
        %v3923 = vcvt.f32.s32 %v3922
        %v3924 = vcvt.f32.s32 %v3918
        %v3925 = vshll.u32 %v3924, 16
        %v3926 = vadd.s32 %v3925, %v3923
        %v3927 = vand.u32 %v3742, 65535
        %v3928 = vshra.s32 %v3742, 16
        %v3929 = vcvt.s32.f32 %v3927
        %v3930 = vcvt.s32.f32 %v3928
        %3931 = vmin.xlane.f32.xlu0 %v3930
        %v3932 = vpop.xlane.xlu0 %3931
        %vm3933 = vcmp.eq.f32.partialorder %v3930, %v3932
        %v3934 = vsel %vm3933, %v3929, inf
        %3935 = vmin.xlane.f32.xlu0 %v3934
        %v3936 = vpop.xlane.xlu0 %3935
        %v3937 = vcvt.f32.s32 %v3936
        %v3938 = vcvt.f32.s32 %v3932
        %v3939 = vshll.u32 %v3938, 16
        %v3940 = vadd.s32 %v3939, %v3937
        %v3941 = vand.u32 %v3743, 65535
        %v3942 = vshra.s32 %v3743, 16
        %v3943 = vcvt.s32.f32 %v3941
        %v3944 = vcvt.s32.f32 %v3942
        %3945 = vmin.xlane.f32.xlu0 %v3944
        %v3946 = vpop.xlane.xlu0 %3945
        %vm3947 = vcmp.eq.f32.partialorder %v3944, %v3946
        %v3948 = vsel %vm3947, %v3943, inf
        %3949 = vmin.xlane.f32.xlu0 %v3948
        %v3950 = vpop.xlane.xlu0 %3949
        %v3951 = vcvt.f32.s32 %v3950
        %v3952 = vcvt.f32.s32 %v3946
        %v3953 = vshll.u32 %v3952, 16
        %v3954 = vadd.s32 %v3953, %v3951
        %v3955 = vand.u32 %v3744, 65535
        %v3956 = vshra.s32 %v3744, 16
        %v3957 = vcvt.s32.f32 %v3955
        %v3958 = vcvt.s32.f32 %v3956
        %3959 = vmin.xlane.f32.xlu0 %v3958
        %v3960 = vpop.xlane.xlu0 %3959
        %vm3961 = vcmp.eq.f32.partialorder %v3958, %v3960
        %v3962 = vsel %vm3961, %v3957, inf
        %3963 = vmin.xlane.f32.xlu0 %v3962
        %v3964 = vpop.xlane.xlu0 %3963
        %v3965 = vcvt.f32.s32 %v3964
        %v3966 = vcvt.f32.s32 %v3960
        %v3967 = vshll.u32 %v3966, 16
        %v3968 = vadd.s32 %v3967, %v3965
        %v3969 = vcvt.s32.f32 %v3758
        %v3970 = vcvt.s32.f32 %v3772
        %v3971 = vcvt.s32.f32 %v3786
        %v3972 = vcvt.s32.f32 %v3800
        %v3973 = vcvt.s32.f32 %v3814
        %v3974 = vcvt.s32.f32 %v3828
        %v3975 = vcvt.s32.f32 %v3842
        %v3976 = vcvt.s32.f32 %v3856
        %v3977 = vcvt.s32.f32 %v3870
        %v3978 = vcvt.s32.f32 %v3884
        %v3979 = vcvt.s32.f32 %v3898
        %v3980 = vcvt.s32.f32 %v3912
        %v3981 = vcvt.s32.f32 %v3926
        %v3982 = vcvt.s32.f32 %v3940
        %v3983 = vcvt.s32.f32 %v3954
        %v3984 = vcvt.s32.f32 %v3968
        %v3985 = vmul.f32 %v3969, 0.1904762
        %v3986 = vmul.f32 %v3970, 0.1904762
        %v3987 = vmul.f32 %v3971, 0.1904762
        %v3988 = vmul.f32 %v3972, 0.1904762
        %v3989 = vmul.f32 %v3973, 0.1904762
        %v3990 = vmul.f32 %v3974, 0.1904762
        %v3991 = vmul.f32 %v3975, 0.1904762
        %v3992 = vmul.f32 %v3976, 0.1904762
        %v3993 = vmul.f32 %v3977, 0.1904762
        %v3994 = vmul.f32 %v3978, 0.1904762
        %v3995 = vmul.f32 %v3979, 0.1904762
        %v3996 = vmul.f32 %v3980, 0.1904762
        %v3997 = vmul.f32 %v3981, 0.1904762
        %v3998 = vmul.f32 %v3982, 0.1904762
        %v3999 = vmul.f32 %v3983, 0.1904762
        %v4000 = vmul.f32 %v3984, 0.1904762
        %v4001 = vadd.f32 %v3985, 0.0952381
        %v4002 = vadd.f32 %v3986, 0.0952381
        %v4003 = vadd.f32 %v3987, 0.0952381
        %v4004 = vadd.f32 %v3988, 0.0952381
        %v4005 = vadd.f32 %v3989, 0.0952381
        %v4006 = vadd.f32 %v3990, 0.0952381
        %v4007 = vadd.f32 %v3991, 0.0952381
        %v4008 = vadd.f32 %v3992, 0.0952381
        %v4009 = vadd.f32 %v3993, 0.0952381
        %v4010 = vadd.f32 %v3994, 0.0952381
        %v4011 = vadd.f32 %v3995, 0.0952381
        %v4012 = vadd.f32 %v3996, 0.0952381
        %v4013 = vadd.f32 %v3997, 0.0952381
        %v4014 = vadd.f32 %v3998, 0.0952381
        %v4015 = vadd.f32 %v3999, 0.0952381
        %v4016 = vadd.f32 %v4000, 0.0952381
        %v4017 = vmul.f32 %v3282, 2.0
        %v4018 = vmul.f32 %v3284, 2.0
        %v4019 = vmul.f32 %v3286, 2.0
        %v4020 = vmul.f32 %v3288, 2.0
        %v4021 = vmul.f32 %v3290, 2.0
        %v4022 = vmul.f32 %v3292, 2.0
        %v4023 = vmul.f32 %v3294, 2.0
        %v4024 = vmul.f32 %v3296, 2.0
        %v4025 = vmul.f32 %v3298, 2.0
        %v4026 = vmul.f32 %v3300, 2.0
        %v4027 = vmul.f32 %v3302, 2.0
        %v4028 = vmul.f32 %v3304, 2.0
        %v4029 = vmul.f32 %v3306, 2.0
        %v4030 = vmul.f32 %v3308, 2.0
        %v4031 = vmul.f32 %v3310, 2.0
        %v4032 = vmul.f32 %v3312, 2.0
        %v4033 = vsub.f32 %v4017, 1.0
        %v4034 = vsub.f32 %v4018, 1.0
        %v4035 = vsub.f32 %v4019, 1.0
        %v4036 = vsub.f32 %v4020, 1.0
        %v4037 = vsub.f32 %v4021, 1.0
        %v4038 = vsub.f32 %v4022, 1.0
        %v4039 = vsub.f32 %v4023, 1.0
        %v4040 = vsub.f32 %v4024, 1.0
        %v4041 = vsub.f32 %v4025, 1.0
        %v4042 = vsub.f32 %v4026, 1.0
        %v4043 = vsub.f32 %v4027, 1.0
        %v4044 = vsub.f32 %v4028, 1.0
        %v4045 = vsub.f32 %v4029, 1.0
        %v4046 = vsub.f32 %v4030, 1.0
        %v4047 = vsub.f32 %v4031, 1.0
        %v4048 = vsub.f32 %v4032, 1.0
        %v4049 = vmul.f32 %v4033, 0.1904762
        %v4050 = vmul.f32 %v4034, 0.1904762
        %v4051 = vmul.f32 %v4035, 0.1904762
        %v4052 = vmul.f32 %v4036, 0.1904762
        %v4053 = vmul.f32 %v4037, 0.1904762
        %v4054 = vmul.f32 %v4038, 0.1904762
        %v4055 = vmul.f32 %v4039, 0.1904762
        %v4056 = vmul.f32 %v4040, 0.1904762
        %v4057 = vmul.f32 %v4041, 0.1904762
        %v4058 = vmul.f32 %v4042, 0.1904762
        %v4059 = vmul.f32 %v4043, 0.1904762
        %v4060 = vmul.f32 %v4044, 0.1904762
        %v4061 = vmul.f32 %v4045, 0.1904762
        %v4062 = vmul.f32 %v4046, 0.1904762
        %v4063 = vmul.f32 %v4047, 0.1904762
        %v4064 = vmul.f32 %v4048, 0.1904762
        %v4065 = vadd.f32 %v4049, %v3649
        %v4066 = vadd.f32 %v4050, %v3650
        %v4067 = vadd.f32 %v4051, %v3651
        %v4068 = vadd.f32 %v4052, %v3652
        %v4069 = vadd.f32 %v4053, %v3653
        %v4070 = vadd.f32 %v4054, %v3654
        %v4071 = vadd.f32 %v4055, %v3655
        %v4072 = vadd.f32 %v4056, %v3656
        %v4073 = vadd.f32 %v4057, %v3657
        %v4074 = vadd.f32 %v4058, %v3658
        %v4075 = vadd.f32 %v4059, %v3659
        %v4076 = vadd.f32 %v4060, %v3660
        %v4077 = vadd.f32 %v4061, %v3661
        %v4078 = vadd.f32 %v4062, %v3662
        %v4079 = vadd.f32 %v4063, %v3663
        %v4080 = vadd.f32 %v4064, %v3664
        %v4081 = vmax.f32 %v4065, 0.0
        %v4082 = vmax.f32 %v4066, 0.0
        %v4083 = vmax.f32 %v4067, 0.0
        %v4084 = vmax.f32 %v4068, 0.0
        %v4085 = vmax.f32 %v4069, 0.0
        %v4086 = vmax.f32 %v4070, 0.0
        %v4087 = vmax.f32 %v4071, 0.0
        %v4088 = vmax.f32 %v4072, 0.0
        %v4089 = vmax.f32 %v4073, 0.0
        %v4090 = vmax.f32 %v4074, 0.0
        %v4091 = vmax.f32 %v4075, 0.0
        %v4092 = vmax.f32 %v4076, 0.0
        %v4093 = vmax.f32 %v4077, 0.0
        %v4094 = vmax.f32 %v4078, 0.0
        %v4095 = vmax.f32 %v4079, 0.0
        %v4096 = vmax.f32 %v4080, 0.0
        %v4097 = vmin.f32 %v4081, 4.0
        %v4098 = vmin.f32 %v4082, 4.0
        %v4099 = vmin.f32 %v4083, 4.0
        %v4100 = vmin.f32 %v4084, 4.0
        %v4101 = vmin.f32 %v4085, 4.0
        %v4102 = vmin.f32 %v4086, 4.0
        %v4103 = vmin.f32 %v4087, 4.0
        %v4104 = vmin.f32 %v4088, 4.0
        %v4105 = vmin.f32 %v4089, 4.0
        %v4106 = vmin.f32 %v4090, 4.0
        %v4107 = vmin.f32 %v4091, 4.0
        %v4108 = vmin.f32 %v4092, 4.0
        %v4109 = vmin.f32 %v4093, 4.0
        %v4110 = vmin.f32 %v4094, 4.0
        %v4111 = vmin.f32 %v4095, 4.0
        %v4112 = vmin.f32 %v4096, 4.0
        %v4113 = vmul.f32 %v4097, 33.0
        %v4114 = vmul.f32 %v4098, 33.0
        %v4115 = vmul.f32 %v4099, 33.0
        %v4116 = vmul.f32 %v4100, 33.0
        %v4117 = vmul.f32 %v4101, 33.0
        %v4118 = vmul.f32 %v4102, 33.0
        %v4119 = vmul.f32 %v4103, 33.0
        %v4120 = vmul.f32 %v4104, 33.0
        %v4121 = vmul.f32 %v4105, 33.0
        %v4122 = vmul.f32 %v4106, 33.0
        %v4123 = vmul.f32 %v4107, 33.0
        %v4124 = vmul.f32 %v4108, 33.0
        %v4125 = vmul.f32 %v4109, 33.0
        %v4126 = vmul.f32 %v4110, 33.0
        %v4127 = vmul.f32 %v4111, 33.0
        %v4128 = vmul.f32 %v4112, 33.0
        %v4129 = vadd.f32 %v4049, %v4001
        %v4130 = vadd.f32 %v4050, %v4002
        %v4131 = vadd.f32 %v4051, %v4003
        %v4132 = vadd.f32 %v4052, %v4004
        %v4133 = vadd.f32 %v4053, %v4005
        %v4134 = vadd.f32 %v4054, %v4006
        %v4135 = vadd.f32 %v4055, %v4007
        %v4136 = vadd.f32 %v4056, %v4008
        %v4137 = vadd.f32 %v4057, %v4009
        %v4138 = vadd.f32 %v4058, %v4010
        %v4139 = vadd.f32 %v4059, %v4011
        %v4140 = vadd.f32 %v4060, %v4012
        %v4141 = vadd.f32 %v4061, %v4013
        %v4142 = vadd.f32 %v4062, %v4014
        %v4143 = vadd.f32 %v4063, %v4015
        %v4144 = vadd.f32 %v4064, %v4016
        %v4145 = vmax.f32 %v4129, 0.0
        %v4146 = vmax.f32 %v4130, 0.0
        %v4147 = vmax.f32 %v4131, 0.0
        %v4148 = vmax.f32 %v4132, 0.0
        %v4149 = vmax.f32 %v4133, 0.0
        %v4150 = vmax.f32 %v4134, 0.0
        %v4151 = vmax.f32 %v4135, 0.0
        %v4152 = vmax.f32 %v4136, 0.0
        %v4153 = vmax.f32 %v4137, 0.0
        %v4154 = vmax.f32 %v4138, 0.0
        %v4155 = vmax.f32 %v4139, 0.0
        %v4156 = vmax.f32 %v4140, 0.0
        %v4157 = vmax.f32 %v4141, 0.0
        %v4158 = vmax.f32 %v4142, 0.0
        %v4159 = vmax.f32 %v4143, 0.0
        %v4160 = vmax.f32 %v4144, 0.0
        %v4161 = vmin.f32 %v4145, 4.0
        %v4162 = vmin.f32 %v4146, 4.0
        %v4163 = vmin.f32 %v4147, 4.0
        %v4164 = vmin.f32 %v4148, 4.0
        %v4165 = vmin.f32 %v4149, 4.0
        %v4166 = vmin.f32 %v4150, 4.0
        %v4167 = vmin.f32 %v4151, 4.0
        %v4168 = vmin.f32 %v4152, 4.0
        %v4169 = vmin.f32 %v4153, 4.0
        %v4170 = vmin.f32 %v4154, 4.0
        %v4171 = vmin.f32 %v4155, 4.0
        %v4172 = vmin.f32 %v4156, 4.0
        %v4173 = vmin.f32 %v4157, 4.0
        %v4174 = vmin.f32 %v4158, 4.0
        %v4175 = vmin.f32 %v4159, 4.0
        %v4176 = vmin.f32 %v4160, 4.0
        %v4177 = vmul.f32 %v4161, 23.0
        %v4178 = vmul.f32 %v4162, 23.0
        %v4179 = vmul.f32 %v4163, 23.0
        %v4180 = vmul.f32 %v4164, 23.0
        %v4181 = vmul.f32 %v4165, 23.0
        %v4182 = vmul.f32 %v4166, 23.0
        %v4183 = vmul.f32 %v4167, 23.0
        %v4184 = vmul.f32 %v4168, 23.0
        %v4185 = vmul.f32 %v4169, 23.0
        %v4186 = vmul.f32 %v4170, 23.0
        %v4187 = vmul.f32 %v4171, 23.0
        %v4188 = vmul.f32 %v4172, 23.0
        %v4189 = vmul.f32 %v4173, 23.0
        %v4190 = vmul.f32 %v4174, 23.0
        %v4191 = vmul.f32 %v4175, 23.0
        %v4192 = vmul.f32 %v4176, 23.0
        %v4193 = vsub.f32 %v4017, 0.5
        %v4194 = vsub.f32 %v4018, 0.5
        %v4195 = vsub.f32 %v4019, 0.5
        %v4196 = vsub.f32 %v4020, 0.5
        %v4197 = vsub.f32 %v4021, 0.5
        %v4198 = vsub.f32 %v4022, 0.5
        %v4199 = vsub.f32 %v4023, 0.5
        %v4200 = vsub.f32 %v4024, 0.5
        %v4201 = vsub.f32 %v4025, 0.5
        %v4202 = vsub.f32 %v4026, 0.5
        %v4203 = vsub.f32 %v4027, 0.5
        %v4204 = vsub.f32 %v4028, 0.5
        %v4205 = vsub.f32 %v4029, 0.5
        %v4206 = vsub.f32 %v4030, 0.5
        %v4207 = vsub.f32 %v4031, 0.5
        %v4208 = vsub.f32 %v4032, 0.5
        %v4209 = vadd.f32 %v4193, %v703
        %v4210 = vadd.f32 %v4194, %v704
        %v4211 = vadd.f32 %v4195, %v705
        %v4212 = vadd.f32 %v4196, %v706
        %v4213 = vadd.f32 %v4197, %v707
        %v4214 = vadd.f32 %v4198, %v708
        %v4215 = vadd.f32 %v4199, %v709
        %v4216 = vadd.f32 %v4200, %v710
        %v4217 = vadd.f32 %v4201, %v711
        %v4218 = vadd.f32 %v4202, %v712
        %v4219 = vadd.f32 %v4203, %v713
        %v4220 = vadd.f32 %v4204, %v714
        %v4221 = vadd.f32 %v4205, %v715
        %v4222 = vadd.f32 %v4206, %v716
        %v4223 = vadd.f32 %v4207, %v717
        %v4224 = vadd.f32 %v4208, %v718
        %v4225 = vmul.f32 %v4209, 8.0
        %v4226 = vmul.f32 %v4210, 8.0
        %v4227 = vmul.f32 %v4211, 8.0
        %v4228 = vmul.f32 %v4212, 8.0
        %v4229 = vmul.f32 %v4213, 8.0
        %v4230 = vmul.f32 %v4214, 8.0
        %v4231 = vmul.f32 %v4215, 8.0
        %v4232 = vmul.f32 %v4216, 8.0
        %v4233 = vmul.f32 %v4217, 8.0
        %v4234 = vmul.f32 %v4218, 8.0
        %v4235 = vmul.f32 %v4219, 8.0
        %v4236 = vmul.f32 %v4220, 8.0
        %v4237 = vmul.f32 %v4221, 8.0
        %v4238 = vmul.f32 %v4222, 8.0
        %v4239 = vmul.f32 %v4223, 8.0
        %v4240 = vmul.f32 %v4224, 8.0
        %4257 = vrot.lane.b32.xlu0 %v4177, 107
        %v4258 = vpop.permute.xlu0 %4257
        %4259 = vrot.lane.b32.xlu0 %v4178, 107
        %v4260 = vpop.permute.xlu0 %4259
        %4261 = vrot.lane.b32.xlu0 %v4179, 107
        %v4262 = vpop.permute.xlu0 %4261
        %4263 = vrot.lane.b32.xlu0 %v4180, 107
        %v4264 = vpop.permute.xlu0 %4263
        %4265 = vrot.lane.b32.xlu0 %v4181, 107
        %v4266 = vpop.permute.xlu0 %4265
        %4267 = vrot.lane.b32.xlu0 %v4182, 107
        %v4268 = vpop.permute.xlu0 %4267
        %4269 = vrot.lane.b32.xlu0 %v4183, 107
        %v4270 = vpop.permute.xlu0 %4269
        %4271 = vrot.lane.b32.xlu0 %v4184, 107
        %v4272 = vpop.permute.xlu0 %4271
        %4273 = vrot.lane.b32.xlu0 %v4185, 107
        %v4274 = vpop.permute.xlu0 %4273
        %4275 = vrot.lane.b32.xlu0 %v4186, 107
        %v4276 = vpop.permute.xlu0 %4275
        %4277 = vrot.lane.b32.xlu0 %v4187, 107
        %v4278 = vpop.permute.xlu0 %4277
        %4279 = vrot.lane.b32.xlu0 %v4188, 107
        %v4280 = vpop.permute.xlu0 %4279
        %4281 = vrot.lane.b32.xlu0 %v4189, 107
        %v4282 = vpop.permute.xlu0 %4281
        %4283 = vrot.lane.b32.xlu0 %v4190, 107
        %v4284 = vpop.permute.xlu0 %4283
        %4285 = vrot.lane.b32.xlu0 %v4191, 107
        %v4286 = vpop.permute.xlu0 %4285
        %4287 = vrot.lane.b32.xlu0 %v4192, 107
        %v4288 = vpop.permute.xlu0 %4287
        %4321 = vrot.lane.b32.xlu0 %v3282, 86
        %v4322 = vpop.permute.xlu0 %4321
        %4323 = vrot.lane.b32.xlu0 %v3284, 86
        %v4324 = vpop.permute.xlu0 %4323
        %4325 = vrot.lane.b32.xlu0 %v3286, 86
        %v4326 = vpop.permute.xlu0 %4325
        %4327 = vrot.lane.b32.xlu0 %v3288, 86
        %v4328 = vpop.permute.xlu0 %4327
        %4329 = vrot.lane.b32.xlu0 %v3290, 86
        %v4330 = vpop.permute.xlu0 %4329
        %4331 = vrot.lane.b32.xlu0 %v3292, 86
        %v4332 = vpop.permute.xlu0 %4331
        %4333 = vrot.lane.b32.xlu0 %v3294, 86
        %v4334 = vpop.permute.xlu0 %4333
        %4335 = vrot.lane.b32.xlu0 %v3296, 86
        %v4336 = vpop.permute.xlu0 %4335
        %4337 = vrot.lane.b32.xlu0 %v3298, 86
        %v4338 = vpop.permute.xlu0 %4337
        %4339 = vrot.lane.b32.xlu0 %v3300, 86
        %v4340 = vpop.permute.xlu0 %4339
        %4341 = vrot.lane.b32.xlu0 %v3302, 86
        %v4342 = vpop.permute.xlu0 %4341
        %4343 = vrot.lane.b32.xlu0 %v3304, 86
        %v4344 = vpop.permute.xlu0 %4343
        %4345 = vrot.lane.b32.xlu0 %v3306, 86
        %v4346 = vpop.permute.xlu0 %4345
        %4347 = vrot.lane.b32.xlu0 %v3308, 86
        %v4348 = vpop.permute.xlu0 %4347
        %4349 = vrot.lane.b32.xlu0 %v3310, 86
        %v4350 = vpop.permute.xlu0 %4349
        %4351 = vrot.lane.b32.xlu0 %v3312, 86
        %v4352 = vpop.permute.xlu0 %4351
        %v4369 = vsel %vm1898, %v4225, %v4113
        %v4370 = vsel %vm1898, %v4226, %v4114
        %v4371 = vsel %vm1898, %v4227, %v4115
        %v4372 = vsel %vm1898, %v4228, %v4116
        %v4373 = vsel %vm1898, %v4229, %v4117
        %v4374 = vsel %vm1898, %v4230, %v4118
        %v4375 = vsel %vm1898, %v4231, %v4119
        %v4376 = vsel %vm1898, %v4232, %v4120
        %v4377 = vsel %vm1898, %v4233, %v4121
        %v4378 = vsel %vm1898, %v4234, %v4122
        %v4379 = vsel %vm1898, %v4235, %v4123
        %v4380 = vsel %vm1898, %v4236, %v4124
        %v4381 = vsel %vm1898, %v4237, %v4125
        %v4382 = vsel %vm1898, %v4238, %v4126
        %v4383 = vsel %vm1898, %v4239, %v4127
        %v4384 = vsel %vm1898, %v4240, %v4128
        %v4385 = vsel %vm1915, %v4369, %v4258
        %v4386 = vsel %vm1915, %v4370, %v4260
        %v4387 = vsel %vm1915, %v4371, %v4262
        %v4388 = vsel %vm1915, %v4372, %v4264
        %v4389 = vsel %vm1915, %v4373, %v4266
        %v4390 = vsel %vm1915, %v4374, %v4268
        %v4391 = vsel %vm1915, %v4375, %v4270
        %v4392 = vsel %vm1915, %v4376, %v4272
        %v4393 = vsel %vm1915, %v4377, %v4274
        %v4394 = vsel %vm1915, %v4378, %v4276
        %v4395 = vsel %vm1915, %v4379, %v4278
        %v4396 = vsel %vm1915, %v4380, %v4280
        %v4397 = vsel %vm1915, %v4381, %v4282
        %v4398 = vsel %vm1915, %v4382, %v4284
        %v4399 = vsel %vm1915, %v4383, %v4286
        %v4400 = vsel %vm1915, %v4384, %v4288
        %v4401 = vsel %vm1932, %v4385, %v4322
        %v4402 = vsel %vm1932, %v4386, %v4324
        %v4403 = vsel %vm1932, %v4387, %v4326
        %v4404 = vsel %vm1932, %v4388, %v4328
        %v4405 = vsel %vm1932, %v4389, %v4330
        %v4406 = vsel %vm1932, %v4390, %v4332
        %v4407 = vsel %vm1932, %v4391, %v4334
        %v4408 = vsel %vm1932, %v4392, %v4336
        %v4409 = vsel %vm1932, %v4393, %v4338
        %v4410 = vsel %vm1932, %v4394, %v4340
        %v4411 = vsel %vm1932, %v4395, %v4342
        %v4412 = vsel %vm1932, %v4396, %v4344
        %v4413 = vsel %vm1932, %v4397, %v4346
        %v4414 = vsel %vm1932, %v4398, %v4348
        %v4415 = vsel %vm1932, %v4399, %v4350
        %v4416 = vsel %vm1932, %v4400, %v4352
        %s4417 = scalar_lea.vmem %s252, 256 [#allocation7]
        %4418 = vst.msk [vmem:[%s4417] sm:$0xff] %vm1949, %v4401
        %4419 = vst.msk [vmem:[%s4417 + $0x8] sm:$0xff] %vm1949, %v4402
        %4420 = vst.msk [vmem:[%s4417 + $0x10] sm:$0xff] %vm1949, %v4403
        %4421 = vst.msk [vmem:[%s4417 + $0x18] sm:$0xff] %vm1949, %v4404
        %4422 = vst.msk [vmem:[%s4417 + $0x20] sm:$0xff] %vm1949, %v4405
        %4423 = vst.msk [vmem:[%s4417 + $0x28] sm:$0xff] %vm1949, %v4406
        %4424 = vst.msk [vmem:[%s4417 + $0x30] sm:$0xff] %vm1949, %v4407
        %4425 = vst.msk [vmem:[%s4417 + $0x38] sm:$0xff] %vm1949, %v4408
        %4426 = vst.msk [vmem:[%s4417 + $0x40] sm:$0xff] %vm1949, %v4409
        %4427 = vst.msk [vmem:[%s4417 + $0x48] sm:$0xff] %vm1949, %v4410
        %4428 = vst.msk [vmem:[%s4417 + $0x50] sm:$0xff] %vm1949, %v4411
        %4429 = vst.msk [vmem:[%s4417 + $0x58] sm:$0xff] %vm1949, %v4412
        %4430 = vst.msk [vmem:[%s4417 + $0x60] sm:$0xff] %vm1949, %v4413
        %4431 = vst.msk [vmem:[%s4417 + $0x68] sm:$0xff] %vm1949, %v4414
        %4432 = vst.msk [vmem:[%s4417 + $0x70] sm:$0xff] %vm1949, %v4415
        %4433 = vst.msk [vmem:[%s4417 + $0x78] sm:$0xff] %vm1949, %v4416
        %s4434 = sand.u32 %s112, 1
        %s4435 = sand.u32 %s112, 1
        %s4436 = smul.addr %s4435, 384
        %s4437 = scalar_lea.vmem [#allocation6], %s4436
        %s4438 = sand.u32 %s140, 1
        %s4439 = sand.u32 %s140, 1
        %s4440 = smul.addr %s4439, 384
        %s4441 = scalar_lea.vmem [#allocation7], %s4440
        // Predicated region
        $region41: #{tpu_custom_call.1} parent=31 // pred_check
          %p4442 = pneg %p122
        $region42: #{tpu_custom_call.1} parent=31 // pred_check_branch
          %4444 = sbr.rel (%p4442) target = $region44
        $region43: #{tpu_custom_call.1} parent=31 // pred_region
          %s4445 = smul.u32 16, %s25
          %s4446 = smul.addr %s24, 96
          %s4447 = sadd.s32 %s4445, %s4446
          %s4448 = smul.addr %s4447, 8
          %s4449 = scalar_lea.vmem %s3, %s4448
          // Predicated region
          $region45: #{tpu_custom_call.1} parent=43 // pred_check
            _
          $region46: #{tpu_custom_call.1} parent=43 // pred_check_branch
            %4451 = sbr.rel (0) target = $region48
          $region47: #{tpu_custom_call.1} parent=43 // pred_region
            // Predicated region
            $region49: #{tpu_custom_call.1} parent=47 // pred_check
              _
            $region50: #{tpu_custom_call.1} parent=47 // pred_check_branch
              %4453 = sbr.rel (0) target = $region52
            $region51: #{tpu_custom_call.1} parent=47 // pred_region
              // Predicated region
              $region64: #{tpu_custom_call.1} parent=51 // pred_check
                _
              $region65: #{tpu_custom_call.1} parent=51 // pred_check_branch
                %4562 = sbr.rel (0) target = $region67
              $region66: #{tpu_custom_call.1} parent=51 // pred_region
                loop: start=0, step=1, limit=1
                $region68: #{tpu_custom_call.1} parent=66 // loop_pre_header
                  _
                $region69: #{tpu_custom_call.1} parent=66 // loop_header
                  %s4564 = sphi 0, %s4568
                  %p4565 = scmp.ge.s32.totalorder %s4564, 1
                  %s4569 = sphi %s4437, %s4437
                  %s4570 = sphi %s4449, %s4449
                $region70: #{tpu_custom_call.1} parent=66 // loop_header_branch
                  %4567 = sbr.rel (%p4565) target = $region74
                $region71: #{tpu_custom_call.1} parent=66 // loop_body
                  %v4571 = vld [vmem:[%s4569] sm:$0xff]
                  %4572 = vst [vmem:[%s4570] sm:$0xff] %v4571
                  %v4573 = vld [vmem:[%s4569 + $0x8] sm:$0xff]
                  %4574 = vst [vmem:[%s4570 + $0x8] sm:$0xff] %v4573
                  %v4575 = vld [vmem:[%s4569 + $0x10] sm:$0xff]
                  %4576 = vst [vmem:[%s4570 + $0x10] sm:$0xff] %v4575
                  %v4577 = vld [vmem:[%s4569 + $0x18] sm:$0xff]
                  %4578 = vst [vmem:[%s4570 + $0x18] sm:$0xff] %v4577
                  %v4579 = vld [vmem:[%s4569 + $0x20] sm:$0xff]
                  %4580 = vst [vmem:[%s4570 + $0x20] sm:$0xff] %v4579
                  %v4581 = vld [vmem:[%s4569 + $0x28] sm:$0xff]
                  %4582 = vst [vmem:[%s4570 + $0x28] sm:$0xff] %v4581
                  %v4583 = vld [vmem:[%s4569 + $0x30] sm:$0xff]
                  %4584 = vst [vmem:[%s4570 + $0x30] sm:$0xff] %v4583
                  %v4585 = vld [vmem:[%s4569 + $0x38] sm:$0xff]
                  %4586 = vst [vmem:[%s4570 + $0x38] sm:$0xff] %v4585
                  %v4587 = vld [vmem:[%s4569 + $0x40] sm:$0xff]
                  %4588 = vst [vmem:[%s4570 + $0x40] sm:$0xff] %v4587
                  %v4589 = vld [vmem:[%s4569 + $0x48] sm:$0xff]
                  %4590 = vst [vmem:[%s4570 + $0x48] sm:$0xff] %v4589
                  %v4591 = vld [vmem:[%s4569 + $0x50] sm:$0xff]
                  %4592 = vst [vmem:[%s4570 + $0x50] sm:$0xff] %v4591
                  %v4593 = vld [vmem:[%s4569 + $0x58] sm:$0xff]
                  %4594 = vst [vmem:[%s4570 + $0x58] sm:$0xff] %v4593
                  %v4595 = vld [vmem:[%s4569 + $0x60] sm:$0xff]
                  %4596 = vst [vmem:[%s4570 + $0x60] sm:$0xff] %v4595
                  %v4597 = vld [vmem:[%s4569 + $0x68] sm:$0xff]
                  %4598 = vst [vmem:[%s4570 + $0x68] sm:$0xff] %v4597
                  %v4599 = vld [vmem:[%s4569 + $0x70] sm:$0xff]
                  %4600 = vst [vmem:[%s4570 + $0x70] sm:$0xff] %v4599
                  %v4601 = vld [vmem:[%s4569 + $0x78] sm:$0xff]
                  %4602 = vst [vmem:[%s4570 + $0x78] sm:$0xff] %v4601
                  %v4603 = vld [vmem:[%s4569 + $0x80] sm:$0xff]
                  %4604 = vst [vmem:[%s4570 + $0x100] sm:$0xff] %v4603
                  %v4605 = vld [vmem:[%s4569 + $0x88] sm:$0xff]
                  %4606 = vst [vmem:[%s4570 + $0x108] sm:$0xff] %v4605
                  %v4607 = vld [vmem:[%s4569 + $0x90] sm:$0xff]
                  %4608 = vst [vmem:[%s4570 + $0x110] sm:$0xff] %v4607
                  %v4609 = vld [vmem:[%s4569 + $0x98] sm:$0xff]
                  %4610 = vst [vmem:[%s4570 + $0x118] sm:$0xff] %v4609
                  %v4611 = vld [vmem:[%s4569 + $0xa0] sm:$0xff]
                  %4612 = vst [vmem:[%s4570 + $0x120] sm:$0xff] %v4611
                  %v4613 = vld [vmem:[%s4569 + $0xa8] sm:$0xff]
                  %4614 = vst [vmem:[%s4570 + $0x128] sm:$0xff] %v4613
                  %v4615 = vld [vmem:[%s4569 + $0xb0] sm:$0xff]
                  %4616 = vst [vmem:[%s4570 + $0x130] sm:$0xff] %v4615
                  %v4617 = vld [vmem:[%s4569 + $0xb8] sm:$0xff]
                  %4618 = vst [vmem:[%s4570 + $0x138] sm:$0xff] %v4617
                  %v4619 = vld [vmem:[%s4569 + $0xc0] sm:$0xff]
                  %4620 = vst [vmem:[%s4570 + $0x140] sm:$0xff] %v4619
                  %v4621 = vld [vmem:[%s4569 + $0xc8] sm:$0xff]
                  %4622 = vst [vmem:[%s4570 + $0x148] sm:$0xff] %v4621
                  %v4623 = vld [vmem:[%s4569 + $0xd0] sm:$0xff]
                  %4624 = vst [vmem:[%s4570 + $0x150] sm:$0xff] %v4623
                  %v4625 = vld [vmem:[%s4569 + $0xd8] sm:$0xff]
                  %4626 = vst [vmem:[%s4570 + $0x158] sm:$0xff] %v4625
                  %v4627 = vld [vmem:[%s4569 + $0xe0] sm:$0xff]
                  %4628 = vst [vmem:[%s4570 + $0x160] sm:$0xff] %v4627
                  %v4629 = vld [vmem:[%s4569 + $0xe8] sm:$0xff]
                  %4630 = vst [vmem:[%s4570 + $0x168] sm:$0xff] %v4629
                  %v4631 = vld [vmem:[%s4569 + $0xf0] sm:$0xff]
                  %4632 = vst [vmem:[%s4570 + $0x170] sm:$0xff] %v4631
                  %v4633 = vld [vmem:[%s4569 + $0xf8] sm:$0xff]
                  %4634 = vst [vmem:[%s4570 + $0x178] sm:$0xff] %v4633
                  %v4635 = vld [vmem:[%s4569 + $0x100] sm:$0xff]
                  %4636 = vst [vmem:[%s4570 + $0x200] sm:$0xff] %v4635
                  %v4637 = vld [vmem:[%s4569 + $0x108] sm:$0xff]
                  %4638 = vst [vmem:[%s4570 + $0x208] sm:$0xff] %v4637
                  %v4639 = vld [vmem:[%s4569 + $0x110] sm:$0xff]
                  %4640 = vst [vmem:[%s4570 + $0x210] sm:$0xff] %v4639
                  %v4641 = vld [vmem:[%s4569 + $0x118] sm:$0xff]
                  %4642 = vst [vmem:[%s4570 + $0x218] sm:$0xff] %v4641
                  %v4643 = vld [vmem:[%s4569 + $0x120] sm:$0xff]
                  %4644 = vst [vmem:[%s4570 + $0x220] sm:$0xff] %v4643
                  %v4645 = vld [vmem:[%s4569 + $0x128] sm:$0xff]
                  %4646 = vst [vmem:[%s4570 + $0x228] sm:$0xff] %v4645
                  %v4647 = vld [vmem:[%s4569 + $0x130] sm:$0xff]
                  %4648 = vst [vmem:[%s4570 + $0x230] sm:$0xff] %v4647
                  %v4649 = vld [vmem:[%s4569 + $0x138] sm:$0xff]
                  %4650 = vst [vmem:[%s4570 + $0x238] sm:$0xff] %v4649
                  %v4651 = vld [vmem:[%s4569 + $0x140] sm:$0xff]
                  %4652 = vst [vmem:[%s4570 + $0x240] sm:$0xff] %v4651
                  %v4653 = vld [vmem:[%s4569 + $0x148] sm:$0xff]
                  %4654 = vst [vmem:[%s4570 + $0x248] sm:$0xff] %v4653
                  %v4655 = vld [vmem:[%s4569 + $0x150] sm:$0xff]
                  %4656 = vst [vmem:[%s4570 + $0x250] sm:$0xff] %v4655
                  %v4657 = vld [vmem:[%s4569 + $0x158] sm:$0xff]
                  %4658 = vst [vmem:[%s4570 + $0x258] sm:$0xff] %v4657
                  %v4659 = vld [vmem:[%s4569 + $0x160] sm:$0xff]
                  %4660 = vst [vmem:[%s4570 + $0x260] sm:$0xff] %v4659
                  %v4661 = vld [vmem:[%s4569 + $0x168] sm:$0xff]
                  %4662 = vst [vmem:[%s4570 + $0x268] sm:$0xff] %v4661
                  %v4663 = vld [vmem:[%s4569 + $0x170] sm:$0xff]
                  %4664 = vst [vmem:[%s4570 + $0x270] sm:$0xff] %v4663
                  %v4665 = vld [vmem:[%s4569 + $0x178] sm:$0xff]
                  %4666 = vst [vmem:[%s4570 + $0x278] sm:$0xff] %v4665
                $region72: #{tpu_custom_call.1} parent=66 // loop_footer
                  %s4568 = sadd.s32 1, %s4564
                $region73: #{tpu_custom_call.1} parent=66 // loop_footer_branch
                  %4563 = sbr.rel target = $region69
                $region74: #{tpu_custom_call.1} parent=66 // loop_exit
                  _
              $region67: #{tpu_custom_call.1} parent=51 // pred_fallthru
                _
              // Predicated region
              $region75: #{tpu_custom_call.1} parent=51 // pred_check
                _
              $region76: #{tpu_custom_call.1} parent=51 // pred_check_branch
                %4668 = sbr.rel target = $region78
              $region77: #{tpu_custom_call.1} parent=51 // pred_region
                _
              $region78: #{tpu_custom_call.1} parent=51 // pred_fallthru
                _
            $region52: #{tpu_custom_call.1} parent=47 // pred_fallthru
              _
            // Predicated region
            $region53: #{tpu_custom_call.1} parent=47 // pred_check
              _
            $region54: #{tpu_custom_call.1} parent=47 // pred_check_branch
              %4455 = sbr.rel target = $region56
            $region55: #{tpu_custom_call.1} parent=47 // pred_region
              loop: start=0, step=1, limit=1
              $region57: #{tpu_custom_call.1} parent=55 // loop_pre_header
                _
              $region58: #{tpu_custom_call.1} parent=55 // loop_header
                %s4458 = sphi 0, %s4462
                %p4459 = scmp.ge.s32.totalorder %s4458, 1
                %s4463 = sphi %s4437, %s4437
                %s4464 = sphi %s4449, %s4449
              $region59: #{tpu_custom_call.1} parent=55 // loop_header_branch
                %4461 = sbr.rel (%p4459) target = $region63
              $region60: #{tpu_custom_call.1} parent=55 // loop_body
                %v4465 = vld [vmem:[%s4463] sm:$0xff]
                %4466 = vst [vmem:[%s4464] sm:$0xff] %v4465
                %v4467 = vld [vmem:[%s4463 + $0x8] sm:$0xff]
                %4468 = vst [vmem:[%s4464 + $0x8] sm:$0xff] %v4467
                %v4469 = vld [vmem:[%s4463 + $0x10] sm:$0xff]
                %4470 = vst [vmem:[%s4464 + $0x10] sm:$0xff] %v4469
                %v4471 = vld [vmem:[%s4463 + $0x18] sm:$0xff]
                %4472 = vst [vmem:[%s4464 + $0x18] sm:$0xff] %v4471
                %v4473 = vld [vmem:[%s4463 + $0x20] sm:$0xff]
                %4474 = vst [vmem:[%s4464 + $0x20] sm:$0xff] %v4473
                %v4475 = vld [vmem:[%s4463 + $0x28] sm:$0xff]
                %4476 = vst [vmem:[%s4464 + $0x28] sm:$0xff] %v4475
                %v4477 = vld [vmem:[%s4463 + $0x30] sm:$0xff]
                %4478 = vst [vmem:[%s4464 + $0x30] sm:$0xff] %v4477
                %v4479 = vld [vmem:[%s4463 + $0x38] sm:$0xff]
                %4480 = vst [vmem:[%s4464 + $0x38] sm:$0xff] %v4479
                %v4481 = vld [vmem:[%s4463 + $0x40] sm:$0xff]
                %4482 = vst [vmem:[%s4464 + $0x40] sm:$0xff] %v4481
                %v4483 = vld [vmem:[%s4463 + $0x48] sm:$0xff]
                %4484 = vst [vmem:[%s4464 + $0x48] sm:$0xff] %v4483
                %v4485 = vld [vmem:[%s4463 + $0x50] sm:$0xff]
                %4486 = vst [vmem:[%s4464 + $0x50] sm:$0xff] %v4485
                %v4487 = vld [vmem:[%s4463 + $0x58] sm:$0xff]
                %4488 = vst [vmem:[%s4464 + $0x58] sm:$0xff] %v4487
                %v4489 = vld [vmem:[%s4463 + $0x60] sm:$0xff]
                %4490 = vst [vmem:[%s4464 + $0x60] sm:$0xff] %v4489
                %v4491 = vld [vmem:[%s4463 + $0x68] sm:$0xff]
                %4492 = vst [vmem:[%s4464 + $0x68] sm:$0xff] %v4491
                %v4493 = vld [vmem:[%s4463 + $0x70] sm:$0xff]
                %4494 = vst [vmem:[%s4464 + $0x70] sm:$0xff] %v4493
                %v4495 = vld [vmem:[%s4463 + $0x78] sm:$0xff]
                %4496 = vst [vmem:[%s4464 + $0x78] sm:$0xff] %v4495
                %v4497 = vld [vmem:[%s4463 + $0x80] sm:$0xff]
                %4498 = vst [vmem:[%s4464 + $0x100] sm:$0xff] %v4497
                %v4499 = vld [vmem:[%s4463 + $0x88] sm:$0xff]
                %4500 = vst [vmem:[%s4464 + $0x108] sm:$0xff] %v4499
                %v4501 = vld [vmem:[%s4463 + $0x90] sm:$0xff]
                %4502 = vst [vmem:[%s4464 + $0x110] sm:$0xff] %v4501
                %v4503 = vld [vmem:[%s4463 + $0x98] sm:$0xff]
                %4504 = vst [vmem:[%s4464 + $0x118] sm:$0xff] %v4503
                %v4505 = vld [vmem:[%s4463 + $0xa0] sm:$0xff]
                %4506 = vst [vmem:[%s4464 + $0x120] sm:$0xff] %v4505
                %v4507 = vld [vmem:[%s4463 + $0xa8] sm:$0xff]
                %4508 = vst [vmem:[%s4464 + $0x128] sm:$0xff] %v4507
                %v4509 = vld [vmem:[%s4463 + $0xb0] sm:$0xff]
                %4510 = vst [vmem:[%s4464 + $0x130] sm:$0xff] %v4509
                %v4511 = vld [vmem:[%s4463 + $0xb8] sm:$0xff]
                %4512 = vst [vmem:[%s4464 + $0x138] sm:$0xff] %v4511
                %v4513 = vld [vmem:[%s4463 + $0xc0] sm:$0xff]
                %4514 = vst [vmem:[%s4464 + $0x140] sm:$0xff] %v4513
                %v4515 = vld [vmem:[%s4463 + $0xc8] sm:$0xff]
                %4516 = vst [vmem:[%s4464 + $0x148] sm:$0xff] %v4515
                %v4517 = vld [vmem:[%s4463 + $0xd0] sm:$0xff]
                %4518 = vst [vmem:[%s4464 + $0x150] sm:$0xff] %v4517
                %v4519 = vld [vmem:[%s4463 + $0xd8] sm:$0xff]
                %4520 = vst [vmem:[%s4464 + $0x158] sm:$0xff] %v4519
                %v4521 = vld [vmem:[%s4463 + $0xe0] sm:$0xff]
                %4522 = vst [vmem:[%s4464 + $0x160] sm:$0xff] %v4521
                %v4523 = vld [vmem:[%s4463 + $0xe8] sm:$0xff]
                %4524 = vst [vmem:[%s4464 + $0x168] sm:$0xff] %v4523
                %v4525 = vld [vmem:[%s4463 + $0xf0] sm:$0xff]
                %4526 = vst [vmem:[%s4464 + $0x170] sm:$0xff] %v4525
                %v4527 = vld [vmem:[%s4463 + $0xf8] sm:$0xff]
                %4528 = vst [vmem:[%s4464 + $0x178] sm:$0xff] %v4527
                %v4529 = vld [vmem:[%s4463 + $0x100] sm:$0xff]
                %4530 = vst [vmem:[%s4464 + $0x200] sm:$0xff] %v4529
                %v4531 = vld [vmem:[%s4463 + $0x108] sm:$0xff]
                %4532 = vst [vmem:[%s4464 + $0x208] sm:$0xff] %v4531
                %v4533 = vld [vmem:[%s4463 + $0x110] sm:$0xff]
                %4534 = vst [vmem:[%s4464 + $0x210] sm:$0xff] %v4533
                %v4535 = vld [vmem:[%s4463 + $0x118] sm:$0xff]
                %4536 = vst [vmem:[%s4464 + $0x218] sm:$0xff] %v4535
                %v4537 = vld [vmem:[%s4463 + $0x120] sm:$0xff]
                %4538 = vst [vmem:[%s4464 + $0x220] sm:$0xff] %v4537
                %v4539 = vld [vmem:[%s4463 + $0x128] sm:$0xff]
                %4540 = vst [vmem:[%s4464 + $0x228] sm:$0xff] %v4539
                %v4541 = vld [vmem:[%s4463 + $0x130] sm:$0xff]
                %4542 = vst [vmem:[%s4464 + $0x230] sm:$0xff] %v4541
                %v4543 = vld [vmem:[%s4463 + $0x138] sm:$0xff]
                %4544 = vst [vmem:[%s4464 + $0x238] sm:$0xff] %v4543
                %v4545 = vld [vmem:[%s4463 + $0x140] sm:$0xff]
                %4546 = vst [vmem:[%s4464 + $0x240] sm:$0xff] %v4545
                %v4547 = vld [vmem:[%s4463 + $0x148] sm:$0xff]
                %4548 = vst [vmem:[%s4464 + $0x248] sm:$0xff] %v4547
                %v4549 = vld [vmem:[%s4463 + $0x150] sm:$0xff]
                %4550 = vst [vmem:[%s4464 + $0x250] sm:$0xff] %v4549
                %v4551 = vld [vmem:[%s4463 + $0x158] sm:$0xff]
                %4552 = vst [vmem:[%s4464 + $0x258] sm:$0xff] %v4551
                %v4553 = vld [vmem:[%s4463 + $0x160] sm:$0xff]
                %4554 = vst [vmem:[%s4464 + $0x260] sm:$0xff] %v4553
                %v4555 = vld [vmem:[%s4463 + $0x168] sm:$0xff]
                %4556 = vst [vmem:[%s4464 + $0x268] sm:$0xff] %v4555
                %v4557 = vld [vmem:[%s4463 + $0x170] sm:$0xff]
                %4558 = vst [vmem:[%s4464 + $0x270] sm:$0xff] %v4557
                %v4559 = vld [vmem:[%s4463 + $0x178] sm:$0xff]
                %4560 = vst [vmem:[%s4464 + $0x278] sm:$0xff] %v4559
              $region61: #{tpu_custom_call.1} parent=55 // loop_footer
                %s4462 = sadd.s32 1, %s4458
              $region62: #{tpu_custom_call.1} parent=55 // loop_footer_branch
                %4457 = sbr.rel target = $region58
              $region63: #{tpu_custom_call.1} parent=55 // loop_exit
                _
            $region56: #{tpu_custom_call.1} parent=47 // pred_fallthru
              _
          $region48: #{tpu_custom_call.1} parent=43 // pred_fallthru
            _
          %4669 = vnop
        $region44: #{tpu_custom_call.1} parent=31 // pred_fallthru
          _
        // Predicated region
        $region79: #{tpu_custom_call.1} parent=31 // pred_check
          %p4670 = pneg %p150
        $region80: #{tpu_custom_call.1} parent=31 // pred_check_branch
          %4672 = sbr.rel (%p4670) target = $region82
        $region81: #{tpu_custom_call.1} parent=31 // pred_region
          %s4673 = smul.u32 16, %s25
          %s4674 = smul.addr %s24, 96
          %s4675 = sadd.s32 %s4673, %s4674
          %s4676 = smul.addr %s4675, 8
          %s4677 = scalar_lea.vmem %s4, %s4676
          // Predicated region
          $region83: #{tpu_custom_call.1} parent=81 // pred_check
            _
          $region84: #{tpu_custom_call.1} parent=81 // pred_check_branch
            %4679 = sbr.rel (0) target = $region86
          $region85: #{tpu_custom_call.1} parent=81 // pred_region
            // Predicated region
            $region87: #{tpu_custom_call.1} parent=85 // pred_check
              _
            $region88: #{tpu_custom_call.1} parent=85 // pred_check_branch
              %4681 = sbr.rel (0) target = $region90
            $region89: #{tpu_custom_call.1} parent=85 // pred_region
              // Predicated region
              $region102: #{tpu_custom_call.1} parent=89 // pred_check
                _
              $region103: #{tpu_custom_call.1} parent=89 // pred_check_branch
                %4790 = sbr.rel (0) target = $region105
              $region104: #{tpu_custom_call.1} parent=89 // pred_region
                loop: start=0, step=1, limit=1
                $region106: #{tpu_custom_call.1} parent=104 // loop_pre_header
                  _
                $region107: #{tpu_custom_call.1} parent=104 // loop_header
                  %s4792 = sphi 0, %s4796
                  %p4793 = scmp.ge.s32.totalorder %s4792, 1
                  %s4797 = sphi %s4441, %s4441
                  %s4798 = sphi %s4677, %s4677
                $region108: #{tpu_custom_call.1} parent=104 // loop_header_branch
                  %4795 = sbr.rel (%p4793) target = $region112
                $region109: #{tpu_custom_call.1} parent=104 // loop_body
                  %v4799 = vld [vmem:[%s4797] sm:$0xff]
                  %4800 = vst [vmem:[%s4798] sm:$0xff] %v4799
                  %v4801 = vld [vmem:[%s4797 + $0x8] sm:$0xff]
                  %4802 = vst [vmem:[%s4798 + $0x8] sm:$0xff] %v4801
                  %v4803 = vld [vmem:[%s4797 + $0x10] sm:$0xff]
                  %4804 = vst [vmem:[%s4798 + $0x10] sm:$0xff] %v4803
                  %v4805 = vld [vmem:[%s4797 + $0x18] sm:$0xff]
                  %4806 = vst [vmem:[%s4798 + $0x18] sm:$0xff] %v4805
                  %v4807 = vld [vmem:[%s4797 + $0x20] sm:$0xff]
                  %4808 = vst [vmem:[%s4798 + $0x20] sm:$0xff] %v4807
                  %v4809 = vld [vmem:[%s4797 + $0x28] sm:$0xff]
                  %4810 = vst [vmem:[%s4798 + $0x28] sm:$0xff] %v4809
                  %v4811 = vld [vmem:[%s4797 + $0x30] sm:$0xff]
                  %4812 = vst [vmem:[%s4798 + $0x30] sm:$0xff] %v4811
                  %v4813 = vld [vmem:[%s4797 + $0x38] sm:$0xff]
                  %4814 = vst [vmem:[%s4798 + $0x38] sm:$0xff] %v4813
                  %v4815 = vld [vmem:[%s4797 + $0x40] sm:$0xff]
                  %4816 = vst [vmem:[%s4798 + $0x40] sm:$0xff] %v4815
                  %v4817 = vld [vmem:[%s4797 + $0x48] sm:$0xff]
                  %4818 = vst [vmem:[%s4798 + $0x48] sm:$0xff] %v4817
                  %v4819 = vld [vmem:[%s4797 + $0x50] sm:$0xff]
                  %4820 = vst [vmem:[%s4798 + $0x50] sm:$0xff] %v4819
                  %v4821 = vld [vmem:[%s4797 + $0x58] sm:$0xff]
                  %4822 = vst [vmem:[%s4798 + $0x58] sm:$0xff] %v4821
                  %v4823 = vld [vmem:[%s4797 + $0x60] sm:$0xff]
                  %4824 = vst [vmem:[%s4798 + $0x60] sm:$0xff] %v4823
                  %v4825 = vld [vmem:[%s4797 + $0x68] sm:$0xff]
                  %4826 = vst [vmem:[%s4798 + $0x68] sm:$0xff] %v4825
                  %v4827 = vld [vmem:[%s4797 + $0x70] sm:$0xff]
                  %4828 = vst [vmem:[%s4798 + $0x70] sm:$0xff] %v4827
                  %v4829 = vld [vmem:[%s4797 + $0x78] sm:$0xff]
                  %4830 = vst [vmem:[%s4798 + $0x78] sm:$0xff] %v4829
                  %v4831 = vld [vmem:[%s4797 + $0x80] sm:$0xff]
                  %4832 = vst [vmem:[%s4798 + $0x100] sm:$0xff] %v4831
                  %v4833 = vld [vmem:[%s4797 + $0x88] sm:$0xff]
                  %4834 = vst [vmem:[%s4798 + $0x108] sm:$0xff] %v4833
                  %v4835 = vld [vmem:[%s4797 + $0x90] sm:$0xff]
                  %4836 = vst [vmem:[%s4798 + $0x110] sm:$0xff] %v4835
                  %v4837 = vld [vmem:[%s4797 + $0x98] sm:$0xff]
                  %4838 = vst [vmem:[%s4798 + $0x118] sm:$0xff] %v4837
                  %v4839 = vld [vmem:[%s4797 + $0xa0] sm:$0xff]
                  %4840 = vst [vmem:[%s4798 + $0x120] sm:$0xff] %v4839
                  %v4841 = vld [vmem:[%s4797 + $0xa8] sm:$0xff]
                  %4842 = vst [vmem:[%s4798 + $0x128] sm:$0xff] %v4841
                  %v4843 = vld [vmem:[%s4797 + $0xb0] sm:$0xff]
                  %4844 = vst [vmem:[%s4798 + $0x130] sm:$0xff] %v4843
                  %v4845 = vld [vmem:[%s4797 + $0xb8] sm:$0xff]
                  %4846 = vst [vmem:[%s4798 + $0x138] sm:$0xff] %v4845
                  %v4847 = vld [vmem:[%s4797 + $0xc0] sm:$0xff]
                  %4848 = vst [vmem:[%s4798 + $0x140] sm:$0xff] %v4847
                  %v4849 = vld [vmem:[%s4797 + $0xc8] sm:$0xff]
                  %4850 = vst [vmem:[%s4798 + $0x148] sm:$0xff] %v4849
                  %v4851 = vld [vmem:[%s4797 + $0xd0] sm:$0xff]
                  %4852 = vst [vmem:[%s4798 + $0x150] sm:$0xff] %v4851
                  %v4853 = vld [vmem:[%s4797 + $0xd8] sm:$0xff]
                  %4854 = vst [vmem:[%s4798 + $0x158] sm:$0xff] %v4853
                  %v4855 = vld [vmem:[%s4797 + $0xe0] sm:$0xff]
                  %4856 = vst [vmem:[%s4798 + $0x160] sm:$0xff] %v4855
                  %v4857 = vld [vmem:[%s4797 + $0xe8] sm:$0xff]
                  %4858 = vst [vmem:[%s4798 + $0x168] sm:$0xff] %v4857
                  %v4859 = vld [vmem:[%s4797 + $0xf0] sm:$0xff]
                  %4860 = vst [vmem:[%s4798 + $0x170] sm:$0xff] %v4859
                  %v4861 = vld [vmem:[%s4797 + $0xf8] sm:$0xff]
                  %4862 = vst [vmem:[%s4798 + $0x178] sm:$0xff] %v4861
                  %v4863 = vld [vmem:[%s4797 + $0x100] sm:$0xff]
                  %4864 = vst [vmem:[%s4798 + $0x200] sm:$0xff] %v4863
                  %v4865 = vld [vmem:[%s4797 + $0x108] sm:$0xff]
                  %4866 = vst [vmem:[%s4798 + $0x208] sm:$0xff] %v4865
                  %v4867 = vld [vmem:[%s4797 + $0x110] sm:$0xff]
                  %4868 = vst [vmem:[%s4798 + $0x210] sm:$0xff] %v4867
                  %v4869 = vld [vmem:[%s4797 + $0x118] sm:$0xff]
                  %4870 = vst [vmem:[%s4798 + $0x218] sm:$0xff] %v4869
                  %v4871 = vld [vmem:[%s4797 + $0x120] sm:$0xff]
                  %4872 = vst [vmem:[%s4798 + $0x220] sm:$0xff] %v4871
                  %v4873 = vld [vmem:[%s4797 + $0x128] sm:$0xff]
                  %4874 = vst [vmem:[%s4798 + $0x228] sm:$0xff] %v4873
                  %v4875 = vld [vmem:[%s4797 + $0x130] sm:$0xff]
                  %4876 = vst [vmem:[%s4798 + $0x230] sm:$0xff] %v4875
                  %v4877 = vld [vmem:[%s4797 + $0x138] sm:$0xff]
                  %4878 = vst [vmem:[%s4798 + $0x238] sm:$0xff] %v4877
                  %v4879 = vld [vmem:[%s4797 + $0x140] sm:$0xff]
                  %4880 = vst [vmem:[%s4798 + $0x240] sm:$0xff] %v4879
                  %v4881 = vld [vmem:[%s4797 + $0x148] sm:$0xff]
                  %4882 = vst [vmem:[%s4798 + $0x248] sm:$0xff] %v4881
                  %v4883 = vld [vmem:[%s4797 + $0x150] sm:$0xff]
                  %4884 = vst [vmem:[%s4798 + $0x250] sm:$0xff] %v4883
                  %v4885 = vld [vmem:[%s4797 + $0x158] sm:$0xff]
                  %4886 = vst [vmem:[%s4798 + $0x258] sm:$0xff] %v4885
                  %v4887 = vld [vmem:[%s4797 + $0x160] sm:$0xff]
                  %4888 = vst [vmem:[%s4798 + $0x260] sm:$0xff] %v4887
                  %v4889 = vld [vmem:[%s4797 + $0x168] sm:$0xff]
                  %4890 = vst [vmem:[%s4798 + $0x268] sm:$0xff] %v4889
                  %v4891 = vld [vmem:[%s4797 + $0x170] sm:$0xff]
                  %4892 = vst [vmem:[%s4798 + $0x270] sm:$0xff] %v4891
                  %v4893 = vld [vmem:[%s4797 + $0x178] sm:$0xff]
                  %4894 = vst [vmem:[%s4798 + $0x278] sm:$0xff] %v4893
                $region110: #{tpu_custom_call.1} parent=104 // loop_footer
                  %s4796 = sadd.s32 1, %s4792
                $region111: #{tpu_custom_call.1} parent=104 // loop_footer_branch
                  %4791 = sbr.rel target = $region107
                $region112: #{tpu_custom_call.1} parent=104 // loop_exit
                  _
              $region105: #{tpu_custom_call.1} parent=89 // pred_fallthru
                _
              // Predicated region
              $region113: #{tpu_custom_call.1} parent=89 // pred_check
                _
              $region114: #{tpu_custom_call.1} parent=89 // pred_check_branch
                %4896 = sbr.rel target = $region116
              $region115: #{tpu_custom_call.1} parent=89 // pred_region
                _
              $region116: #{tpu_custom_call.1} parent=89 // pred_fallthru
                _
            $region90: #{tpu_custom_call.1} parent=85 // pred_fallthru
              _
            // Predicated region
            $region91: #{tpu_custom_call.1} parent=85 // pred_check
              _
            $region92: #{tpu_custom_call.1} parent=85 // pred_check_branch
              %4683 = sbr.rel target = $region94
            $region93: #{tpu_custom_call.1} parent=85 // pred_region
              loop: start=0, step=1, limit=1
              $region95: #{tpu_custom_call.1} parent=93 // loop_pre_header
                _
              $region96: #{tpu_custom_call.1} parent=93 // loop_header
                %s4686 = sphi 0, %s4690
                %p4687 = scmp.ge.s32.totalorder %s4686, 1
                %s4691 = sphi %s4441, %s4441
                %s4692 = sphi %s4677, %s4677
              $region97: #{tpu_custom_call.1} parent=93 // loop_header_branch
                %4689 = sbr.rel (%p4687) target = $region101
              $region98: #{tpu_custom_call.1} parent=93 // loop_body
                %v4693 = vld [vmem:[%s4691] sm:$0xff]
                %4694 = vst [vmem:[%s4692] sm:$0xff] %v4693
                %v4695 = vld [vmem:[%s4691 + $0x8] sm:$0xff]
                %4696 = vst [vmem:[%s4692 + $0x8] sm:$0xff] %v4695
                %v4697 = vld [vmem:[%s4691 + $0x10] sm:$0xff]
                %4698 = vst [vmem:[%s4692 + $0x10] sm:$0xff] %v4697
                %v4699 = vld [vmem:[%s4691 + $0x18] sm:$0xff]
                %4700 = vst [vmem:[%s4692 + $0x18] sm:$0xff] %v4699
                %v4701 = vld [vmem:[%s4691 + $0x20] sm:$0xff]
                %4702 = vst [vmem:[%s4692 + $0x20] sm:$0xff] %v4701
                %v4703 = vld [vmem:[%s4691 + $0x28] sm:$0xff]
                %4704 = vst [vmem:[%s4692 + $0x28] sm:$0xff] %v4703
                %v4705 = vld [vmem:[%s4691 + $0x30] sm:$0xff]
                %4706 = vst [vmem:[%s4692 + $0x30] sm:$0xff] %v4705
                %v4707 = vld [vmem:[%s4691 + $0x38] sm:$0xff]
                %4708 = vst [vmem:[%s4692 + $0x38] sm:$0xff] %v4707
                %v4709 = vld [vmem:[%s4691 + $0x40] sm:$0xff]
                %4710 = vst [vmem:[%s4692 + $0x40] sm:$0xff] %v4709
                %v4711 = vld [vmem:[%s4691 + $0x48] sm:$0xff]
                %4712 = vst [vmem:[%s4692 + $0x48] sm:$0xff] %v4711
                %v4713 = vld [vmem:[%s4691 + $0x50] sm:$0xff]
                %4714 = vst [vmem:[%s4692 + $0x50] sm:$0xff] %v4713
                %v4715 = vld [vmem:[%s4691 + $0x58] sm:$0xff]
                %4716 = vst [vmem:[%s4692 + $0x58] sm:$0xff] %v4715
                %v4717 = vld [vmem:[%s4691 + $0x60] sm:$0xff]
                %4718 = vst [vmem:[%s4692 + $0x60] sm:$0xff] %v4717
                %v4719 = vld [vmem:[%s4691 + $0x68] sm:$0xff]
                %4720 = vst [vmem:[%s4692 + $0x68] sm:$0xff] %v4719
                %v4721 = vld [vmem:[%s4691 + $0x70] sm:$0xff]
                %4722 = vst [vmem:[%s4692 + $0x70] sm:$0xff] %v4721
                %v4723 = vld [vmem:[%s4691 + $0x78] sm:$0xff]
                %4724 = vst [vmem:[%s4692 + $0x78] sm:$0xff] %v4723
                %v4725 = vld [vmem:[%s4691 + $0x80] sm:$0xff]
                %4726 = vst [vmem:[%s4692 + $0x100] sm:$0xff] %v4725
                %v4727 = vld [vmem:[%s4691 + $0x88] sm:$0xff]
                %4728 = vst [vmem:[%s4692 + $0x108] sm:$0xff] %v4727
                %v4729 = vld [vmem:[%s4691 + $0x90] sm:$0xff]
                %4730 = vst [vmem:[%s4692 + $0x110] sm:$0xff] %v4729
                %v4731 = vld [vmem:[%s4691 + $0x98] sm:$0xff]
                %4732 = vst [vmem:[%s4692 + $0x118] sm:$0xff] %v4731
                %v4733 = vld [vmem:[%s4691 + $0xa0] sm:$0xff]
                %4734 = vst [vmem:[%s4692 + $0x120] sm:$0xff] %v4733
                %v4735 = vld [vmem:[%s4691 + $0xa8] sm:$0xff]
                %4736 = vst [vmem:[%s4692 + $0x128] sm:$0xff] %v4735
                %v4737 = vld [vmem:[%s4691 + $0xb0] sm:$0xff]
                %4738 = vst [vmem:[%s4692 + $0x130] sm:$0xff] %v4737
                %v4739 = vld [vmem:[%s4691 + $0xb8] sm:$0xff]
                %4740 = vst [vmem:[%s4692 + $0x138] sm:$0xff] %v4739
                %v4741 = vld [vmem:[%s4691 + $0xc0] sm:$0xff]
                %4742 = vst [vmem:[%s4692 + $0x140] sm:$0xff] %v4741
                %v4743 = vld [vmem:[%s4691 + $0xc8] sm:$0xff]
                %4744 = vst [vmem:[%s4692 + $0x148] sm:$0xff] %v4743
                %v4745 = vld [vmem:[%s4691 + $0xd0] sm:$0xff]
                %4746 = vst [vmem:[%s4692 + $0x150] sm:$0xff] %v4745
                %v4747 = vld [vmem:[%s4691 + $0xd8] sm:$0xff]
                %4748 = vst [vmem:[%s4692 + $0x158] sm:$0xff] %v4747
                %v4749 = vld [vmem:[%s4691 + $0xe0] sm:$0xff]
                %4750 = vst [vmem:[%s4692 + $0x160] sm:$0xff] %v4749
                %v4751 = vld [vmem:[%s4691 + $0xe8] sm:$0xff]
                %4752 = vst [vmem:[%s4692 + $0x168] sm:$0xff] %v4751
                %v4753 = vld [vmem:[%s4691 + $0xf0] sm:$0xff]
                %4754 = vst [vmem:[%s4692 + $0x170] sm:$0xff] %v4753
                %v4755 = vld [vmem:[%s4691 + $0xf8] sm:$0xff]
                %4756 = vst [vmem:[%s4692 + $0x178] sm:$0xff] %v4755
                %v4757 = vld [vmem:[%s4691 + $0x100] sm:$0xff]
                %4758 = vst [vmem:[%s4692 + $0x200] sm:$0xff] %v4757
                %v4759 = vld [vmem:[%s4691 + $0x108] sm:$0xff]
                %4760 = vst [vmem:[%s4692 + $0x208] sm:$0xff] %v4759
                %v4761 = vld [vmem:[%s4691 + $0x110] sm:$0xff]
                %4762 = vst [vmem:[%s4692 + $0x210] sm:$0xff] %v4761
                %v4763 = vld [vmem:[%s4691 + $0x118] sm:$0xff]
                %4764 = vst [vmem:[%s4692 + $0x218] sm:$0xff] %v4763
                %v4765 = vld [vmem:[%s4691 + $0x120] sm:$0xff]
                %4766 = vst [vmem:[%s4692 + $0x220] sm:$0xff] %v4765
                %v4767 = vld [vmem:[%s4691 + $0x128] sm:$0xff]
                %4768 = vst [vmem:[%s4692 + $0x228] sm:$0xff] %v4767
                %v4769 = vld [vmem:[%s4691 + $0x130] sm:$0xff]
                %4770 = vst [vmem:[%s4692 + $0x230] sm:$0xff] %v4769
                %v4771 = vld [vmem:[%s4691 + $0x138] sm:$0xff]
                %4772 = vst [vmem:[%s4692 + $0x238] sm:$0xff] %v4771
                %v4773 = vld [vmem:[%s4691 + $0x140] sm:$0xff]
                %4774 = vst [vmem:[%s4692 + $0x240] sm:$0xff] %v4773
                %v4775 = vld [vmem:[%s4691 + $0x148] sm:$0xff]
                %4776 = vst [vmem:[%s4692 + $0x248] sm:$0xff] %v4775
                %v4777 = vld [vmem:[%s4691 + $0x150] sm:$0xff]
                %4778 = vst [vmem:[%s4692 + $0x250] sm:$0xff] %v4777
                %v4779 = vld [vmem:[%s4691 + $0x158] sm:$0xff]
                %4780 = vst [vmem:[%s4692 + $0x258] sm:$0xff] %v4779
                %v4781 = vld [vmem:[%s4691 + $0x160] sm:$0xff]
                %4782 = vst [vmem:[%s4692 + $0x260] sm:$0xff] %v4781
                %v4783 = vld [vmem:[%s4691 + $0x168] sm:$0xff]
                %4784 = vst [vmem:[%s4692 + $0x268] sm:$0xff] %v4783
                %v4785 = vld [vmem:[%s4691 + $0x170] sm:$0xff]
                %4786 = vst [vmem:[%s4692 + $0x270] sm:$0xff] %v4785
                %v4787 = vld [vmem:[%s4691 + $0x178] sm:$0xff]
                %4788 = vst [vmem:[%s4692 + $0x278] sm:$0xff] %v4787
              $region99: #{tpu_custom_call.1} parent=93 // loop_footer
                %s4690 = sadd.s32 1, %s4686
              $region100: #{tpu_custom_call.1} parent=93 // loop_footer_branch
                %4685 = sbr.rel target = $region96
              $region101: #{tpu_custom_call.1} parent=93 // loop_exit
                _
            $region94: #{tpu_custom_call.1} parent=85 // pred_fallthru
              _
          $region86: #{tpu_custom_call.1} parent=81 // pred_fallthru
            _
          %4897 = vnop
        $region82: #{tpu_custom_call.1} parent=31 // pred_fallthru
          _
      $region32: #{tpu_custom_call.1} parent=5 // pred_fallthru
        _
      %p4898 = scmp.le.s32.totalorder 2, %s15
      // Predicated region
      $region117: #{tpu_custom_call.1} parent=5 // pred_check
        %p4899 = pneg %p4898
      $region118: #{tpu_custom_call.1} parent=5 // pred_check_branch
        %4901 = sbr.rel (%p4899) target = $region120
      $region119: #{tpu_custom_call.1} parent=5 // pred_region
        %s4902 = ssub.s32 %s15, 2
        // Predicated region
        $region121: #{tpu_custom_call.1} parent=119 // pred_check
          %p4903 = pneg %p128
        $region122: #{tpu_custom_call.1} parent=119 // pred_check_branch
          %4905 = sbr.rel (%p4903) target = $region124
        $region123: #{tpu_custom_call.1} parent=119 // pred_region
          %s4906 = sand.u32 %s113, 1
          %s4907 = sand.u32 %s113, 1
          %s4908 = smul.addr %s4907, 384
          %s4909 = scalar_lea.vmem [#allocation6], %s4908
        $region124: #{tpu_custom_call.1} parent=119 // pred_fallthru
          _
        // Predicated region
        $region125: #{tpu_custom_call.1} parent=119 // pred_check
          %p4910 = pneg %p156
        $region126: #{tpu_custom_call.1} parent=119 // pred_check_branch
          %4912 = sbr.rel (%p4910) target = $region128
        $region127: #{tpu_custom_call.1} parent=119 // pred_region
          %s4913 = sand.u32 %s141, 1
          %s4914 = sand.u32 %s141, 1
          %s4915 = smul.addr %s4914, 384
          %s4916 = scalar_lea.vmem [#allocation7], %s4915
        $region128: #{tpu_custom_call.1} parent=119 // pred_fallthru
          _
      $region120: #{tpu_custom_call.1} parent=5 // pred_fallthru
        _
    $region6: #{tpu_custom_call.1} parent=1 // loop_footer
      %s19 = sadd.s32 1, %s15
    $region7: #{tpu_custom_call.1} parent=1 // loop_footer_branch
      %14 = sbr.rel target = $region3
    $region8: #{tpu_custom_call.1} parent=1 // loop_exit
      _
    %4917 = vsyncpa [#allocation3], 1
    %s4918 = scalar_lea.sflag [#allocation3], 1
    %4919 = vsyncpa %s4918, 1
    %4920 = vsyncpa [#allocation5], 1

</llo_original>
